<compile_context>
chip_gen: v5e
topology: v5e:2x2
jax: 0.10.0
libtpu: 0.0.40
codegen_flags: <defaults>
</compile_context>

<pallas_src>
import functools

import numpy as np

import jax
import jax.numpy as jnp
from jax.experimental import pallas as pl
from jax.experimental.pallas import tpu as pltpu


def _corr_kernel(ycoord_ref, xcoord_ref, f1_ref, f2_ref, out_ref, *, h, w, p):
    """One grid step handles one batch element; all D^2 shifts are unrolled.

    ycoord_ref: (1, h*w) int32  row index of every flat position (constant)
    xcoord_ref: (1, h*w) int32  col index of every flat position (constant)
    f1_ref    : (1, c, h*w)     feature map 1, spatial dims flattened
    f2_ref    : (1, c, h*w)     feature map 2, spatial dims flattened (no pad)
    out_ref   : (1, D*D, h*w)   correlation volume for this batch element
    """
    D = 2 * p + 1
    hw = h * w

    f1 = f1_ref[0]            # (c, hw) — resident, reused for all D^2 shifts
    f2 = f2_ref[0]            # (c, hw)
    yv = ycoord_ref[...]      # (1, hw) int32
    xv = xcoord_ref[...]      # (1, hw) int32

    # Static Python unroll: D^2 = 49 tiny iterations, fully visible to the
    # scheduler; at max_displacement=20 this should become a grid axis /
    # fori_loop (see TODOs in the header).
    for i in range(D):                                   # row displacement
        di = i - p
        y_ok = (yv + di >= 0) & (yv + di < h)            # (1, hw) bool
        for j in range(D):                               # col displacement
            dj = j - p
            x_ok = (xv + dj >= 0) & (xv + dj < w)
            # feat2[y+di, x+dj] lives at flat index k + di*w + dj.  One
            # static lane-rotate (XLU) replaces the old unaligned lane slice
            # of a padded slab; wrapped / cross-row garbage is zeroed by the
            # border mask below (matching F.pad's zero padding).
            s = di * w + dj
            shifted = f2 if s == 0 else pltpu.roll(f2, (-s) % hw, axis=1)
            # Channel reduction over the untiled leading axis -> VPU MACs;
            # only this (c, hw) product is live per (i, j).
            r = jnp.sum(f1 * shifted, axis=0, keepdims=True)        # (1, hw)
            # Lane-dense (hw = multiple of 128) store of one output channel.
            out_ref[:, i * D + j, :] = jnp.where(y_ok & x_ok, r,
                                                 jnp.zeros_like(r))


def correlation_pallas(feat1, feat2, max_displacement):
    """feat1, feat2: (b, c, h, w) float32 -> (b, (2p+1)^2, h, w) float32."""
    b, c, h, w = feat1.shape
    p = max_displacement
    D = 2 * p + 1
    hw = h * w

    # Flatten spatial dims (free, contiguous).  hw = 256 -> lane-dense kernel.
    f1 = feat1.reshape(b, c, hw)
    f2 = feat2.reshape(b, c, hw)

    # Compile-time flat (y, x) coordinates; the kernel derives the border
    # mask from these, so feat2 is never padded in HBM.
    ys = jnp.asarray(np.repeat(np.arange(h, dtype=np.int32), w).reshape(1, hw))
    xs = jnp.asarray(np.tile(np.arange(w, dtype=np.int32), h).reshape(1, hw))

    kernel = functools.partial(_corr_kernel, h=h, w=w, p=p)

    out_flat = pl.pallas_call(
        kernel,
        out_shape=jax.ShapeDtypeStruct((b, D * D, hw), feat1.dtype),
        # Grid over batch only: 2 parallel steps (even v7x megacore split),
        # each fully resident (<~70 KiB) and writing a disjoint output block.
        grid=(b,),
        in_specs=[
            pl.BlockSpec((1, hw), lambda bi: (0, 0)),        # y coords (const)
            pl.BlockSpec((1, hw), lambda bi: (0, 0)),        # x coords (const)
            pl.BlockSpec((1, c, hw), lambda bi: (bi, 0, 0)),  # feat1[bi]
            pl.BlockSpec((1, c, hw), lambda bi: (bi, 0, 0)),  # feat2[bi]
        ],
        out_specs=pl.BlockSpec((1, D * D, hw), lambda bi: (bi, 0, 0)),
        compiler_params=pltpu.CompilerParams(
            dimension_semantics=("parallel",)),
    )(ys, xs, f1, f2)

    # Free reshape back to the PyTorch (b, D^2, h, w) output order.
    return out_flat.reshape(b, D * D, h, w)


def correlation_ref(feat1, feat2, max_displacement):
    """Pure-JAX reference mirroring the PyTorch loop exactly (no normalization,
    matching the spec module)."""
    b, c, h, w = feat1.shape
    p = max_displacement
    D = 2 * p + 1
    f2p = jnp.pad(feat2, ((0, 0), (0, 0), (p, p), (p, p)))
    outs = []
    for i in range(D):
        for j in range(D):
            outs.append(jnp.sum(feat1 * f2p[:, :, i:i + h, j:j + w], axis=1))
    return jnp.stack(outs, axis=1)


if __name__ == "__main__":
    key = jax.random.PRNGKey(0)
    k1, k2 = jax.random.split(key)

    b, c, h, w = 2, 4, 16, 16
    max_displacement = 3  # module default is 20; small value for demo shapes

    feat1 = jax.random.normal(k1, (b, c, h, w), dtype=jnp.float32)
    feat2 = jax.random.normal(k2, (b, c, h, w), dtype=jnp.float32)

    out = correlation_pallas(feat1, feat2, max_displacement)
    out = jax.block_until_ready(out)

    ref = correlation_ref(feat1, feat2, max_displacement)
    assert out.shape == (b, (2 * max_displacement + 1) ** 2, h, w)
    assert jnp.allclose(out, ref, atol=1e-5, rtol=1e-5)

    print("KERNEL_OK")
</pallas_src>

<mosaic_0001>
module attributes {stable_mosaic.version = 11 : i64} {
  func.func @_corr_kernel(%arg0: i32, %arg1: memref<1x256xi32, #tpu.memory_space<vmem>>, %arg2: memref<1x256xi32, #tpu.memory_space<vmem>>, %arg3: memref<1x4x256xf32, #tpu.memory_space<vmem>>, %arg4: memref<1x4x256xf32, #tpu.memory_space<vmem>>, %arg5: memref<1x49x256xf32, #tpu.memory_space<vmem>>) attributes {dimension_semantics = [#tpu.dimension_semantics<parallel>], iteration_bounds = array<i64: 2>, scalar_prefetch = 0 : i64, scratch_operands = 0 : i64, tpu.core_type = #tpu.core_type<tc>, window_params = [{pipeline_mode = #tpu.pipeline_mode<synchronous>, transform_indices = @transform_0, window_bounds = array<i64: 1, 256>}, {pipeline_mode = #tpu.pipeline_mode<synchronous>, transform_indices = @transform_1, window_bounds = array<i64: 1, 256>}, {transform_indices = @transform_2, window_bounds = array<i64: 1, 4, 256>}, {transform_indices = @transform_3, window_bounds = array<i64: 1, 4, 256>}, {transform_indices = @transform_4, window_bounds = array<i64: 1, 49, 256>}]} {
    %c0 = arith.constant 0 : index
    %c0_0 = arith.constant 0 : index
    %c0_1 = arith.constant 0 : index
    %0 = vector.load %arg3[%c0, %c0_0, %c0_1] : memref<1x4x256xf32, #tpu.memory_space<vmem>>, vector<1x4x256xf32>
    %1 = vector.shape_cast %0 : vector<1x4x256xf32> to vector<4x256xf32>
    %c0_2 = arith.constant 0 : index
    %c0_3 = arith.constant 0 : index
    %c0_4 = arith.constant 0 : index
    %2 = vector.load %arg4[%c0_2, %c0_3, %c0_4] : memref<1x4x256xf32, #tpu.memory_space<vmem>>, vector<1x4x256xf32>
    %3 = vector.shape_cast %2 : vector<1x4x256xf32> to vector<4x256xf32>
    %c0_5 = arith.constant 0 : index
    %c0_6 = arith.constant 0 : index
    %4 = vector.load %arg1[%c0_5, %c0_6] : memref<1x256xi32, #tpu.memory_space<vmem>>, vector<1x256xi32>
    %c0_7 = arith.constant 0 : index
    %c0_8 = arith.constant 0 : index
    %5 = vector.load %arg2[%c0_7, %c0_8] : memref<1x256xi32, #tpu.memory_space<vmem>>, vector<1x256xi32>
    %c-3_i32 = arith.constant -3 : i32
    %6 = vector.broadcast %c-3_i32 : i32 to vector<1x256xi32>
    %7 = arith.addi %4, %6 : vector<1x256xi32>
    %c0_i32 = arith.constant 0 : i32
    %8 = vector.broadcast %c0_i32 : i32 to vector<1x256xi32>
    %9 = arith.cmpi sge, %7, %8 : vector<1x256xi32>
    %c-3_i32_9 = arith.constant -3 : i32
    %10 = vector.broadcast %c-3_i32_9 : i32 to vector<1x256xi32>
    %11 = arith.addi %4, %10 : vector<1x256xi32>
    %c16_i32 = arith.constant 16 : i32
    %12 = vector.broadcast %c16_i32 : i32 to vector<1x256xi32>
    %13 = arith.cmpi slt, %11, %12 : vector<1x256xi32>
    %14 = arith.andi %9, %13 : vector<1x256xi1>
    %c-3_i32_10 = arith.constant -3 : i32
    %15 = vector.broadcast %c-3_i32_10 : i32 to vector<1x256xi32>
    %16 = arith.addi %5, %15 : vector<1x256xi32>
    %c0_i32_11 = arith.constant 0 : i32
    %17 = vector.broadcast %c0_i32_11 : i32 to vector<1x256xi32>
    %18 = arith.cmpi sge, %16, %17 : vector<1x256xi32>
    %c-3_i32_12 = arith.constant -3 : i32
    %19 = vector.broadcast %c-3_i32_12 : i32 to vector<1x256xi32>
    %20 = arith.addi %5, %19 : vector<1x256xi32>
    %c16_i32_13 = arith.constant 16 : i32
    %21 = vector.broadcast %c16_i32_13 : i32 to vector<1x256xi32>
    %22 = arith.cmpi slt, %20, %21 : vector<1x256xi32>
    %23 = arith.andi %18, %22 : vector<1x256xi1>
    %c51_i32 = arith.constant 51 : i32
    %24 = tpu.dynamic_rotate %3 by %c51_i32 dim 1 : vector<4x256xf32>, i32 -> vector<4x256xf32>
    %25 = arith.mulf %1, %24 : vector<4x256xf32>
    %cst = arith.constant dense<0.000000e+00> : vector<256xf32>
    %26 = vector.multi_reduction <add>, %25, %cst [0] : vector<4x256xf32> to vector<256xf32>
    %27 = vector.shape_cast %26 : vector<256xf32> to vector<1x256xf32>
    %28 = arith.andi %14, %23 : vector<1x256xi1>
    %cst_14 = arith.constant 0.000000e+00 : f32
    %29 = vector.broadcast %cst_14 : f32 to vector<1x256xf32>
    %30 = arith.select %28, %27, %29 : vector<1x256xi1>, vector<1x256xf32>
    %c0_15 = arith.constant 0 : index
    %c0_16 = arith.constant 0 : index
    %c0_17 = arith.constant 0 : index
    %31 = vector.load %arg5[%c0_15, %c0_16, %c0_17] : memref<1x49x256xf32, #tpu.memory_space<vmem>>, vector<1x1x256xf32>
    %32 = vector.shape_cast %31 : vector<1x1x256xf32> to vector<1x256xf32>
    %33 = vector.shape_cast %30 : vector<1x256xf32> to vector<1x1x256xf32>
    tpu.vector_store %arg5[%c0_15, %c0_16, %c0_17], %33 {strides = array<i32>} : memref<1x49x256xf32, #tpu.memory_space<vmem>>, vector<1x1x256xf32>,
    %c-2_i32 = arith.constant -2 : i32
    %34 = vector.broadcast %c-2_i32 : i32 to vector<1x256xi32>
    %35 = arith.addi %5, %34 : vector<1x256xi32>
    %c0_i32_18 = arith.constant 0 : i32
    %36 = vector.broadcast %c0_i32_18 : i32 to vector<1x256xi32>
    %37 = arith.cmpi sge, %35, %36 : vector<1x256xi32>
    %c-2_i32_19 = arith.constant -2 : i32
    %38 = vector.broadcast %c-2_i32_19 : i32 to vector<1x256xi32>
    %39 = arith.addi %5, %38 : vector<1x256xi32>
    %c16_i32_20 = arith.constant 16 : i32
    %40 = vector.broadcast %c16_i32_20 : i32 to vector<1x256xi32>
    %41 = arith.cmpi slt, %39, %40 : vector<1x256xi32>
    %42 = arith.andi %37, %41 : vector<1x256xi1>
    %c50_i32 = arith.constant 50 : i32
    %43 = tpu.dynamic_rotate %3 by %c50_i32 dim 1 : vector<4x256xf32>, i32 -> vector<4x256xf32>
    %44 = arith.mulf %1, %43 : vector<4x256xf32>
    %cst_21 = arith.constant dense<0.000000e+00> : vector<256xf32>
    %45 = vector.multi_reduction <add>, %44, %cst_21 [0] : vector<4x256xf32> to vector<256xf32>
    %46 = vector.shape_cast %45 : vector<256xf32> to vector<1x256xf32>
    %47 = arith.andi %14, %42 : vector<1x256xi1>
    %cst_22 = arith.constant 0.000000e+00 : f32
    %48 = vector.broadcast %cst_22 : f32 to vector<1x256xf32>
    %49 = arith.select %47, %46, %48 : vector<1x256xi1>, vector<1x256xf32>
    %c0_23 = arith.constant 0 : index
    %c1 = arith.constant 1 : index
    %c0_24 = arith.constant 0 : index
    %50 = vector.load %arg5[%c0_23, %c1, %c0_24] : memref<1x49x256xf32, #tpu.memory_space<vmem>>, vector<1x1x256xf32>
    %51 = vector.shape_cast %50 : vector<1x1x256xf32> to vector<1x256xf32>
    %52 = vector.shape_cast %49 : vector<1x256xf32> to vector<1x1x256xf32>
    tpu.vector_store %arg5[%c0_23, %c1, %c0_24], %52 {strides = array<i32>} : memref<1x49x256xf32, #tpu.memory_space<vmem>>, vector<1x1x256xf32>,
    %c-1_i32 = arith.constant -1 : i32
    %53 = vector.broadcast %c-1_i32 : i32 to vector<1x256xi32>
    %54 = arith.addi %5, %53 : vector<1x256xi32>
    %c0_i32_25 = arith.constant 0 : i32
    %55 = vector.broadcast %c0_i32_25 : i32 to vector<1x256xi32>
    %56 = arith.cmpi sge, %54, %55 : vector<1x256xi32>
    %c-1_i32_26 = arith.constant -1 : i32
    %57 = vector.broadcast %c-1_i32_26 : i32 to vector<1x256xi32>
    %58 = arith.addi %5, %57 : vector<1x256xi32>
    %c16_i32_27 = arith.constant 16 : i32
    %59 = vector.broadcast %c16_i32_27 : i32 to vector<1x256xi32>
    %60 = arith.cmpi slt, %58, %59 : vector<1x256xi32>
    %61 = arith.andi %56, %60 : vector<1x256xi1>
    %c49_i32 = arith.constant 49 : i32
    %62 = tpu.dynamic_rotate %3 by %c49_i32 dim 1 : vector<4x256xf32>, i32 -> vector<4x256xf32>
    %63 = arith.mulf %1, %62 : vector<4x256xf32>
    %cst_28 = arith.constant dense<0.000000e+00> : vector<256xf32>
    %64 = vector.multi_reduction <add>, %63, %cst_28 [0] : vector<4x256xf32> to vector<256xf32>
    %65 = vector.shape_cast %64 : vector<256xf32> to vector<1x256xf32>
    %66 = arith.andi %14, %61 : vector<1x256xi1>
    %cst_29 = arith.constant 0.000000e+00 : f32
    %67 = vector.broadcast %cst_29 : f32 to vector<1x256xf32>
    %68 = arith.select %66, %65, %67 : vector<1x256xi1>, vector<1x256xf32>
    %c0_30 = arith.constant 0 : index
    %c2 = arith.constant 2 : index
    %c0_31 = arith.constant 0 : index
    %69 = vector.load %arg5[%c0_30, %c2, %c0_31] : memref<1x49x256xf32, #tpu.memory_space<vmem>>, vector<1x1x256xf32>
    %70 = vector.shape_cast %69 : vector<1x1x256xf32> to vector<1x256xf32>
    %71 = vector.shape_cast %68 : vector<1x256xf32> to vector<1x1x256xf32>
    tpu.vector_store %arg5[%c0_30, %c2, %c0_31], %71 {strides = array<i32>} : memref<1x49x256xf32, #tpu.memory_space<vmem>>, vector<1x1x256xf32>,
    %c0_i32_32 = arith.constant 0 : i32
    %72 = vector.broadcast %c0_i32_32 : i32 to vector<1x256xi32>
    %73 = arith.addi %5, %72 : vector<1x256xi32>
    %c0_i32_33 = arith.constant 0 : i32
    %74 = vector.broadcast %c0_i32_33 : i32 to vector<1x256xi32>
    %75 = arith.cmpi sge, %73, %74 : vector<1x256xi32>
    %c0_i32_34 = arith.constant 0 : i32
    %76 = vector.broadcast %c0_i32_34 : i32 to vector<1x256xi32>
    %77 = arith.addi %5, %76 : vector<1x256xi32>
    %c16_i32_35 = arith.constant 16 : i32
    %78 = vector.broadcast %c16_i32_35 : i32 to vector<1x256xi32>
    %79 = arith.cmpi slt, %77, %78 : vector<1x256xi32>
    %80 = arith.andi %75, %79 : vector<1x256xi1>
    %c48_i32 = arith.constant 48 : i32
    %81 = tpu.dynamic_rotate %3 by %c48_i32 dim 1 : vector<4x256xf32>, i32 -> vector<4x256xf32>
    %82 = arith.mulf %1, %81 : vector<4x256xf32>
    %cst_36 = arith.constant dense<0.000000e+00> : vector<256xf32>
    %83 = vector.multi_reduction <add>, %82, %cst_36 [0] : vector<4x256xf32> to vector<256xf32>
    %84 = vector.shape_cast %83 : vector<256xf32> to vector<1x256xf32>
    %85 = arith.andi %14, %80 : vector<1x256xi1>
    %cst_37 = arith.constant 0.000000e+00 : f32
    %86 = vector.broadcast %cst_37 : f32 to vector<1x256xf32>
    %87 = arith.select %85, %84, %86 : vector<1x256xi1>, vector<1x256xf32>
    %c0_38 = arith.constant 0 : index
    %c3 = arith.constant 3 : index
    %c0_39 = arith.constant 0 : index
    %88 = vector.load %arg5[%c0_38, %c3, %c0_39] : memref<1x49x256xf32, #tpu.memory_space<vmem>>, vector<1x1x256xf32>
    %89 = vector.shape_cast %88 : vector<1x1x256xf32> to vector<1x256xf32>
    %90 = vector.shape_cast %87 : vector<1x256xf32> to vector<1x1x256xf32>
    tpu.vector_store %arg5[%c0_38, %c3, %c0_39], %90 {strides = array<i32>} : memref<1x49x256xf32, #tpu.memory_space<vmem>>, vector<1x1x256xf32>,
    %c1_i32 = arith.constant 1 : i32
    %91 = vector.broadcast %c1_i32 : i32 to vector<1x256xi32>
    %92 = arith.addi %5, %91 : vector<1x256xi32>
    %c0_i32_40 = arith.constant 0 : i32
    %93 = vector.broadcast %c0_i32_40 : i32 to vector<1x256xi32>
    %94 = arith.cmpi sge, %92, %93 : vector<1x256xi32>
    %c1_i32_41 = arith.constant 1 : i32
    %95 = vector.broadcast %c1_i32_41 : i32 to vector<1x256xi32>
    %96 = arith.addi %5, %95 : vector<1x256xi32>
    %c16_i32_42 = arith.constant 16 : i32
    %97 = vector.broadcast %c16_i32_42 : i32 to vector<1x256xi32>
    %98 = arith.cmpi slt, %96, %97 : vector<1x256xi32>
    %99 = arith.andi %94, %98 : vector<1x256xi1>
    %c47_i32 = arith.constant 47 : i32
    %100 = tpu.dynamic_rotate %3 by %c47_i32 dim 1 : vector<4x256xf32>, i32 -> vector<4x256xf32>
    %101 = arith.mulf %1, %100 : vector<4x256xf32>
    %cst_43 = arith.constant dense<0.000000e+00> : vector<256xf32>
    %102 = vector.multi_reduction <add>, %101, %cst_43 [0] : vector<4x256xf32> to vector<256xf32>
    %103 = vector.shape_cast %102 : vector<256xf32> to vector<1x256xf32>
    %104 = arith.andi %14, %99 : vector<1x256xi1>
    %cst_44 = arith.constant 0.000000e+00 : f32
    %105 = vector.broadcast %cst_44 : f32 to vector<1x256xf32>
    %106 = arith.select %104, %103, %105 : vector<1x256xi1>, vector<1x256xf32>
    %c0_45 = arith.constant 0 : index
    %c4 = arith.constant 4 : index
    %c0_46 = arith.constant 0 : index
    %107 = vector.load %arg5[%c0_45, %c4, %c0_46] : memref<1x49x256xf32, #tpu.memory_space<vmem>>, vector<1x1x256xf32>
    %108 = vector.shape_cast %107 : vector<1x1x256xf32> to vector<1x256xf32>
    %109 = vector.shape_cast %106 : vector<1x256xf32> to vector<1x1x256xf32>
    tpu.vector_store %arg5[%c0_45, %c4, %c0_46], %109 {strides = array<i32>} : memref<1x49x256xf32, #tpu.memory_space<vmem>>, vector<1x1x256xf32>,
    %c2_i32 = arith.constant 2 : i32
    %110 = vector.broadcast %c2_i32 : i32 to vector<1x256xi32>
    %111 = arith.addi %5, %110 : vector<1x256xi32>
    %c0_i32_47 = arith.constant 0 : i32
    %112 = vector.broadcast %c0_i32_47 : i32 to vector<1x256xi32>
    %113 = arith.cmpi sge, %111, %112 : vector<1x256xi32>
    %c2_i32_48 = arith.constant 2 : i32
    %114 = vector.broadcast %c2_i32_48 : i32 to vector<1x256xi32>
    %115 = arith.addi %5, %114 : vector<1x256xi32>
    %c16_i32_49 = arith.constant 16 : i32
    %116 = vector.broadcast %c16_i32_49 : i32 to vector<1x256xi32>
    %117 = arith.cmpi slt, %115, %116 : vector<1x256xi32>
    %118 = arith.andi %113, %117 : vector<1x256xi1>
    %c46_i32 = arith.constant 46 : i32
    %119 = tpu.dynamic_rotate %3 by %c46_i32 dim 1 : vector<4x256xf32>, i32 -> vector<4x256xf32>
    %120 = arith.mulf %1, %119 : vector<4x256xf32>
    %cst_50 = arith.constant dense<0.000000e+00> : vector<256xf32>
    %121 = vector.multi_reduction <add>, %120, %cst_50 [0] : vector<4x256xf32> to vector<256xf32>
    %122 = vector.shape_cast %121 : vector<256xf32> to vector<1x256xf32>
    %123 = arith.andi %14, %118 : vector<1x256xi1>
    %cst_51 = arith.constant 0.000000e+00 : f32
    %124 = vector.broadcast %cst_51 : f32 to vector<1x256xf32>
    %125 = arith.select %123, %122, %124 : vector<1x256xi1>, vector<1x256xf32>
    %c0_52 = arith.constant 0 : index
    %c5 = arith.constant 5 : index
    %c0_53 = arith.constant 0 : index
    %126 = vector.load %arg5[%c0_52, %c5, %c0_53] : memref<1x49x256xf32, #tpu.memory_space<vmem>>, vector<1x1x256xf32>
    %127 = vector.shape_cast %126 : vector<1x1x256xf32> to vector<1x256xf32>
    %128 = vector.shape_cast %125 : vector<1x256xf32> to vector<1x1x256xf32>
    tpu.vector_store %arg5[%c0_52, %c5, %c0_53], %128 {strides = array<i32>} : memref<1x49x256xf32, #tpu.memory_space<vmem>>, vector<1x1x256xf32>,
    %c3_i32 = arith.constant 3 : i32
    %129 = vector.broadcast %c3_i32 : i32 to vector<1x256xi32>
    %130 = arith.addi %5, %129 : vector<1x256xi32>
    %c0_i32_54 = arith.constant 0 : i32
    %131 = vector.broadcast %c0_i32_54 : i32 to vector<1x256xi32>
    %132 = arith.cmpi sge, %130, %131 : vector<1x256xi32>
    %c3_i32_55 = arith.constant 3 : i32
    %133 = vector.broadcast %c3_i32_55 : i32 to vector<1x256xi32>
    %134 = arith.addi %5, %133 : vector<1x256xi32>
    %c16_i32_56 = arith.constant 16 : i32
    %135 = vector.broadcast %c16_i32_56 : i32 to vector<1x256xi32>
    %136 = arith.cmpi slt, %134, %135 : vector<1x256xi32>
    %137 = arith.andi %132, %136 : vector<1x256xi1>
    %c45_i32 = arith.constant 45 : i32
    %138 = tpu.dynamic_rotate %3 by %c45_i32 dim 1 : vector<4x256xf32>, i32 -> vector<4x256xf32>
    %139 = arith.mulf %1, %138 : vector<4x256xf32>
    %cst_57 = arith.constant dense<0.000000e+00> : vector<256xf32>
    %140 = vector.multi_reduction <add>, %139, %cst_57 [0] : vector<4x256xf32> to vector<256xf32>
    %141 = vector.shape_cast %140 : vector<256xf32> to vector<1x256xf32>
    %142 = arith.andi %14, %137 : vector<1x256xi1>
    %cst_58 = arith.constant 0.000000e+00 : f32
    %143 = vector.broadcast %cst_58 : f32 to vector<1x256xf32>
    %144 = arith.select %142, %141, %143 : vector<1x256xi1>, vector<1x256xf32>
    %c0_59 = arith.constant 0 : index
    %c6 = arith.constant 6 : index
    %c0_60 = arith.constant 0 : index
    %145 = vector.load %arg5[%c0_59, %c6, %c0_60] : memref<1x49x256xf32, #tpu.memory_space<vmem>>, vector<1x1x256xf32>
    %146 = vector.shape_cast %145 : vector<1x1x256xf32> to vector<1x256xf32>
    %147 = vector.shape_cast %144 : vector<1x256xf32> to vector<1x1x256xf32>
    tpu.vector_store %arg5[%c0_59, %c6, %c0_60], %147 {strides = array<i32>} : memref<1x49x256xf32, #tpu.memory_space<vmem>>, vector<1x1x256xf32>,
    %c-2_i32_61 = arith.constant -2 : i32
    %148 = vector.broadcast %c-2_i32_61 : i32 to vector<1x256xi32>
    %149 = arith.addi %4, %148 : vector<1x256xi32>
    %c0_i32_62 = arith.constant 0 : i32
    %150 = vector.broadcast %c0_i32_62 : i32 to vector<1x256xi32>
    %151 = arith.cmpi sge, %149, %150 : vector<1x256xi32>
    %c-2_i32_63 = arith.constant -2 : i32
    %152 = vector.broadcast %c-2_i32_63 : i32 to vector<1x256xi32>
    %153 = arith.addi %4, %152 : vector<1x256xi32>
    %c16_i32_64 = arith.constant 16 : i32
    %154 = vector.broadcast %c16_i32_64 : i32 to vector<1x256xi32>
    %155 = arith.cmpi slt, %153, %154 : vector<1x256xi32>
    %156 = arith.andi %151, %155 : vector<1x256xi1>
    %c-3_i32_65 = arith.constant -3 : i32
    %157 = vector.broadcast %c-3_i32_65 : i32 to vector<1x256xi32>
    %158 = arith.addi %5, %157 : vector<1x256xi32>
    %c0_i32_66 = arith.constant 0 : i32
    %159 = vector.broadcast %c0_i32_66 : i32 to vector<1x256xi32>
    %160 = arith.cmpi sge, %158, %159 : vector<1x256xi32>
    %c-3_i32_67 = arith.constant -3 : i32
    %161 = vector.broadcast %c-3_i32_67 : i32 to vector<1x256xi32>
    %162 = arith.addi %5, %161 : vector<1x256xi32>
    %c16_i32_68 = arith.constant 16 : i32
    %163 = vector.broadcast %c16_i32_68 : i32 to vector<1x256xi32>
    %164 = arith.cmpi slt, %162, %163 : vector<1x256xi32>
    %165 = arith.andi %160, %164 : vector<1x256xi1>
    %c35_i32 = arith.constant 35 : i32
    %166 = tpu.dynamic_rotate %3 by %c35_i32 dim 1 : vector<4x256xf32>, i32 -> vector<4x256xf32>
    %167 = arith.mulf %1, %166 : vector<4x256xf32>
    %cst_69 = arith.constant dense<0.000000e+00> : vector<256xf32>
    %168 = vector.multi_reduction <add>, %167, %cst_69 [0] : vector<4x256xf32> to vector<256xf32>
    %169 = vector.shape_cast %168 : vector<256xf32> to vector<1x256xf32>
    %170 = arith.andi %156, %165 : vector<1x256xi1>
    %cst_70 = arith.constant 0.000000e+00 : f32
    %171 = vector.broadcast %cst_70 : f32 to vector<1x256xf32>
    %172 = arith.select %170, %169, %171 : vector<1x256xi1>, vector<1x256xf32>
    %c0_71 = arith.constant 0 : index
    %c7 = arith.constant 7 : index
    %c0_72 = arith.constant 0 : index
    %173 = vector.load %arg5[%c0_71, %c7, %c0_72] : memref<1x49x256xf32, #tpu.memory_space<vmem>>, vector<1x1x256xf32>
    %174 = vector.shape_cast %173 : vector<1x1x256xf32> to vector<1x256xf32>
    %175 = vector.shape_cast %172 : vector<1x256xf32> to vector<1x1x256xf32>
    tpu.vector_store %arg5[%c0_71, %c7, %c0_72], %175 {strides = array<i32>} : memref<1x49x256xf32, #tpu.memory_space<vmem>>, vector<1x1x256xf32>,
    %c-2_i32_73 = arith.constant -2 : i32
    %176 = vector.broadcast %c-2_i32_73 : i32 to vector<1x256xi32>
    %177 = arith.addi %5, %176 : vector<1x256xi32>
    %c0_i32_74 = arith.constant 0 : i32
    %178 = vector.broadcast %c0_i32_74 : i32 to vector<1x256xi32>
    %179 = arith.cmpi sge, %177, %178 : vector<1x256xi32>
    %c-2_i32_75 = arith.constant -2 : i32
    %180 = vector.broadcast %c-2_i32_75 : i32 to vector<1x256xi32>
    %181 = arith.addi %5, %180 : vector<1x256xi32>
    %c16_i32_76 = arith.constant 16 : i32
    %182 = vector.broadcast %c16_i32_76 : i32 to vector<1x256xi32>
    %183 = arith.cmpi slt, %181, %182 : vector<1x256xi32>
    %184 = arith.andi %179, %183 : vector<1x256xi1>
    %c34_i32 = arith.constant 34 : i32
    %185 = tpu.dynamic_rotate %3 by %c34_i32 dim 1 : vector<4x256xf32>, i32 -> vector<4x256xf32>
    %186 = arith.mulf %1, %185 : vector<4x256xf32>
    %cst_77 = arith.constant dense<0.000000e+00> : vector<256xf32>
    %187 = vector.multi_reduction <add>, %186, %cst_77 [0] : vector<4x256xf32> to vector<256xf32>
    %188 = vector.shape_cast %187 : vector<256xf32> to vector<1x256xf32>
    %189 = arith.andi %156, %184 : vector<1x256xi1>
    %cst_78 = arith.constant 0.000000e+00 : f32
    %190 = vector.broadcast %cst_78 : f32 to vector<1x256xf32>
    %191 = arith.select %189, %188, %190 : vector<1x256xi1>, vector<1x256xf32>
    %c0_79 = arith.constant 0 : index
    %c8 = arith.constant 8 : index
    %c0_80 = arith.constant 0 : index
    %192 = vector.load %arg5[%c0_79, %c8, %c0_80] : memref<1x49x256xf32, #tpu.memory_space<vmem>>, vector<1x1x256xf32>
    %193 = vector.shape_cast %192 : vector<1x1x256xf32> to vector<1x256xf32>
    %194 = vector.shape_cast %191 : vector<1x256xf32> to vector<1x1x256xf32>
    tpu.vector_store %arg5[%c0_79, %c8, %c0_80], %194 {strides = array<i32>} : memref<1x49x256xf32, #tpu.memory_space<vmem>>, vector<1x1x256xf32>,
    %c-1_i32_81 = arith.constant -1 : i32
    %195 = vector.broadcast %c-1_i32_81 : i32 to vector<1x256xi32>
    %196 = arith.addi %5, %195 : vector<1x256xi32>
    %c0_i32_82 = arith.constant 0 : i32
    %197 = vector.broadcast %c0_i32_82 : i32 to vector<1x256xi32>
    %198 = arith.cmpi sge, %196, %197 : vector<1x256xi32>
    %c-1_i32_83 = arith.constant -1 : i32
    %199 = vector.broadcast %c-1_i32_83 : i32 to vector<1x256xi32>
    %200 = arith.addi %5, %199 : vector<1x256xi32>
    %c16_i32_84 = arith.constant 16 : i32
    %201 = vector.broadcast %c16_i32_84 : i32 to vector<1x256xi32>
    %202 = arith.cmpi slt, %200, %201 : vector<1x256xi32>
    %203 = arith.andi %198, %202 : vector<1x256xi1>
    %c33_i32 = arith.constant 33 : i32
    %204 = tpu.dynamic_rotate %3 by %c33_i32 dim 1 : vector<4x256xf32>, i32 -> vector<4x256xf32>
    %205 = arith.mulf %1, %204 : vector<4x256xf32>
    %cst_85 = arith.constant dense<0.000000e+00> : vector<256xf32>
    %206 = vector.multi_reduction <add>, %205, %cst_85 [0] : vector<4x256xf32> to vector<256xf32>
    %207 = vector.shape_cast %206 : vector<256xf32> to vector<1x256xf32>
    %208 = arith.andi %156, %203 : vector<1x256xi1>
    %cst_86 = arith.constant 0.000000e+00 : f32
    %209 = vector.broadcast %cst_86 : f32 to vector<1x256xf32>
    %210 = arith.select %208, %207, %209 : vector<1x256xi1>, vector<1x256xf32>
    %c0_87 = arith.constant 0 : index
    %c9 = arith.constant 9 : index
    %c0_88 = arith.constant 0 : index
    %211 = vector.load %arg5[%c0_87, %c9, %c0_88] : memref<1x49x256xf32, #tpu.memory_space<vmem>>, vector<1x1x256xf32>
    %212 = vector.shape_cast %211 : vector<1x1x256xf32> to vector<1x256xf32>
    %213 = vector.shape_cast %210 : vector<1x256xf32> to vector<1x1x256xf32>
    tpu.vector_store %arg5[%c0_87, %c9, %c0_88], %213 {strides = array<i32>} : memref<1x49x256xf32, #tpu.memory_space<vmem>>, vector<1x1x256xf32>,
    %c0_i32_89 = arith.constant 0 : i32
    %214 = vector.broadcast %c0_i32_89 : i32 to vector<1x256xi32>
    %215 = arith.addi %5, %214 : vector<1x256xi32>
    %c0_i32_90 = arith.constant 0 : i32
    %216 = vector.broadcast %c0_i32_90 : i32 to vector<1x256xi32>
    %217 = arith.cmpi sge, %215, %216 : vector<1x256xi32>
    %c0_i32_91 = arith.constant 0 : i32
    %218 = vector.broadcast %c0_i32_91 : i32 to vector<1x256xi32>
    %219 = arith.addi %5, %218 : vector<1x256xi32>
    %c16_i32_92 = arith.constant 16 : i32
    %220 = vector.broadcast %c16_i32_92 : i32 to vector<1x256xi32>
    %221 = arith.cmpi slt, %219, %220 : vector<1x256xi32>
    %222 = arith.andi %217, %221 : vector<1x256xi1>
    %c32_i32 = arith.constant 32 : i32
    %223 = tpu.dynamic_rotate %3 by %c32_i32 dim 1 : vector<4x256xf32>, i32 -> vector<4x256xf32>
    %224 = arith.mulf %1, %223 : vector<4x256xf32>
    %cst_93 = arith.constant dense<0.000000e+00> : vector<256xf32>
    %225 = vector.multi_reduction <add>, %224, %cst_93 [0] : vector<4x256xf32> to vector<256xf32>
    %226 = vector.shape_cast %225 : vector<256xf32> to vector<1x256xf32>
    %227 = arith.andi %156, %222 : vector<1x256xi1>
    %cst_94 = arith.constant 0.000000e+00 : f32
    %228 = vector.broadcast %cst_94 : f32 to vector<1x256xf32>
    %229 = arith.select %227, %226, %228 : vector<1x256xi1>, vector<1x256xf32>
    %c0_95 = arith.constant 0 : index
    %c10 = arith.constant 10 : index
    %c0_96 = arith.constant 0 : index
    %230 = vector.load %arg5[%c0_95, %c10, %c0_96] : memref<1x49x256xf32, #tpu.memory_space<vmem>>, vector<1x1x256xf32>
    %231 = vector.shape_cast %230 : vector<1x1x256xf32> to vector<1x256xf32>
    %232 = vector.shape_cast %229 : vector<1x256xf32> to vector<1x1x256xf32>
    tpu.vector_store %arg5[%c0_95, %c10, %c0_96], %232 {strides = array<i32>} : memref<1x49x256xf32, #tpu.memory_space<vmem>>, vector<1x1x256xf32>,
    %c1_i32_97 = arith.constant 1 : i32
    %233 = vector.broadcast %c1_i32_97 : i32 to vector<1x256xi32>
    %234 = arith.addi %5, %233 : vector<1x256xi32>
    %c0_i32_98 = arith.constant 0 : i32
    %235 = vector.broadcast %c0_i32_98 : i32 to vector<1x256xi32>
    %236 = arith.cmpi sge, %234, %235 : vector<1x256xi32>
    %c1_i32_99 = arith.constant 1 : i32
    %237 = vector.broadcast %c1_i32_99 : i32 to vector<1x256xi32>
    %238 = arith.addi %5, %237 : vector<1x256xi32>
    %c16_i32_100 = arith.constant 16 : i32
    %239 = vector.broadcast %c16_i32_100 : i32 to vector<1x256xi32>
    %240 = arith.cmpi slt, %238, %239 : vector<1x256xi32>
    %241 = arith.andi %236, %240 : vector<1x256xi1>
    %c31_i32 = arith.constant 31 : i32
    %242 = tpu.dynamic_rotate %3 by %c31_i32 dim 1 : vector<4x256xf32>, i32 -> vector<4x256xf32>
    %243 = arith.mulf %1, %242 : vector<4x256xf32>
    %cst_101 = arith.constant dense<0.000000e+00> : vector<256xf32>
    %244 = vector.multi_reduction <add>, %243, %cst_101 [0] : vector<4x256xf32> to vector<256xf32>
    %245 = vector.shape_cast %244 : vector<256xf32> to vector<1x256xf32>
    %246 = arith.andi %156, %241 : vector<1x256xi1>
    %cst_102 = arith.constant 0.000000e+00 : f32
    %247 = vector.broadcast %cst_102 : f32 to vector<1x256xf32>
    %248 = arith.select %246, %245, %247 : vector<1x256xi1>, vector<1x256xf32>
    %c0_103 = arith.constant 0 : index
    %c11 = arith.constant 11 : index
    %c0_104 = arith.constant 0 : index
    %249 = vector.load %arg5[%c0_103, %c11, %c0_104] : memref<1x49x256xf32, #tpu.memory_space<vmem>>, vector<1x1x256xf32>
    %250 = vector.shape_cast %249 : vector<1x1x256xf32> to vector<1x256xf32>
    %251 = vector.shape_cast %248 : vector<1x256xf32> to vector<1x1x256xf32>
    tpu.vector_store %arg5[%c0_103, %c11, %c0_104], %251 {strides = array<i32>} : memref<1x49x256xf32, #tpu.memory_space<vmem>>, vector<1x1x256xf32>,
    %c2_i32_105 = arith.constant 2 : i32
    %252 = vector.broadcast %c2_i32_105 : i32 to vector<1x256xi32>
    %253 = arith.addi %5, %252 : vector<1x256xi32>
    %c0_i32_106 = arith.constant 0 : i32
    %254 = vector.broadcast %c0_i32_106 : i32 to vector<1x256xi32>
    %255 = arith.cmpi sge, %253, %254 : vector<1x256xi32>
    %c2_i32_107 = arith.constant 2 : i32
    %256 = vector.broadcast %c2_i32_107 : i32 to vector<1x256xi32>
    %257 = arith.addi %5, %256 : vector<1x256xi32>
    %c16_i32_108 = arith.constant 16 : i32
    %258 = vector.broadcast %c16_i32_108 : i32 to vector<1x256xi32>
    %259 = arith.cmpi slt, %257, %258 : vector<1x256xi32>
    %260 = arith.andi %255, %259 : vector<1x256xi1>
    %c30_i32 = arith.constant 30 : i32
    %261 = tpu.dynamic_rotate %3 by %c30_i32 dim 1 : vector<4x256xf32>, i32 -> vector<4x256xf32>
    %262 = arith.mulf %1, %261 : vector<4x256xf32>
    %cst_109 = arith.constant dense<0.000000e+00> : vector<256xf32>
    %263 = vector.multi_reduction <add>, %262, %cst_109 [0] : vector<4x256xf32> to vector<256xf32>
    %264 = vector.shape_cast %263 : vector<256xf32> to vector<1x256xf32>
    %265 = arith.andi %156, %260 : vector<1x256xi1>
    %cst_110 = arith.constant 0.000000e+00 : f32
    %266 = vector.broadcast %cst_110 : f32 to vector<1x256xf32>
    %267 = arith.select %265, %264, %266 : vector<1x256xi1>, vector<1x256xf32>
    %c0_111 = arith.constant 0 : index
    %c12 = arith.constant 12 : index
    %c0_112 = arith.constant 0 : index
    %268 = vector.load %arg5[%c0_111, %c12, %c0_112] : memref<1x49x256xf32, #tpu.memory_space<vmem>>, vector<1x1x256xf32>
    %269 = vector.shape_cast %268 : vector<1x1x256xf32> to vector<1x256xf32>
    %270 = vector.shape_cast %267 : vector<1x256xf32> to vector<1x1x256xf32>
    tpu.vector_store %arg5[%c0_111, %c12, %c0_112], %270 {strides = array<i32>} : memref<1x49x256xf32, #tpu.memory_space<vmem>>, vector<1x1x256xf32>,
    %c3_i32_113 = arith.constant 3 : i32
    %271 = vector.broadcast %c3_i32_113 : i32 to vector<1x256xi32>
    %272 = arith.addi %5, %271 : vector<1x256xi32>
    %c0_i32_114 = arith.constant 0 : i32
    %273 = vector.broadcast %c0_i32_114 : i32 to vector<1x256xi32>
    %274 = arith.cmpi sge, %272, %273 : vector<1x256xi32>
    %c3_i32_115 = arith.constant 3 : i32
    %275 = vector.broadcast %c3_i32_115 : i32 to vector<1x256xi32>
    %276 = arith.addi %5, %275 : vector<1x256xi32>
    %c16_i32_116 = arith.constant 16 : i32
    %277 = vector.broadcast %c16_i32_116 : i32 to vector<1x256xi32>
    %278 = arith.cmpi slt, %276, %277 : vector<1x256xi32>
    %279 = arith.andi %274, %278 : vector<1x256xi1>
    %c29_i32 = arith.constant 29 : i32
    %280 = tpu.dynamic_rotate %3 by %c29_i32 dim 1 : vector<4x256xf32>, i32 -> vector<4x256xf32>
    %281 = arith.mulf %1, %280 : vector<4x256xf32>
    %cst_117 = arith.constant dense<0.000000e+00> : vector<256xf32>
    %282 = vector.multi_reduction <add>, %281, %cst_117 [0] : vector<4x256xf32> to vector<256xf32>
    %283 = vector.shape_cast %282 : vector<256xf32> to vector<1x256xf32>
    %284 = arith.andi %156, %279 : vector<1x256xi1>
    %cst_118 = arith.constant 0.000000e+00 : f32
    %285 = vector.broadcast %cst_118 : f32 to vector<1x256xf32>
    %286 = arith.select %284, %283, %285 : vector<1x256xi1>, vector<1x256xf32>
    %c0_119 = arith.constant 0 : index
    %c13 = arith.constant 13 : index
    %c0_120 = arith.constant 0 : index
    %287 = vector.load %arg5[%c0_119, %c13, %c0_120] : memref<1x49x256xf32, #tpu.memory_space<vmem>>, vector<1x1x256xf32>
    %288 = vector.shape_cast %287 : vector<1x1x256xf32> to vector<1x256xf32>
    %289 = vector.shape_cast %286 : vector<1x256xf32> to vector<1x1x256xf32>
    tpu.vector_store %arg5[%c0_119, %c13, %c0_120], %289 {strides = array<i32>} : memref<1x49x256xf32, #tpu.memory_space<vmem>>, vector<1x1x256xf32>,
    %c-1_i32_121 = arith.constant -1 : i32
    %290 = vector.broadcast %c-1_i32_121 : i32 to vector<1x256xi32>
    %291 = arith.addi %4, %290 : vector<1x256xi32>
    %c0_i32_122 = arith.constant 0 : i32
    %292 = vector.broadcast %c0_i32_122 : i32 to vector<1x256xi32>
    %293 = arith.cmpi sge, %291, %292 : vector<1x256xi32>
    %c-1_i32_123 = arith.constant -1 : i32
    %294 = vector.broadcast %c-1_i32_123 : i32 to vector<1x256xi32>
    %295 = arith.addi %4, %294 : vector<1x256xi32>
    %c16_i32_124 = arith.constant 16 : i32
    %296 = vector.broadcast %c16_i32_124 : i32 to vector<1x256xi32>
    %297 = arith.cmpi slt, %295, %296 : vector<1x256xi32>
    %298 = arith.andi %293, %297 : vector<1x256xi1>
    %c-3_i32_125 = arith.constant -3 : i32
    %299 = vector.broadcast %c-3_i32_125 : i32 to vector<1x256xi32>
    %300 = arith.addi %5, %299 : vector<1x256xi32>
    %c0_i32_126 = arith.constant 0 : i32
    %301 = vector.broadcast %c0_i32_126 : i32 to vector<1x256xi32>
    %302 = arith.cmpi sge, %300, %301 : vector<1x256xi32>
    %c-3_i32_127 = arith.constant -3 : i32
    %303 = vector.broadcast %c-3_i32_127 : i32 to vector<1x256xi32>
    %304 = arith.addi %5, %303 : vector<1x256xi32>
    %c16_i32_128 = arith.constant 16 : i32
    %305 = vector.broadcast %c16_i32_128 : i32 to vector<1x256xi32>
    %306 = arith.cmpi slt, %304, %305 : vector<1x256xi32>
    %307 = arith.andi %302, %306 : vector<1x256xi1>
    %c19_i32 = arith.constant 19 : i32
    %308 = tpu.dynamic_rotate %3 by %c19_i32 dim 1 : vector<4x256xf32>, i32 -> vector<4x256xf32>
    %309 = arith.mulf %1, %308 : vector<4x256xf32>
    %cst_129 = arith.constant dense<0.000000e+00> : vector<256xf32>
    %310 = vector.multi_reduction <add>, %309, %cst_129 [0] : vector<4x256xf32> to vector<256xf32>
    %311 = vector.shape_cast %310 : vector<256xf32> to vector<1x256xf32>
    %312 = arith.andi %298, %307 : vector<1x256xi1>
    %cst_130 = arith.constant 0.000000e+00 : f32
    %313 = vector.broadcast %cst_130 : f32 to vector<1x256xf32>
    %314 = arith.select %312, %311, %313 : vector<1x256xi1>, vector<1x256xf32>
    %c0_131 = arith.constant 0 : index
    %c14 = arith.constant 14 : index
    %c0_132 = arith.constant 0 : index
    %315 = vector.load %arg5[%c0_131, %c14, %c0_132] : memref<1x49x256xf32, #tpu.memory_space<vmem>>, vector<1x1x256xf32>
    %316 = vector.shape_cast %315 : vector<1x1x256xf32> to vector<1x256xf32>
    %317 = vector.shape_cast %314 : vector<1x256xf32> to vector<1x1x256xf32>
    tpu.vector_store %arg5[%c0_131, %c14, %c0_132], %317 {strides = array<i32>} : memref<1x49x256xf32, #tpu.memory_space<vmem>>, vector<1x1x256xf32>,
    %c-2_i32_133 = arith.constant -2 : i32
    %318 = vector.broadcast %c-2_i32_133 : i32 to vector<1x256xi32>
    %319 = arith.addi %5, %318 : vector<1x256xi32>
    %c0_i32_134 = arith.constant 0 : i32
    %320 = vector.broadcast %c0_i32_134 : i32 to vector<1x256xi32>
    %321 = arith.cmpi sge, %319, %320 : vector<1x256xi32>
    %c-2_i32_135 = arith.constant -2 : i32
    %322 = vector.broadcast %c-2_i32_135 : i32 to vector<1x256xi32>
    %323 = arith.addi %5, %322 : vector<1x256xi32>
    %c16_i32_136 = arith.constant 16 : i32
    %324 = vector.broadcast %c16_i32_136 : i32 to vector<1x256xi32>
    %325 = arith.cmpi slt, %323, %324 : vector<1x256xi32>
    %326 = arith.andi %321, %325 : vector<1x256xi1>
    %c18_i32 = arith.constant 18 : i32
    %327 = tpu.dynamic_rotate %3 by %c18_i32 dim 1 : vector<4x256xf32>, i32 -> vector<4x256xf32>
    %328 = arith.mulf %1, %327 : vector<4x256xf32>
    %cst_137 = arith.constant dense<0.000000e+00> : vector<256xf32>
    %329 = vector.multi_reduction <add>, %328, %cst_137 [0] : vector<4x256xf32> to vector<256xf32>
    %330 = vector.shape_cast %329 : vector<256xf32> to vector<1x256xf32>
    %331 = arith.andi %298, %326 : vector<1x256xi1>
    %cst_138 = arith.constant 0.000000e+00 : f32
    %332 = vector.broadcast %cst_138 : f32 to vector<1x256xf32>
    %333 = arith.select %331, %330, %332 : vector<1x256xi1>, vector<1x256xf32>
    %c0_139 = arith.constant 0 : index
    %c15 = arith.constant 15 : index
    %c0_140 = arith.constant 0 : index
    %334 = vector.load %arg5[%c0_139, %c15, %c0_140] : memref<1x49x256xf32, #tpu.memory_space<vmem>>, vector<1x1x256xf32>
    %335 = vector.shape_cast %334 : vector<1x1x256xf32> to vector<1x256xf32>
    %336 = vector.shape_cast %333 : vector<1x256xf32> to vector<1x1x256xf32>
    tpu.vector_store %arg5[%c0_139, %c15, %c0_140], %336 {strides = array<i32>} : memref<1x49x256xf32, #tpu.memory_space<vmem>>, vector<1x1x256xf32>,
    %c-1_i32_141 = arith.constant -1 : i32
    %337 = vector.broadcast %c-1_i32_141 : i32 to vector<1x256xi32>
    %338 = arith.addi %5, %337 : vector<1x256xi32>
    %c0_i32_142 = arith.constant 0 : i32
    %339 = vector.broadcast %c0_i32_142 : i32 to vector<1x256xi32>
    %340 = arith.cmpi sge, %338, %339 : vector<1x256xi32>
    %c-1_i32_143 = arith.constant -1 : i32
    %341 = vector.broadcast %c-1_i32_143 : i32 to vector<1x256xi32>
    %342 = arith.addi %5, %341 : vector<1x256xi32>
    %c16_i32_144 = arith.constant 16 : i32
    %343 = vector.broadcast %c16_i32_144 : i32 to vector<1x256xi32>
    %344 = arith.cmpi slt, %342, %343 : vector<1x256xi32>
    %345 = arith.andi %340, %344 : vector<1x256xi1>
    %c17_i32 = arith.constant 17 : i32
    %346 = tpu.dynamic_rotate %3 by %c17_i32 dim 1 : vector<4x256xf32>, i32 -> vector<4x256xf32>
    %347 = arith.mulf %1, %346 : vector<4x256xf32>
    %cst_145 = arith.constant dense<0.000000e+00> : vector<256xf32>
    %348 = vector.multi_reduction <add>, %347, %cst_145 [0] : vector<4x256xf32> to vector<256xf32>
    %349 = vector.shape_cast %348 : vector<256xf32> to vector<1x256xf32>
    %350 = arith.andi %298, %345 : vector<1x256xi1>
    %cst_146 = arith.constant 0.000000e+00 : f32
    %351 = vector.broadcast %cst_146 : f32 to vector<1x256xf32>
    %352 = arith.select %350, %349, %351 : vector<1x256xi1>, vector<1x256xf32>
    %c0_147 = arith.constant 0 : index
    %c16 = arith.constant 16 : index
    %c0_148 = arith.constant 0 : index
    %353 = vector.load %arg5[%c0_147, %c16, %c0_148] : memref<1x49x256xf32, #tpu.memory_space<vmem>>, vector<1x1x256xf32>
    %354 = vector.shape_cast %353 : vector<1x1x256xf32> to vector<1x256xf32>
    %355 = vector.shape_cast %352 : vector<1x256xf32> to vector<1x1x256xf32>
    tpu.vector_store %arg5[%c0_147, %c16, %c0_148], %355 {strides = array<i32>} : memref<1x49x256xf32, #tpu.memory_space<vmem>>, vector<1x1x256xf32>,
    %c0_i32_149 = arith.constant 0 : i32
    %356 = vector.broadcast %c0_i32_149 : i32 to vector<1x256xi32>
    %357 = arith.addi %5, %356 : vector<1x256xi32>
    %c0_i32_150 = arith.constant 0 : i32
    %358 = vector.broadcast %c0_i32_150 : i32 to vector<1x256xi32>
    %359 = arith.cmpi sge, %357, %358 : vector<1x256xi32>
    %c0_i32_151 = arith.constant 0 : i32
    %360 = vector.broadcast %c0_i32_151 : i32 to vector<1x256xi32>
    %361 = arith.addi %5, %360 : vector<1x256xi32>
    %c16_i32_152 = arith.constant 16 : i32
    %362 = vector.broadcast %c16_i32_152 : i32 to vector<1x256xi32>
    %363 = arith.cmpi slt, %361, %362 : vector<1x256xi32>
    %364 = arith.andi %359, %363 : vector<1x256xi1>
    %c16_i32_153 = arith.constant 16 : i32
    %365 = tpu.dynamic_rotate %3 by %c16_i32_153 dim 1 : vector<4x256xf32>, i32 -> vector<4x256xf32>
    %366 = arith.mulf %1, %365 : vector<4x256xf32>
    %cst_154 = arith.constant dense<0.000000e+00> : vector<256xf32>
    %367 = vector.multi_reduction <add>, %366, %cst_154 [0] : vector<4x256xf32> to vector<256xf32>
    %368 = vector.shape_cast %367 : vector<256xf32> to vector<1x256xf32>
    %369 = arith.andi %298, %364 : vector<1x256xi1>
    %cst_155 = arith.constant 0.000000e+00 : f32
    %370 = vector.broadcast %cst_155 : f32 to vector<1x256xf32>
    %371 = arith.select %369, %368, %370 : vector<1x256xi1>, vector<1x256xf32>
    %c0_156 = arith.constant 0 : index
    %c17 = arith.constant 17 : index
    %c0_157 = arith.constant 0 : index
    %372 = vector.load %arg5[%c0_156, %c17, %c0_157] : memref<1x49x256xf32, #tpu.memory_space<vmem>>, vector<1x1x256xf32>
    %373 = vector.shape_cast %372 : vector<1x1x256xf32> to vector<1x256xf32>
    %374 = vector.shape_cast %371 : vector<1x256xf32> to vector<1x1x256xf32>
    tpu.vector_store %arg5[%c0_156, %c17, %c0_157], %374 {strides = array<i32>} : memref<1x49x256xf32, #tpu.memory_space<vmem>>, vector<1x1x256xf32>,
    %c1_i32_158 = arith.constant 1 : i32
    %375 = vector.broadcast %c1_i32_158 : i32 to vector<1x256xi32>
    %376 = arith.addi %5, %375 : vector<1x256xi32>
    %c0_i32_159 = arith.constant 0 : i32
    %377 = vector.broadcast %c0_i32_159 : i32 to vector<1x256xi32>
    %378 = arith.cmpi sge, %376, %377 : vector<1x256xi32>
    %c1_i32_160 = arith.constant 1 : i32
    %379 = vector.broadcast %c1_i32_160 : i32 to vector<1x256xi32>
    %380 = arith.addi %5, %379 : vector<1x256xi32>
    %c16_i32_161 = arith.constant 16 : i32
    %381 = vector.broadcast %c16_i32_161 : i32 to vector<1x256xi32>
    %382 = arith.cmpi slt, %380, %381 : vector<1x256xi32>
    %383 = arith.andi %378, %382 : vector<1x256xi1>
    %c15_i32 = arith.constant 15 : i32
    %384 = tpu.dynamic_rotate %3 by %c15_i32 dim 1 : vector<4x256xf32>, i32 -> vector<4x256xf32>
    %385 = arith.mulf %1, %384 : vector<4x256xf32>
    %cst_162 = arith.constant dense<0.000000e+00> : vector<256xf32>
    %386 = vector.multi_reduction <add>, %385, %cst_162 [0] : vector<4x256xf32> to vector<256xf32>
    %387 = vector.shape_cast %386 : vector<256xf32> to vector<1x256xf32>
    %388 = arith.andi %298, %383 : vector<1x256xi1>
    %cst_163 = arith.constant 0.000000e+00 : f32
    %389 = vector.broadcast %cst_163 : f32 to vector<1x256xf32>
    %390 = arith.select %388, %387, %389 : vector<1x256xi1>, vector<1x256xf32>
    %c0_164 = arith.constant 0 : index
    %c18 = arith.constant 18 : index
    %c0_165 = arith.constant 0 : index
    %391 = vector.load %arg5[%c0_164, %c18, %c0_165] : memref<1x49x256xf32, #tpu.memory_space<vmem>>, vector<1x1x256xf32>
    %392 = vector.shape_cast %391 : vector<1x1x256xf32> to vector<1x256xf32>
    %393 = vector.shape_cast %390 : vector<1x256xf32> to vector<1x1x256xf32>
    tpu.vector_store %arg5[%c0_164, %c18, %c0_165], %393 {strides = array<i32>} : memref<1x49x256xf32, #tpu.memory_space<vmem>>, vector<1x1x256xf32>,
    %c2_i32_166 = arith.constant 2 : i32
    %394 = vector.broadcast %c2_i32_166 : i32 to vector<1x256xi32>
    %395 = arith.addi %5, %394 : vector<1x256xi32>
    %c0_i32_167 = arith.constant 0 : i32
    %396 = vector.broadcast %c0_i32_167 : i32 to vector<1x256xi32>
    %397 = arith.cmpi sge, %395, %396 : vector<1x256xi32>
    %c2_i32_168 = arith.constant 2 : i32
    %398 = vector.broadcast %c2_i32_168 : i32 to vector<1x256xi32>
    %399 = arith.addi %5, %398 : vector<1x256xi32>
    %c16_i32_169 = arith.constant 16 : i32
    %400 = vector.broadcast %c16_i32_169 : i32 to vector<1x256xi32>
    %401 = arith.cmpi slt, %399, %400 : vector<1x256xi32>
    %402 = arith.andi %397, %401 : vector<1x256xi1>
    %c14_i32 = arith.constant 14 : i32
    %403 = tpu.dynamic_rotate %3 by %c14_i32 dim 1 : vector<4x256xf32>, i32 -> vector<4x256xf32>
    %404 = arith.mulf %1, %403 : vector<4x256xf32>
    %cst_170 = arith.constant dense<0.000000e+00> : vector<256xf32>
    %405 = vector.multi_reduction <add>, %404, %cst_170 [0] : vector<4x256xf32> to vector<256xf32>
    %406 = vector.shape_cast %405 : vector<256xf32> to vector<1x256xf32>
    %407 = arith.andi %298, %402 : vector<1x256xi1>
    %cst_171 = arith.constant 0.000000e+00 : f32
    %408 = vector.broadcast %cst_171 : f32 to vector<1x256xf32>
    %409 = arith.select %407, %406, %408 : vector<1x256xi1>, vector<1x256xf32>
    %c0_172 = arith.constant 0 : index
    %c19 = arith.constant 19 : index
    %c0_173 = arith.constant 0 : index
    %410 = vector.load %arg5[%c0_172, %c19, %c0_173] : memref<1x49x256xf32, #tpu.memory_space<vmem>>, vector<1x1x256xf32>
    %411 = vector.shape_cast %410 : vector<1x1x256xf32> to vector<1x256xf32>
    %412 = vector.shape_cast %409 : vector<1x256xf32> to vector<1x1x256xf32>
    tpu.vector_store %arg5[%c0_172, %c19, %c0_173], %412 {strides = array<i32>} : memref<1x49x256xf32, #tpu.memory_space<vmem>>, vector<1x1x256xf32>,
    %c3_i32_174 = arith.constant 3 : i32
    %413 = vector.broadcast %c3_i32_174 : i32 to vector<1x256xi32>
    %414 = arith.addi %5, %413 : vector<1x256xi32>
    %c0_i32_175 = arith.constant 0 : i32
    %415 = vector.broadcast %c0_i32_175 : i32 to vector<1x256xi32>
    %416 = arith.cmpi sge, %414, %415 : vector<1x256xi32>
    %c3_i32_176 = arith.constant 3 : i32
    %417 = vector.broadcast %c3_i32_176 : i32 to vector<1x256xi32>
    %418 = arith.addi %5, %417 : vector<1x256xi32>
    %c16_i32_177 = arith.constant 16 : i32
    %419 = vector.broadcast %c16_i32_177 : i32 to vector<1x256xi32>
    %420 = arith.cmpi slt, %418, %419 : vector<1x256xi32>
    %421 = arith.andi %416, %420 : vector<1x256xi1>
    %c13_i32 = arith.constant 13 : i32
    %422 = tpu.dynamic_rotate %3 by %c13_i32 dim 1 : vector<4x256xf32>, i32 -> vector<4x256xf32>
    %423 = arith.mulf %1, %422 : vector<4x256xf32>
    %cst_178 = arith.constant dense<0.000000e+00> : vector<256xf32>
    %424 = vector.multi_reduction <add>, %423, %cst_178 [0] : vector<4x256xf32> to vector<256xf32>
    %425 = vector.shape_cast %424 : vector<256xf32> to vector<1x256xf32>
    %426 = arith.andi %298, %421 : vector<1x256xi1>
    %cst_179 = arith.constant 0.000000e+00 : f32
    %427 = vector.broadcast %cst_179 : f32 to vector<1x256xf32>
    %428 = arith.select %426, %425, %427 : vector<1x256xi1>, vector<1x256xf32>
    %c0_180 = arith.constant 0 : index
    %c20 = arith.constant 20 : index
    %c0_181 = arith.constant 0 : index
    %429 = vector.load %arg5[%c0_180, %c20, %c0_181] : memref<1x49x256xf32, #tpu.memory_space<vmem>>, vector<1x1x256xf32>
    %430 = vector.shape_cast %429 : vector<1x1x256xf32> to vector<1x256xf32>
    %431 = vector.shape_cast %428 : vector<1x256xf32> to vector<1x1x256xf32>
    tpu.vector_store %arg5[%c0_180, %c20, %c0_181], %431 {strides = array<i32>} : memref<1x49x256xf32, #tpu.memory_space<vmem>>, vector<1x1x256xf32>,
    %c0_i32_182 = arith.constant 0 : i32
    %432 = vector.broadcast %c0_i32_182 : i32 to vector<1x256xi32>
    %433 = arith.addi %4, %432 : vector<1x256xi32>
    %c0_i32_183 = arith.constant 0 : i32
    %434 = vector.broadcast %c0_i32_183 : i32 to vector<1x256xi32>
    %435 = arith.cmpi sge, %433, %434 : vector<1x256xi32>
    %c0_i32_184 = arith.constant 0 : i32
    %436 = vector.broadcast %c0_i32_184 : i32 to vector<1x256xi32>
    %437 = arith.addi %4, %436 : vector<1x256xi32>
    %c16_i32_185 = arith.constant 16 : i32
    %438 = vector.broadcast %c16_i32_185 : i32 to vector<1x256xi32>
    %439 = arith.cmpi slt, %437, %438 : vector<1x256xi32>
    %440 = arith.andi %435, %439 : vector<1x256xi1>
    %c-3_i32_186 = arith.constant -3 : i32
    %441 = vector.broadcast %c-3_i32_186 : i32 to vector<1x256xi32>
    %442 = arith.addi %5, %441 : vector<1x256xi32>
    %c0_i32_187 = arith.constant 0 : i32
    %443 = vector.broadcast %c0_i32_187 : i32 to vector<1x256xi32>
    %444 = arith.cmpi sge, %442, %443 : vector<1x256xi32>
    %c-3_i32_188 = arith.constant -3 : i32
    %445 = vector.broadcast %c-3_i32_188 : i32 to vector<1x256xi32>
    %446 = arith.addi %5, %445 : vector<1x256xi32>
    %c16_i32_189 = arith.constant 16 : i32
    %447 = vector.broadcast %c16_i32_189 : i32 to vector<1x256xi32>
    %448 = arith.cmpi slt, %446, %447 : vector<1x256xi32>
    %449 = arith.andi %444, %448 : vector<1x256xi1>
    %c3_i32_190 = arith.constant 3 : i32
    %450 = tpu.dynamic_rotate %3 by %c3_i32_190 dim 1 : vector<4x256xf32>, i32 -> vector<4x256xf32>
    %451 = arith.mulf %1, %450 : vector<4x256xf32>
    %cst_191 = arith.constant dense<0.000000e+00> : vector<256xf32>
    %452 = vector.multi_reduction <add>, %451, %cst_191 [0] : vector<4x256xf32> to vector<256xf32>
    %453 = vector.shape_cast %452 : vector<256xf32> to vector<1x256xf32>
    %454 = arith.andi %440, %449 : vector<1x256xi1>
    %cst_192 = arith.constant 0.000000e+00 : f32
    %455 = vector.broadcast %cst_192 : f32 to vector<1x256xf32>
    %456 = arith.select %454, %453, %455 : vector<1x256xi1>, vector<1x256xf32>
    %c0_193 = arith.constant 0 : index
    %c21 = arith.constant 21 : index
    %c0_194 = arith.constant 0 : index
    %457 = vector.load %arg5[%c0_193, %c21, %c0_194] : memref<1x49x256xf32, #tpu.memory_space<vmem>>, vector<1x1x256xf32>
    %458 = vector.shape_cast %457 : vector<1x1x256xf32> to vector<1x256xf32>
    %459 = vector.shape_cast %456 : vector<1x256xf32> to vector<1x1x256xf32>
    tpu.vector_store %arg5[%c0_193, %c21, %c0_194], %459 {strides = array<i32>} : memref<1x49x256xf32, #tpu.memory_space<vmem>>, vector<1x1x256xf32>,
    %c-2_i32_195 = arith.constant -2 : i32
    %460 = vector.broadcast %c-2_i32_195 : i32 to vector<1x256xi32>
    %461 = arith.addi %5, %460 : vector<1x256xi32>
    %c0_i32_196 = arith.constant 0 : i32
    %462 = vector.broadcast %c0_i32_196 : i32 to vector<1x256xi32>
    %463 = arith.cmpi sge, %461, %462 : vector<1x256xi32>
    %c-2_i32_197 = arith.constant -2 : i32
    %464 = vector.broadcast %c-2_i32_197 : i32 to vector<1x256xi32>
    %465 = arith.addi %5, %464 : vector<1x256xi32>
    %c16_i32_198 = arith.constant 16 : i32
    %466 = vector.broadcast %c16_i32_198 : i32 to vector<1x256xi32>
    %467 = arith.cmpi slt, %465, %466 : vector<1x256xi32>
    %468 = arith.andi %463, %467 : vector<1x256xi1>
    %c2_i32_199 = arith.constant 2 : i32
    %469 = tpu.dynamic_rotate %3 by %c2_i32_199 dim 1 : vector<4x256xf32>, i32 -> vector<4x256xf32>
    %470 = arith.mulf %1, %469 : vector<4x256xf32>
    %cst_200 = arith.constant dense<0.000000e+00> : vector<256xf32>
    %471 = vector.multi_reduction <add>, %470, %cst_200 [0] : vector<4x256xf32> to vector<256xf32>
    %472 = vector.shape_cast %471 : vector<256xf32> to vector<1x256xf32>
    %473 = arith.andi %440, %468 : vector<1x256xi1>
    %cst_201 = arith.constant 0.000000e+00 : f32
    %474 = vector.broadcast %cst_201 : f32 to vector<1x256xf32>
    %475 = arith.select %473, %472, %474 : vector<1x256xi1>, vector<1x256xf32>
    %c0_202 = arith.constant 0 : index
    %c22 = arith.constant 22 : index
    %c0_203 = arith.constant 0 : index
    %476 = vector.load %arg5[%c0_202, %c22, %c0_203] : memref<1x49x256xf32, #tpu.memory_space<vmem>>, vector<1x1x256xf32>
    %477 = vector.shape_cast %476 : vector<1x1x256xf32> to vector<1x256xf32>
    %478 = vector.shape_cast %475 : vector<1x256xf32> to vector<1x1x256xf32>
    tpu.vector_store %arg5[%c0_202, %c22, %c0_203], %478 {strides = array<i32>} : memref<1x49x256xf32, #tpu.memory_space<vmem>>, vector<1x1x256xf32>,
    %c-1_i32_204 = arith.constant -1 : i32
    %479 = vector.broadcast %c-1_i32_204 : i32 to vector<1x256xi32>
    %480 = arith.addi %5, %479 : vector<1x256xi32>
    %c0_i32_205 = arith.constant 0 : i32
    %481 = vector.broadcast %c0_i32_205 : i32 to vector<1x256xi32>
    %482 = arith.cmpi sge, %480, %481 : vector<1x256xi32>
    %c-1_i32_206 = arith.constant -1 : i32
    %483 = vector.broadcast %c-1_i32_206 : i32 to vector<1x256xi32>
    %484 = arith.addi %5, %483 : vector<1x256xi32>
    %c16_i32_207 = arith.constant 16 : i32
    %485 = vector.broadcast %c16_i32_207 : i32 to vector<1x256xi32>
    %486 = arith.cmpi slt, %484, %485 : vector<1x256xi32>
    %487 = arith.andi %482, %486 : vector<1x256xi1>
    %c1_i32_208 = arith.constant 1 : i32
    %488 = tpu.dynamic_rotate %3 by %c1_i32_208 dim 1 : vector<4x256xf32>, i32 -> vector<4x256xf32>
    %489 = arith.mulf %1, %488 : vector<4x256xf32>
    %cst_209 = arith.constant dense<0.000000e+00> : vector<256xf32>
    %490 = vector.multi_reduction <add>, %489, %cst_209 [0] : vector<4x256xf32> to vector<256xf32>
    %491 = vector.shape_cast %490 : vector<256xf32> to vector<1x256xf32>
    %492 = arith.andi %440, %487 : vector<1x256xi1>
    %cst_210 = arith.constant 0.000000e+00 : f32
    %493 = vector.broadcast %cst_210 : f32 to vector<1x256xf32>
    %494 = arith.select %492, %491, %493 : vector<1x256xi1>, vector<1x256xf32>
    %c0_211 = arith.constant 0 : index
    %c23 = arith.constant 23 : index
    %c0_212 = arith.constant 0 : index
    %495 = vector.load %arg5[%c0_211, %c23, %c0_212] : memref<1x49x256xf32, #tpu.memory_space<vmem>>, vector<1x1x256xf32>
    %496 = vector.shape_cast %495 : vector<1x1x256xf32> to vector<1x256xf32>
    %497 = vector.shape_cast %494 : vector<1x256xf32> to vector<1x1x256xf32>
    tpu.vector_store %arg5[%c0_211, %c23, %c0_212], %497 {strides = array<i32>} : memref<1x49x256xf32, #tpu.memory_space<vmem>>, vector<1x1x256xf32>,
    %c0_i32_213 = arith.constant 0 : i32
    %498 = vector.broadcast %c0_i32_213 : i32 to vector<1x256xi32>
    %499 = arith.addi %5, %498 : vector<1x256xi32>
    %c0_i32_214 = arith.constant 0 : i32
    %500 = vector.broadcast %c0_i32_214 : i32 to vector<1x256xi32>
    %501 = arith.cmpi sge, %499, %500 : vector<1x256xi32>
    %c0_i32_215 = arith.constant 0 : i32
    %502 = vector.broadcast %c0_i32_215 : i32 to vector<1x256xi32>
    %503 = arith.addi %5, %502 : vector<1x256xi32>
    %c16_i32_216 = arith.constant 16 : i32
    %504 = vector.broadcast %c16_i32_216 : i32 to vector<1x256xi32>
    %505 = arith.cmpi slt, %503, %504 : vector<1x256xi32>
    %506 = arith.andi %501, %505 : vector<1x256xi1>
    %507 = arith.mulf %1, %3 : vector<4x256xf32>
    %cst_217 = arith.constant dense<0.000000e+00> : vector<256xf32>
    %508 = vector.multi_reduction <add>, %507, %cst_217 [0] : vector<4x256xf32> to vector<256xf32>
    %509 = vector.shape_cast %508 : vector<256xf32> to vector<1x256xf32>
    %510 = arith.andi %440, %506 : vector<1x256xi1>
    %cst_218 = arith.constant 0.000000e+00 : f32
    %511 = vector.broadcast %cst_218 : f32 to vector<1x256xf32>
    %512 = arith.select %510, %509, %511 : vector<1x256xi1>, vector<1x256xf32>
    %c0_219 = arith.constant 0 : index
    %c24 = arith.constant 24 : index
    %c0_220 = arith.constant 0 : index
    %513 = vector.load %arg5[%c0_219, %c24, %c0_220] : memref<1x49x256xf32, #tpu.memory_space<vmem>>, vector<1x1x256xf32>
    %514 = vector.shape_cast %513 : vector<1x1x256xf32> to vector<1x256xf32>
    %515 = vector.shape_cast %512 : vector<1x256xf32> to vector<1x1x256xf32>
    tpu.vector_store %arg5[%c0_219, %c24, %c0_220], %515 {strides = array<i32>} : memref<1x49x256xf32, #tpu.memory_space<vmem>>, vector<1x1x256xf32>,
    %c1_i32_221 = arith.constant 1 : i32
    %516 = vector.broadcast %c1_i32_221 : i32 to vector<1x256xi32>
    %517 = arith.addi %5, %516 : vector<1x256xi32>
    %c0_i32_222 = arith.constant 0 : i32
    %518 = vector.broadcast %c0_i32_222 : i32 to vector<1x256xi32>
    %519 = arith.cmpi sge, %517, %518 : vector<1x256xi32>
    %c1_i32_223 = arith.constant 1 : i32
    %520 = vector.broadcast %c1_i32_223 : i32 to vector<1x256xi32>
    %521 = arith.addi %5, %520 : vector<1x256xi32>
    %c16_i32_224 = arith.constant 16 : i32
    %522 = vector.broadcast %c16_i32_224 : i32 to vector<1x256xi32>
    %523 = arith.cmpi slt, %521, %522 : vector<1x256xi32>
    %524 = arith.andi %519, %523 : vector<1x256xi1>
    %c255_i32 = arith.constant 255 : i32
    %525 = tpu.dynamic_rotate %3 by %c255_i32 dim 1 : vector<4x256xf32>, i32 -> vector<4x256xf32>
    %526 = arith.mulf %1, %525 : vector<4x256xf32>
    %cst_225 = arith.constant dense<0.000000e+00> : vector<256xf32>
    %527 = vector.multi_reduction <add>, %526, %cst_225 [0] : vector<4x256xf32> to vector<256xf32>
    %528 = vector.shape_cast %527 : vector<256xf32> to vector<1x256xf32>
    %529 = arith.andi %440, %524 : vector<1x256xi1>
    %cst_226 = arith.constant 0.000000e+00 : f32
    %530 = vector.broadcast %cst_226 : f32 to vector<1x256xf32>
    %531 = arith.select %529, %528, %530 : vector<1x256xi1>, vector<1x256xf32>
    %c0_227 = arith.constant 0 : index
    %c25 = arith.constant 25 : index
    %c0_228 = arith.constant 0 : index
    %532 = vector.load %arg5[%c0_227, %c25, %c0_228] : memref<1x49x256xf32, #tpu.memory_space<vmem>>, vector<1x1x256xf32>
    %533 = vector.shape_cast %532 : vector<1x1x256xf32> to vector<1x256xf32>
    %534 = vector.shape_cast %531 : vector<1x256xf32> to vector<1x1x256xf32>
    tpu.vector_store %arg5[%c0_227, %c25, %c0_228], %534 {strides = array<i32>} : memref<1x49x256xf32, #tpu.memory_space<vmem>>, vector<1x1x256xf32>,
    %c2_i32_229 = arith.constant 2 : i32
    %535 = vector.broadcast %c2_i32_229 : i32 to vector<1x256xi32>
    %536 = arith.addi %5, %535 : vector<1x256xi32>
    %c0_i32_230 = arith.constant 0 : i32
    %537 = vector.broadcast %c0_i32_230 : i32 to vector<1x256xi32>
    %538 = arith.cmpi sge, %536, %537 : vector<1x256xi32>
    %c2_i32_231 = arith.constant 2 : i32
    %539 = vector.broadcast %c2_i32_231 : i32 to vector<1x256xi32>
    %540 = arith.addi %5, %539 : vector<1x256xi32>
    %c16_i32_232 = arith.constant 16 : i32
    %541 = vector.broadcast %c16_i32_232 : i32 to vector<1x256xi32>
    %542 = arith.cmpi slt, %540, %541 : vector<1x256xi32>
    %543 = arith.andi %538, %542 : vector<1x256xi1>
    %c254_i32 = arith.constant 254 : i32
    %544 = tpu.dynamic_rotate %3 by %c254_i32 dim 1 : vector<4x256xf32>, i32 -> vector<4x256xf32>
    %545 = arith.mulf %1, %544 : vector<4x256xf32>
    %cst_233 = arith.constant dense<0.000000e+00> : vector<256xf32>
    %546 = vector.multi_reduction <add>, %545, %cst_233 [0] : vector<4x256xf32> to vector<256xf32>
    %547 = vector.shape_cast %546 : vector<256xf32> to vector<1x256xf32>
    %548 = arith.andi %440, %543 : vector<1x256xi1>
    %cst_234 = arith.constant 0.000000e+00 : f32
    %549 = vector.broadcast %cst_234 : f32 to vector<1x256xf32>
    %550 = arith.select %548, %547, %549 : vector<1x256xi1>, vector<1x256xf32>
    %c0_235 = arith.constant 0 : index
    %c26 = arith.constant 26 : index
    %c0_236 = arith.constant 0 : index
    %551 = vector.load %arg5[%c0_235, %c26, %c0_236] : memref<1x49x256xf32, #tpu.memory_space<vmem>>, vector<1x1x256xf32>
    %552 = vector.shape_cast %551 : vector<1x1x256xf32> to vector<1x256xf32>
    %553 = vector.shape_cast %550 : vector<1x256xf32> to vector<1x1x256xf32>
    tpu.vector_store %arg5[%c0_235, %c26, %c0_236], %553 {strides = array<i32>} : memref<1x49x256xf32, #tpu.memory_space<vmem>>, vector<1x1x256xf32>,
    %c3_i32_237 = arith.constant 3 : i32
    %554 = vector.broadcast %c3_i32_237 : i32 to vector<1x256xi32>
    %555 = arith.addi %5, %554 : vector<1x256xi32>
    %c0_i32_238 = arith.constant 0 : i32
    %556 = vector.broadcast %c0_i32_238 : i32 to vector<1x256xi32>
    %557 = arith.cmpi sge, %555, %556 : vector<1x256xi32>
    %c3_i32_239 = arith.constant 3 : i32
    %558 = vector.broadcast %c3_i32_239 : i32 to vector<1x256xi32>
    %559 = arith.addi %5, %558 : vector<1x256xi32>
    %c16_i32_240 = arith.constant 16 : i32
    %560 = vector.broadcast %c16_i32_240 : i32 to vector<1x256xi32>
    %561 = arith.cmpi slt, %559, %560 : vector<1x256xi32>
    %562 = arith.andi %557, %561 : vector<1x256xi1>
    %c253_i32 = arith.constant 253 : i32
    %563 = tpu.dynamic_rotate %3 by %c253_i32 dim 1 : vector<4x256xf32>, i32 -> vector<4x256xf32>
    %564 = arith.mulf %1, %563 : vector<4x256xf32>
    %cst_241 = arith.constant dense<0.000000e+00> : vector<256xf32>
    %565 = vector.multi_reduction <add>, %564, %cst_241 [0] : vector<4x256xf32> to vector<256xf32>
    %566 = vector.shape_cast %565 : vector<256xf32> to vector<1x256xf32>
    %567 = arith.andi %440, %562 : vector<1x256xi1>
    %cst_242 = arith.constant 0.000000e+00 : f32
    %568 = vector.broadcast %cst_242 : f32 to vector<1x256xf32>
    %569 = arith.select %567, %566, %568 : vector<1x256xi1>, vector<1x256xf32>
    %c0_243 = arith.constant 0 : index
    %c27 = arith.constant 27 : index
    %c0_244 = arith.constant 0 : index
    %570 = vector.load %arg5[%c0_243, %c27, %c0_244] : memref<1x49x256xf32, #tpu.memory_space<vmem>>, vector<1x1x256xf32>
    %571 = vector.shape_cast %570 : vector<1x1x256xf32> to vector<1x256xf32>
    %572 = vector.shape_cast %569 : vector<1x256xf32> to vector<1x1x256xf32>
    tpu.vector_store %arg5[%c0_243, %c27, %c0_244], %572 {strides = array<i32>} : memref<1x49x256xf32, #tpu.memory_space<vmem>>, vector<1x1x256xf32>,
    %c1_i32_245 = arith.constant 1 : i32
    %573 = vector.broadcast %c1_i32_245 : i32 to vector<1x256xi32>
    %574 = arith.addi %4, %573 : vector<1x256xi32>
    %c0_i32_246 = arith.constant 0 : i32
    %575 = vector.broadcast %c0_i32_246 : i32 to vector<1x256xi32>
    %576 = arith.cmpi sge, %574, %575 : vector<1x256xi32>
    %c1_i32_247 = arith.constant 1 : i32
    %577 = vector.broadcast %c1_i32_247 : i32 to vector<1x256xi32>
    %578 = arith.addi %4, %577 : vector<1x256xi32>
    %c16_i32_248 = arith.constant 16 : i32
    %579 = vector.broadcast %c16_i32_248 : i32 to vector<1x256xi32>
    %580 = arith.cmpi slt, %578, %579 : vector<1x256xi32>
    %581 = arith.andi %576, %580 : vector<1x256xi1>
    %c-3_i32_249 = arith.constant -3 : i32
    %582 = vector.broadcast %c-3_i32_249 : i32 to vector<1x256xi32>
    %583 = arith.addi %5, %582 : vector<1x256xi32>
    %c0_i32_250 = arith.constant 0 : i32
    %584 = vector.broadcast %c0_i32_250 : i32 to vector<1x256xi32>
    %585 = arith.cmpi sge, %583, %584 : vector<1x256xi32>
    %c-3_i32_251 = arith.constant -3 : i32
    %586 = vector.broadcast %c-3_i32_251 : i32 to vector<1x256xi32>
    %587 = arith.addi %5, %586 : vector<1x256xi32>
    %c16_i32_252 = arith.constant 16 : i32
    %588 = vector.broadcast %c16_i32_252 : i32 to vector<1x256xi32>
    %589 = arith.cmpi slt, %587, %588 : vector<1x256xi32>
    %590 = arith.andi %585, %589 : vector<1x256xi1>
    %c243_i32 = arith.constant 243 : i32
    %591 = tpu.dynamic_rotate %3 by %c243_i32 dim 1 : vector<4x256xf32>, i32 -> vector<4x256xf32>
    %592 = arith.mulf %1, %591 : vector<4x256xf32>
    %cst_253 = arith.constant dense<0.000000e+00> : vector<256xf32>
    %593 = vector.multi_reduction <add>, %592, %cst_253 [0] : vector<4x256xf32> to vector<256xf32>
    %594 = vector.shape_cast %593 : vector<256xf32> to vector<1x256xf32>
    %595 = arith.andi %581, %590 : vector<1x256xi1>
    %cst_254 = arith.constant 0.000000e+00 : f32
    %596 = vector.broadcast %cst_254 : f32 to vector<1x256xf32>
    %597 = arith.select %595, %594, %596 : vector<1x256xi1>, vector<1x256xf32>
    %c0_255 = arith.constant 0 : index
    %c28 = arith.constant 28 : index
    %c0_256 = arith.constant 0 : index
    %598 = vector.load %arg5[%c0_255, %c28, %c0_256] : memref<1x49x256xf32, #tpu.memory_space<vmem>>, vector<1x1x256xf32>
    %599 = vector.shape_cast %598 : vector<1x1x256xf32> to vector<1x256xf32>
    %600 = vector.shape_cast %597 : vector<1x256xf32> to vector<1x1x256xf32>
    tpu.vector_store %arg5[%c0_255, %c28, %c0_256], %600 {strides = array<i32>} : memref<1x49x256xf32, #tpu.memory_space<vmem>>, vector<1x1x256xf32>,
    %c-2_i32_257 = arith.constant -2 : i32
    %601 = vector.broadcast %c-2_i32_257 : i32 to vector<1x256xi32>
    %602 = arith.addi %5, %601 : vector<1x256xi32>
    %c0_i32_258 = arith.constant 0 : i32
    %603 = vector.broadcast %c0_i32_258 : i32 to vector<1x256xi32>
    %604 = arith.cmpi sge, %602, %603 : vector<1x256xi32>
    %c-2_i32_259 = arith.constant -2 : i32
    %605 = vector.broadcast %c-2_i32_259 : i32 to vector<1x256xi32>
    %606 = arith.addi %5, %605 : vector<1x256xi32>
    %c16_i32_260 = arith.constant 16 : i32
    %607 = vector.broadcast %c16_i32_260 : i32 to vector<1x256xi32>
    %608 = arith.cmpi slt, %606, %607 : vector<1x256xi32>
    %609 = arith.andi %604, %608 : vector<1x256xi1>
    %c242_i32 = arith.constant 242 : i32
    %610 = tpu.dynamic_rotate %3 by %c242_i32 dim 1 : vector<4x256xf32>, i32 -> vector<4x256xf32>
    %611 = arith.mulf %1, %610 : vector<4x256xf32>
    %cst_261 = arith.constant dense<0.000000e+00> : vector<256xf32>
    %612 = vector.multi_reduction <add>, %611, %cst_261 [0] : vector<4x256xf32> to vector<256xf32>
    %613 = vector.shape_cast %612 : vector<256xf32> to vector<1x256xf32>
    %614 = arith.andi %581, %609 : vector<1x256xi1>
    %cst_262 = arith.constant 0.000000e+00 : f32
    %615 = vector.broadcast %cst_262 : f32 to vector<1x256xf32>
    %616 = arith.select %614, %613, %615 : vector<1x256xi1>, vector<1x256xf32>
    %c0_263 = arith.constant 0 : index
    %c29 = arith.constant 29 : index
    %c0_264 = arith.constant 0 : index
    %617 = vector.load %arg5[%c0_263, %c29, %c0_264] : memref<1x49x256xf32, #tpu.memory_space<vmem>>, vector<1x1x256xf32>
    %618 = vector.shape_cast %617 : vector<1x1x256xf32> to vector<1x256xf32>
    %619 = vector.shape_cast %616 : vector<1x256xf32> to vector<1x1x256xf32>
    tpu.vector_store %arg5[%c0_263, %c29, %c0_264], %619 {strides = array<i32>} : memref<1x49x256xf32, #tpu.memory_space<vmem>>, vector<1x1x256xf32>,
    %c-1_i32_265 = arith.constant -1 : i32
    %620 = vector.broadcast %c-1_i32_265 : i32 to vector<1x256xi32>
    %621 = arith.addi %5, %620 : vector<1x256xi32>
    %c0_i32_266 = arith.constant 0 : i32
    %622 = vector.broadcast %c0_i32_266 : i32 to vector<1x256xi32>
    %623 = arith.cmpi sge, %621, %622 : vector<1x256xi32>
    %c-1_i32_267 = arith.constant -1 : i32
    %624 = vector.broadcast %c-1_i32_267 : i32 to vector<1x256xi32>
    %625 = arith.addi %5, %624 : vector<1x256xi32>
    %c16_i32_268 = arith.constant 16 : i32
    %626 = vector.broadcast %c16_i32_268 : i32 to vector<1x256xi32>
    %627 = arith.cmpi slt, %625, %626 : vector<1x256xi32>
    %628 = arith.andi %623, %627 : vector<1x256xi1>
    %c241_i32 = arith.constant 241 : i32
    %629 = tpu.dynamic_rotate %3 by %c241_i32 dim 1 : vector<4x256xf32>, i32 -> vector<4x256xf32>
    %630 = arith.mulf %1, %629 : vector<4x256xf32>
    %cst_269 = arith.constant dense<0.000000e+00> : vector<256xf32>
    %631 = vector.multi_reduction <add>, %630, %cst_269 [0] : vector<4x256xf32> to vector<256xf32>
    %632 = vector.shape_cast %631 : vector<256xf32> to vector<1x256xf32>
    %633 = arith.andi %581, %628 : vector<1x256xi1>
    %cst_270 = arith.constant 0.000000e+00 : f32
    %634 = vector.broadcast %cst_270 : f32 to vector<1x256xf32>
    %635 = arith.select %633, %632, %634 : vector<1x256xi1>, vector<1x256xf32>
    %c0_271 = arith.constant 0 : index
    %c30 = arith.constant 30 : index
    %c0_272 = arith.constant 0 : index
    %636 = vector.load %arg5[%c0_271, %c30, %c0_272] : memref<1x49x256xf32, #tpu.memory_space<vmem>>, vector<1x1x256xf32>
    %637 = vector.shape_cast %636 : vector<1x1x256xf32> to vector<1x256xf32>
    %638 = vector.shape_cast %635 : vector<1x256xf32> to vector<1x1x256xf32>
    tpu.vector_store %arg5[%c0_271, %c30, %c0_272], %638 {strides = array<i32>} : memref<1x49x256xf32, #tpu.memory_space<vmem>>, vector<1x1x256xf32>,
    %c0_i32_273 = arith.constant 0 : i32
    %639 = vector.broadcast %c0_i32_273 : i32 to vector<1x256xi32>
    %640 = arith.addi %5, %639 : vector<1x256xi32>
    %c0_i32_274 = arith.constant 0 : i32
    %641 = vector.broadcast %c0_i32_274 : i32 to vector<1x256xi32>
    %642 = arith.cmpi sge, %640, %641 : vector<1x256xi32>
    %c0_i32_275 = arith.constant 0 : i32
    %643 = vector.broadcast %c0_i32_275 : i32 to vector<1x256xi32>
    %644 = arith.addi %5, %643 : vector<1x256xi32>
    %c16_i32_276 = arith.constant 16 : i32
    %645 = vector.broadcast %c16_i32_276 : i32 to vector<1x256xi32>
    %646 = arith.cmpi slt, %644, %645 : vector<1x256xi32>
    %647 = arith.andi %642, %646 : vector<1x256xi1>
    %c240_i32 = arith.constant 240 : i32
    %648 = tpu.dynamic_rotate %3 by %c240_i32 dim 1 : vector<4x256xf32>, i32 -> vector<4x256xf32>
    %649 = arith.mulf %1, %648 : vector<4x256xf32>
    %cst_277 = arith.constant dense<0.000000e+00> : vector<256xf32>
    %650 = vector.multi_reduction <add>, %649, %cst_277 [0] : vector<4x256xf32> to vector<256xf32>
    %651 = vector.shape_cast %650 : vector<256xf32> to vector<1x256xf32>
    %652 = arith.andi %581, %647 : vector<1x256xi1>
    %cst_278 = arith.constant 0.000000e+00 : f32
    %653 = vector.broadcast %cst_278 : f32 to vector<1x256xf32>
    %654 = arith.select %652, %651, %653 : vector<1x256xi1>, vector<1x256xf32>
    %c0_279 = arith.constant 0 : index
    %c31 = arith.constant 31 : index
    %c0_280 = arith.constant 0 : index
    %655 = vector.load %arg5[%c0_279, %c31, %c0_280] : memref<1x49x256xf32, #tpu.memory_space<vmem>>, vector<1x1x256xf32>
    %656 = vector.shape_cast %655 : vector<1x1x256xf32> to vector<1x256xf32>
    %657 = vector.shape_cast %654 : vector<1x256xf32> to vector<1x1x256xf32>
    tpu.vector_store %arg5[%c0_279, %c31, %c0_280], %657 {strides = array<i32>} : memref<1x49x256xf32, #tpu.memory_space<vmem>>, vector<1x1x256xf32>,
    %c1_i32_281 = arith.constant 1 : i32
    %658 = vector.broadcast %c1_i32_281 : i32 to vector<1x256xi32>
    %659 = arith.addi %5, %658 : vector<1x256xi32>
    %c0_i32_282 = arith.constant 0 : i32
    %660 = vector.broadcast %c0_i32_282 : i32 to vector<1x256xi32>
    %661 = arith.cmpi sge, %659, %660 : vector<1x256xi32>
    %c1_i32_283 = arith.constant 1 : i32
    %662 = vector.broadcast %c1_i32_283 : i32 to vector<1x256xi32>
    %663 = arith.addi %5, %662 : vector<1x256xi32>
    %c16_i32_284 = arith.constant 16 : i32
    %664 = vector.broadcast %c16_i32_284 : i32 to vector<1x256xi32>
    %665 = arith.cmpi slt, %663, %664 : vector<1x256xi32>
    %666 = arith.andi %661, %665 : vector<1x256xi1>
    %c239_i32 = arith.constant 239 : i32
    %667 = tpu.dynamic_rotate %3 by %c239_i32 dim 1 : vector<4x256xf32>, i32 -> vector<4x256xf32>
    %668 = arith.mulf %1, %667 : vector<4x256xf32>
    %cst_285 = arith.constant dense<0.000000e+00> : vector<256xf32>
    %669 = vector.multi_reduction <add>, %668, %cst_285 [0] : vector<4x256xf32> to vector<256xf32>
    %670 = vector.shape_cast %669 : vector<256xf32> to vector<1x256xf32>
    %671 = arith.andi %581, %666 : vector<1x256xi1>
    %cst_286 = arith.constant 0.000000e+00 : f32
    %672 = vector.broadcast %cst_286 : f32 to vector<1x256xf32>
    %673 = arith.select %671, %670, %672 : vector<1x256xi1>, vector<1x256xf32>
    %c0_287 = arith.constant 0 : index
    %c32 = arith.constant 32 : index
    %c0_288 = arith.constant 0 : index
    %674 = vector.load %arg5[%c0_287, %c32, %c0_288] : memref<1x49x256xf32, #tpu.memory_space<vmem>>, vector<1x1x256xf32>
    %675 = vector.shape_cast %674 : vector<1x1x256xf32> to vector<1x256xf32>
    %676 = vector.shape_cast %673 : vector<1x256xf32> to vector<1x1x256xf32>
    tpu.vector_store %arg5[%c0_287, %c32, %c0_288], %676 {strides = array<i32>} : memref<1x49x256xf32, #tpu.memory_space<vmem>>, vector<1x1x256xf32>,
    %c2_i32_289 = arith.constant 2 : i32
    %677 = vector.broadcast %c2_i32_289 : i32 to vector<1x256xi32>
    %678 = arith.addi %5, %677 : vector<1x256xi32>
    %c0_i32_290 = arith.constant 0 : i32
    %679 = vector.broadcast %c0_i32_290 : i32 to vector<1x256xi32>
    %680 = arith.cmpi sge, %678, %679 : vector<1x256xi32>
    %c2_i32_291 = arith.constant 2 : i32
    %681 = vector.broadcast %c2_i32_291 : i32 to vector<1x256xi32>
    %682 = arith.addi %5, %681 : vector<1x256xi32>
    %c16_i32_292 = arith.constant 16 : i32
    %683 = vector.broadcast %c16_i32_292 : i32 to vector<1x256xi32>
    %684 = arith.cmpi slt, %682, %683 : vector<1x256xi32>
    %685 = arith.andi %680, %684 : vector<1x256xi1>
    %c238_i32 = arith.constant 238 : i32
    %686 = tpu.dynamic_rotate %3 by %c238_i32 dim 1 : vector<4x256xf32>, i32 -> vector<4x256xf32>
    %687 = arith.mulf %1, %686 : vector<4x256xf32>
    %cst_293 = arith.constant dense<0.000000e+00> : vector<256xf32>
    %688 = vector.multi_reduction <add>, %687, %cst_293 [0] : vector<4x256xf32> to vector<256xf32>
    %689 = vector.shape_cast %688 : vector<256xf32> to vector<1x256xf32>
    %690 = arith.andi %581, %685 : vector<1x256xi1>
    %cst_294 = arith.constant 0.000000e+00 : f32
    %691 = vector.broadcast %cst_294 : f32 to vector<1x256xf32>
    %692 = arith.select %690, %689, %691 : vector<1x256xi1>, vector<1x256xf32>
    %c0_295 = arith.constant 0 : index
    %c33 = arith.constant 33 : index
    %c0_296 = arith.constant 0 : index
    %693 = vector.load %arg5[%c0_295, %c33, %c0_296] : memref<1x49x256xf32, #tpu.memory_space<vmem>>, vector<1x1x256xf32>
    %694 = vector.shape_cast %693 : vector<1x1x256xf32> to vector<1x256xf32>
    %695 = vector.shape_cast %692 : vector<1x256xf32> to vector<1x1x256xf32>
    tpu.vector_store %arg5[%c0_295, %c33, %c0_296], %695 {strides = array<i32>} : memref<1x49x256xf32, #tpu.memory_space<vmem>>, vector<1x1x256xf32>,
    %c3_i32_297 = arith.constant 3 : i32
    %696 = vector.broadcast %c3_i32_297 : i32 to vector<1x256xi32>
    %697 = arith.addi %5, %696 : vector<1x256xi32>
    %c0_i32_298 = arith.constant 0 : i32
    %698 = vector.broadcast %c0_i32_298 : i32 to vector<1x256xi32>
    %699 = arith.cmpi sge, %697, %698 : vector<1x256xi32>
    %c3_i32_299 = arith.constant 3 : i32
    %700 = vector.broadcast %c3_i32_299 : i32 to vector<1x256xi32>
    %701 = arith.addi %5, %700 : vector<1x256xi32>
    %c16_i32_300 = arith.constant 16 : i32
    %702 = vector.broadcast %c16_i32_300 : i32 to vector<1x256xi32>
    %703 = arith.cmpi slt, %701, %702 : vector<1x256xi32>
    %704 = arith.andi %699, %703 : vector<1x256xi1>
    %c237_i32 = arith.constant 237 : i32
    %705 = tpu.dynamic_rotate %3 by %c237_i32 dim 1 : vector<4x256xf32>, i32 -> vector<4x256xf32>
    %706 = arith.mulf %1, %705 : vector<4x256xf32>
    %cst_301 = arith.constant dense<0.000000e+00> : vector<256xf32>
    %707 = vector.multi_reduction <add>, %706, %cst_301 [0] : vector<4x256xf32> to vector<256xf32>
    %708 = vector.shape_cast %707 : vector<256xf32> to vector<1x256xf32>
    %709 = arith.andi %581, %704 : vector<1x256xi1>
    %cst_302 = arith.constant 0.000000e+00 : f32
    %710 = vector.broadcast %cst_302 : f32 to vector<1x256xf32>
    %711 = arith.select %709, %708, %710 : vector<1x256xi1>, vector<1x256xf32>
    %c0_303 = arith.constant 0 : index
    %c34 = arith.constant 34 : index
    %c0_304 = arith.constant 0 : index
    %712 = vector.load %arg5[%c0_303, %c34, %c0_304] : memref<1x49x256xf32, #tpu.memory_space<vmem>>, vector<1x1x256xf32>
    %713 = vector.shape_cast %712 : vector<1x1x256xf32> to vector<1x256xf32>
    %714 = vector.shape_cast %711 : vector<1x256xf32> to vector<1x1x256xf32>
    tpu.vector_store %arg5[%c0_303, %c34, %c0_304], %714 {strides = array<i32>} : memref<1x49x256xf32, #tpu.memory_space<vmem>>, vector<1x1x256xf32>,
    %c2_i32_305 = arith.constant 2 : i32
    %715 = vector.broadcast %c2_i32_305 : i32 to vector<1x256xi32>
    %716 = arith.addi %4, %715 : vector<1x256xi32>
    %c0_i32_306 = arith.constant 0 : i32
    %717 = vector.broadcast %c0_i32_306 : i32 to vector<1x256xi32>
    %718 = arith.cmpi sge, %716, %717 : vector<1x256xi32>
    %c2_i32_307 = arith.constant 2 : i32
    %719 = vector.broadcast %c2_i32_307 : i32 to vector<1x256xi32>
    %720 = arith.addi %4, %719 : vector<1x256xi32>
    %c16_i32_308 = arith.constant 16 : i32
    %721 = vector.broadcast %c16_i32_308 : i32 to vector<1x256xi32>
    %722 = arith.cmpi slt, %720, %721 : vector<1x256xi32>
    %723 = arith.andi %718, %722 : vector<1x256xi1>
    %c-3_i32_309 = arith.constant -3 : i32
    %724 = vector.broadcast %c-3_i32_309 : i32 to vector<1x256xi32>
    %725 = arith.addi %5, %724 : vector<1x256xi32>
    %c0_i32_310 = arith.constant 0 : i32
    %726 = vector.broadcast %c0_i32_310 : i32 to vector<1x256xi32>
    %727 = arith.cmpi sge, %725, %726 : vector<1x256xi32>
    %c-3_i32_311 = arith.constant -3 : i32
    %728 = vector.broadcast %c-3_i32_311 : i32 to vector<1x256xi32>
    %729 = arith.addi %5, %728 : vector<1x256xi32>
    %c16_i32_312 = arith.constant 16 : i32
    %730 = vector.broadcast %c16_i32_312 : i32 to vector<1x256xi32>
    %731 = arith.cmpi slt, %729, %730 : vector<1x256xi32>
    %732 = arith.andi %727, %731 : vector<1x256xi1>
    %c227_i32 = arith.constant 227 : i32
    %733 = tpu.dynamic_rotate %3 by %c227_i32 dim 1 : vector<4x256xf32>, i32 -> vector<4x256xf32>
    %734 = arith.mulf %1, %733 : vector<4x256xf32>
    %cst_313 = arith.constant dense<0.000000e+00> : vector<256xf32>
    %735 = vector.multi_reduction <add>, %734, %cst_313 [0] : vector<4x256xf32> to vector<256xf32>
    %736 = vector.shape_cast %735 : vector<256xf32> to vector<1x256xf32>
    %737 = arith.andi %723, %732 : vector<1x256xi1>
    %cst_314 = arith.constant 0.000000e+00 : f32
    %738 = vector.broadcast %cst_314 : f32 to vector<1x256xf32>
    %739 = arith.select %737, %736, %738 : vector<1x256xi1>, vector<1x256xf32>
    %c0_315 = arith.constant 0 : index
    %c35 = arith.constant 35 : index
    %c0_316 = arith.constant 0 : index
    %740 = vector.load %arg5[%c0_315, %c35, %c0_316] : memref<1x49x256xf32, #tpu.memory_space<vmem>>, vector<1x1x256xf32>
    %741 = vector.shape_cast %740 : vector<1x1x256xf32> to vector<1x256xf32>
    %742 = vector.shape_cast %739 : vector<1x256xf32> to vector<1x1x256xf32>
    tpu.vector_store %arg5[%c0_315, %c35, %c0_316], %742 {strides = array<i32>} : memref<1x49x256xf32, #tpu.memory_space<vmem>>, vector<1x1x256xf32>,
    %c-2_i32_317 = arith.constant -2 : i32
    %743 = vector.broadcast %c-2_i32_317 : i32 to vector<1x256xi32>
    %744 = arith.addi %5, %743 : vector<1x256xi32>
    %c0_i32_318 = arith.constant 0 : i32
    %745 = vector.broadcast %c0_i32_318 : i32 to vector<1x256xi32>
    %746 = arith.cmpi sge, %744, %745 : vector<1x256xi32>
    %c-2_i32_319 = arith.constant -2 : i32
    %747 = vector.broadcast %c-2_i32_319 : i32 to vector<1x256xi32>
    %748 = arith.addi %5, %747 : vector<1x256xi32>
    %c16_i32_320 = arith.constant 16 : i32
    %749 = vector.broadcast %c16_i32_320 : i32 to vector<1x256xi32>
    %750 = arith.cmpi slt, %748, %749 : vector<1x256xi32>
    %751 = arith.andi %746, %750 : vector<1x256xi1>
    %c226_i32 = arith.constant 226 : i32
    %752 = tpu.dynamic_rotate %3 by %c226_i32 dim 1 : vector<4x256xf32>, i32 -> vector<4x256xf32>
    %753 = arith.mulf %1, %752 : vector<4x256xf32>
    %cst_321 = arith.constant dense<0.000000e+00> : vector<256xf32>
    %754 = vector.multi_reduction <add>, %753, %cst_321 [0] : vector<4x256xf32> to vector<256xf32>
    %755 = vector.shape_cast %754 : vector<256xf32> to vector<1x256xf32>
    %756 = arith.andi %723, %751 : vector<1x256xi1>
    %cst_322 = arith.constant 0.000000e+00 : f32
    %757 = vector.broadcast %cst_322 : f32 to vector<1x256xf32>
    %758 = arith.select %756, %755, %757 : vector<1x256xi1>, vector<1x256xf32>
    %c0_323 = arith.constant 0 : index
    %c36 = arith.constant 36 : index
    %c0_324 = arith.constant 0 : index
    %759 = vector.load %arg5[%c0_323, %c36, %c0_324] : memref<1x49x256xf32, #tpu.memory_space<vmem>>, vector<1x1x256xf32>
    %760 = vector.shape_cast %759 : vector<1x1x256xf32> to vector<1x256xf32>
    %761 = vector.shape_cast %758 : vector<1x256xf32> to vector<1x1x256xf32>
    tpu.vector_store %arg5[%c0_323, %c36, %c0_324], %761 {strides = array<i32>} : memref<1x49x256xf32, #tpu.memory_space<vmem>>, vector<1x1x256xf32>,
    %c-1_i32_325 = arith.constant -1 : i32
    %762 = vector.broadcast %c-1_i32_325 : i32 to vector<1x256xi32>
    %763 = arith.addi %5, %762 : vector<1x256xi32>
    %c0_i32_326 = arith.constant 0 : i32
    %764 = vector.broadcast %c0_i32_326 : i32 to vector<1x256xi32>
    %765 = arith.cmpi sge, %763, %764 : vector<1x256xi32>
    %c-1_i32_327 = arith.constant -1 : i32
    %766 = vector.broadcast %c-1_i32_327 : i32 to vector<1x256xi32>
    %767 = arith.addi %5, %766 : vector<1x256xi32>
    %c16_i32_328 = arith.constant 16 : i32
    %768 = vector.broadcast %c16_i32_328 : i32 to vector<1x256xi32>
    %769 = arith.cmpi slt, %767, %768 : vector<1x256xi32>
    %770 = arith.andi %765, %769 : vector<1x256xi1>
    %c225_i32 = arith.constant 225 : i32
    %771 = tpu.dynamic_rotate %3 by %c225_i32 dim 1 : vector<4x256xf32>, i32 -> vector<4x256xf32>
    %772 = arith.mulf %1, %771 : vector<4x256xf32>
    %cst_329 = arith.constant dense<0.000000e+00> : vector<256xf32>
    %773 = vector.multi_reduction <add>, %772, %cst_329 [0] : vector<4x256xf32> to vector<256xf32>
    %774 = vector.shape_cast %773 : vector<256xf32> to vector<1x256xf32>
    %775 = arith.andi %723, %770 : vector<1x256xi1>
    %cst_330 = arith.constant 0.000000e+00 : f32
    %776 = vector.broadcast %cst_330 : f32 to vector<1x256xf32>
    %777 = arith.select %775, %774, %776 : vector<1x256xi1>, vector<1x256xf32>
    %c0_331 = arith.constant 0 : index
    %c37 = arith.constant 37 : index
    %c0_332 = arith.constant 0 : index
    %778 = vector.load %arg5[%c0_331, %c37, %c0_332] : memref<1x49x256xf32, #tpu.memory_space<vmem>>, vector<1x1x256xf32>
    %779 = vector.shape_cast %778 : vector<1x1x256xf32> to vector<1x256xf32>
    %780 = vector.shape_cast %777 : vector<1x256xf32> to vector<1x1x256xf32>
    tpu.vector_store %arg5[%c0_331, %c37, %c0_332], %780 {strides = array<i32>} : memref<1x49x256xf32, #tpu.memory_space<vmem>>, vector<1x1x256xf32>,
    %c0_i32_333 = arith.constant 0 : i32
    %781 = vector.broadcast %c0_i32_333 : i32 to vector<1x256xi32>
    %782 = arith.addi %5, %781 : vector<1x256xi32>
    %c0_i32_334 = arith.constant 0 : i32
    %783 = vector.broadcast %c0_i32_334 : i32 to vector<1x256xi32>
    %784 = arith.cmpi sge, %782, %783 : vector<1x256xi32>
    %c0_i32_335 = arith.constant 0 : i32
    %785 = vector.broadcast %c0_i32_335 : i32 to vector<1x256xi32>
    %786 = arith.addi %5, %785 : vector<1x256xi32>
    %c16_i32_336 = arith.constant 16 : i32
    %787 = vector.broadcast %c16_i32_336 : i32 to vector<1x256xi32>
    %788 = arith.cmpi slt, %786, %787 : vector<1x256xi32>
    %789 = arith.andi %784, %788 : vector<1x256xi1>
    %c224_i32 = arith.constant 224 : i32
    %790 = tpu.dynamic_rotate %3 by %c224_i32 dim 1 : vector<4x256xf32>, i32 -> vector<4x256xf32>
    %791 = arith.mulf %1, %790 : vector<4x256xf32>
    %cst_337 = arith.constant dense<0.000000e+00> : vector<256xf32>
    %792 = vector.multi_reduction <add>, %791, %cst_337 [0] : vector<4x256xf32> to vector<256xf32>
    %793 = vector.shape_cast %792 : vector<256xf32> to vector<1x256xf32>
    %794 = arith.andi %723, %789 : vector<1x256xi1>
    %cst_338 = arith.constant 0.000000e+00 : f32
    %795 = vector.broadcast %cst_338 : f32 to vector<1x256xf32>
    %796 = arith.select %794, %793, %795 : vector<1x256xi1>, vector<1x256xf32>
    %c0_339 = arith.constant 0 : index
    %c38 = arith.constant 38 : index
    %c0_340 = arith.constant 0 : index
    %797 = vector.load %arg5[%c0_339, %c38, %c0_340] : memref<1x49x256xf32, #tpu.memory_space<vmem>>, vector<1x1x256xf32>
    %798 = vector.shape_cast %797 : vector<1x1x256xf32> to vector<1x256xf32>
    %799 = vector.shape_cast %796 : vector<1x256xf32> to vector<1x1x256xf32>
    tpu.vector_store %arg5[%c0_339, %c38, %c0_340], %799 {strides = array<i32>} : memref<1x49x256xf32, #tpu.memory_space<vmem>>, vector<1x1x256xf32>,
    %c1_i32_341 = arith.constant 1 : i32
    %800 = vector.broadcast %c1_i32_341 : i32 to vector<1x256xi32>
    %801 = arith.addi %5, %800 : vector<1x256xi32>
    %c0_i32_342 = arith.constant 0 : i32
    %802 = vector.broadcast %c0_i32_342 : i32 to vector<1x256xi32>
    %803 = arith.cmpi sge, %801, %802 : vector<1x256xi32>
    %c1_i32_343 = arith.constant 1 : i32
    %804 = vector.broadcast %c1_i32_343 : i32 to vector<1x256xi32>
    %805 = arith.addi %5, %804 : vector<1x256xi32>
    %c16_i32_344 = arith.constant 16 : i32
    %806 = vector.broadcast %c16_i32_344 : i32 to vector<1x256xi32>
    %807 = arith.cmpi slt, %805, %806 : vector<1x256xi32>
    %808 = arith.andi %803, %807 : vector<1x256xi1>
    %c223_i32 = arith.constant 223 : i32
    %809 = tpu.dynamic_rotate %3 by %c223_i32 dim 1 : vector<4x256xf32>, i32 -> vector<4x256xf32>
    %810 = arith.mulf %1, %809 : vector<4x256xf32>
    %cst_345 = arith.constant dense<0.000000e+00> : vector<256xf32>
    %811 = vector.multi_reduction <add>, %810, %cst_345 [0] : vector<4x256xf32> to vector<256xf32>
    %812 = vector.shape_cast %811 : vector<256xf32> to vector<1x256xf32>
    %813 = arith.andi %723, %808 : vector<1x256xi1>
    %cst_346 = arith.constant 0.000000e+00 : f32
    %814 = vector.broadcast %cst_346 : f32 to vector<1x256xf32>
    %815 = arith.select %813, %812, %814 : vector<1x256xi1>, vector<1x256xf32>
    %c0_347 = arith.constant 0 : index
    %c39 = arith.constant 39 : index
    %c0_348 = arith.constant 0 : index
    %816 = vector.load %arg5[%c0_347, %c39, %c0_348] : memref<1x49x256xf32, #tpu.memory_space<vmem>>, vector<1x1x256xf32>
    %817 = vector.shape_cast %816 : vector<1x1x256xf32> to vector<1x256xf32>
    %818 = vector.shape_cast %815 : vector<1x256xf32> to vector<1x1x256xf32>
    tpu.vector_store %arg5[%c0_347, %c39, %c0_348], %818 {strides = array<i32>} : memref<1x49x256xf32, #tpu.memory_space<vmem>>, vector<1x1x256xf32>,
    %c2_i32_349 = arith.constant 2 : i32
    %819 = vector.broadcast %c2_i32_349 : i32 to vector<1x256xi32>
    %820 = arith.addi %5, %819 : vector<1x256xi32>
    %c0_i32_350 = arith.constant 0 : i32
    %821 = vector.broadcast %c0_i32_350 : i32 to vector<1x256xi32>
    %822 = arith.cmpi sge, %820, %821 : vector<1x256xi32>
    %c2_i32_351 = arith.constant 2 : i32
    %823 = vector.broadcast %c2_i32_351 : i32 to vector<1x256xi32>
    %824 = arith.addi %5, %823 : vector<1x256xi32>
    %c16_i32_352 = arith.constant 16 : i32
    %825 = vector.broadcast %c16_i32_352 : i32 to vector<1x256xi32>
    %826 = arith.cmpi slt, %824, %825 : vector<1x256xi32>
    %827 = arith.andi %822, %826 : vector<1x256xi1>
    %c222_i32 = arith.constant 222 : i32
    %828 = tpu.dynamic_rotate %3 by %c222_i32 dim 1 : vector<4x256xf32>, i32 -> vector<4x256xf32>
    %829 = arith.mulf %1, %828 : vector<4x256xf32>
    %cst_353 = arith.constant dense<0.000000e+00> : vector<256xf32>
    %830 = vector.multi_reduction <add>, %829, %cst_353 [0] : vector<4x256xf32> to vector<256xf32>
    %831 = vector.shape_cast %830 : vector<256xf32> to vector<1x256xf32>
    %832 = arith.andi %723, %827 : vector<1x256xi1>
    %cst_354 = arith.constant 0.000000e+00 : f32
    %833 = vector.broadcast %cst_354 : f32 to vector<1x256xf32>
    %834 = arith.select %832, %831, %833 : vector<1x256xi1>, vector<1x256xf32>
    %c0_355 = arith.constant 0 : index
    %c40 = arith.constant 40 : index
    %c0_356 = arith.constant 0 : index
    %835 = vector.load %arg5[%c0_355, %c40, %c0_356] : memref<1x49x256xf32, #tpu.memory_space<vmem>>, vector<1x1x256xf32>
    %836 = vector.shape_cast %835 : vector<1x1x256xf32> to vector<1x256xf32>
    %837 = vector.shape_cast %834 : vector<1x256xf32> to vector<1x1x256xf32>
    tpu.vector_store %arg5[%c0_355, %c40, %c0_356], %837 {strides = array<i32>} : memref<1x49x256xf32, #tpu.memory_space<vmem>>, vector<1x1x256xf32>,
    %c3_i32_357 = arith.constant 3 : i32
    %838 = vector.broadcast %c3_i32_357 : i32 to vector<1x256xi32>
    %839 = arith.addi %5, %838 : vector<1x256xi32>
    %c0_i32_358 = arith.constant 0 : i32
    %840 = vector.broadcast %c0_i32_358 : i32 to vector<1x256xi32>
    %841 = arith.cmpi sge, %839, %840 : vector<1x256xi32>
    %c3_i32_359 = arith.constant 3 : i32
    %842 = vector.broadcast %c3_i32_359 : i32 to vector<1x256xi32>
    %843 = arith.addi %5, %842 : vector<1x256xi32>
    %c16_i32_360 = arith.constant 16 : i32
    %844 = vector.broadcast %c16_i32_360 : i32 to vector<1x256xi32>
    %845 = arith.cmpi slt, %843, %844 : vector<1x256xi32>
    %846 = arith.andi %841, %845 : vector<1x256xi1>
    %c221_i32 = arith.constant 221 : i32
    %847 = tpu.dynamic_rotate %3 by %c221_i32 dim 1 : vector<4x256xf32>, i32 -> vector<4x256xf32>
    %848 = arith.mulf %1, %847 : vector<4x256xf32>
    %cst_361 = arith.constant dense<0.000000e+00> : vector<256xf32>
    %849 = vector.multi_reduction <add>, %848, %cst_361 [0] : vector<4x256xf32> to vector<256xf32>
    %850 = vector.shape_cast %849 : vector<256xf32> to vector<1x256xf32>
    %851 = arith.andi %723, %846 : vector<1x256xi1>
    %cst_362 = arith.constant 0.000000e+00 : f32
    %852 = vector.broadcast %cst_362 : f32 to vector<1x256xf32>
    %853 = arith.select %851, %850, %852 : vector<1x256xi1>, vector<1x256xf32>
    %c0_363 = arith.constant 0 : index
    %c41 = arith.constant 41 : index
    %c0_364 = arith.constant 0 : index
    %854 = vector.load %arg5[%c0_363, %c41, %c0_364] : memref<1x49x256xf32, #tpu.memory_space<vmem>>, vector<1x1x256xf32>
    %855 = vector.shape_cast %854 : vector<1x1x256xf32> to vector<1x256xf32>
    %856 = vector.shape_cast %853 : vector<1x256xf32> to vector<1x1x256xf32>
    tpu.vector_store %arg5[%c0_363, %c41, %c0_364], %856 {strides = array<i32>} : memref<1x49x256xf32, #tpu.memory_space<vmem>>, vector<1x1x256xf32>,
    %c3_i32_365 = arith.constant 3 : i32
    %857 = vector.broadcast %c3_i32_365 : i32 to vector<1x256xi32>
    %858 = arith.addi %4, %857 : vector<1x256xi32>
    %c0_i32_366 = arith.constant 0 : i32
    %859 = vector.broadcast %c0_i32_366 : i32 to vector<1x256xi32>
    %860 = arith.cmpi sge, %858, %859 : vector<1x256xi32>
    %c3_i32_367 = arith.constant 3 : i32
    %861 = vector.broadcast %c3_i32_367 : i32 to vector<1x256xi32>
    %862 = arith.addi %4, %861 : vector<1x256xi32>
    %c16_i32_368 = arith.constant 16 : i32
    %863 = vector.broadcast %c16_i32_368 : i32 to vector<1x256xi32>
    %864 = arith.cmpi slt, %862, %863 : vector<1x256xi32>
    %865 = arith.andi %860, %864 : vector<1x256xi1>
    %c-3_i32_369 = arith.constant -3 : i32
    %866 = vector.broadcast %c-3_i32_369 : i32 to vector<1x256xi32>
    %867 = arith.addi %5, %866 : vector<1x256xi32>
    %c0_i32_370 = arith.constant 0 : i32
    %868 = vector.broadcast %c0_i32_370 : i32 to vector<1x256xi32>
    %869 = arith.cmpi sge, %867, %868 : vector<1x256xi32>
    %c-3_i32_371 = arith.constant -3 : i32
    %870 = vector.broadcast %c-3_i32_371 : i32 to vector<1x256xi32>
    %871 = arith.addi %5, %870 : vector<1x256xi32>
    %c16_i32_372 = arith.constant 16 : i32
    %872 = vector.broadcast %c16_i32_372 : i32 to vector<1x256xi32>
    %873 = arith.cmpi slt, %871, %872 : vector<1x256xi32>
    %874 = arith.andi %869, %873 : vector<1x256xi1>
    %c211_i32 = arith.constant 211 : i32
    %875 = tpu.dynamic_rotate %3 by %c211_i32 dim 1 : vector<4x256xf32>, i32 -> vector<4x256xf32>
    %876 = arith.mulf %1, %875 : vector<4x256xf32>
    %cst_373 = arith.constant dense<0.000000e+00> : vector<256xf32>
    %877 = vector.multi_reduction <add>, %876, %cst_373 [0] : vector<4x256xf32> to vector<256xf32>
    %878 = vector.shape_cast %877 : vector<256xf32> to vector<1x256xf32>
    %879 = arith.andi %865, %874 : vector<1x256xi1>
    %cst_374 = arith.constant 0.000000e+00 : f32
    %880 = vector.broadcast %cst_374 : f32 to vector<1x256xf32>
    %881 = arith.select %879, %878, %880 : vector<1x256xi1>, vector<1x256xf32>
    %c0_375 = arith.constant 0 : index
    %c42 = arith.constant 42 : index
    %c0_376 = arith.constant 0 : index
    %882 = vector.load %arg5[%c0_375, %c42, %c0_376] : memref<1x49x256xf32, #tpu.memory_space<vmem>>, vector<1x1x256xf32>
    %883 = vector.shape_cast %882 : vector<1x1x256xf32> to vector<1x256xf32>
    %884 = vector.shape_cast %881 : vector<1x256xf32> to vector<1x1x256xf32>
    tpu.vector_store %arg5[%c0_375, %c42, %c0_376], %884 {strides = array<i32>} : memref<1x49x256xf32, #tpu.memory_space<vmem>>, vector<1x1x256xf32>,
    %c-2_i32_377 = arith.constant -2 : i32
    %885 = vector.broadcast %c-2_i32_377 : i32 to vector<1x256xi32>
    %886 = arith.addi %5, %885 : vector<1x256xi32>
    %c0_i32_378 = arith.constant 0 : i32
    %887 = vector.broadcast %c0_i32_378 : i32 to vector<1x256xi32>
    %888 = arith.cmpi sge, %886, %887 : vector<1x256xi32>
    %c-2_i32_379 = arith.constant -2 : i32
    %889 = vector.broadcast %c-2_i32_379 : i32 to vector<1x256xi32>
    %890 = arith.addi %5, %889 : vector<1x256xi32>
    %c16_i32_380 = arith.constant 16 : i32
    %891 = vector.broadcast %c16_i32_380 : i32 to vector<1x256xi32>
    %892 = arith.cmpi slt, %890, %891 : vector<1x256xi32>
    %893 = arith.andi %888, %892 : vector<1x256xi1>
    %c210_i32 = arith.constant 210 : i32
    %894 = tpu.dynamic_rotate %3 by %c210_i32 dim 1 : vector<4x256xf32>, i32 -> vector<4x256xf32>
    %895 = arith.mulf %1, %894 : vector<4x256xf32>
    %cst_381 = arith.constant dense<0.000000e+00> : vector<256xf32>
    %896 = vector.multi_reduction <add>, %895, %cst_381 [0] : vector<4x256xf32> to vector<256xf32>
    %897 = vector.shape_cast %896 : vector<256xf32> to vector<1x256xf32>
    %898 = arith.andi %865, %893 : vector<1x256xi1>
    %cst_382 = arith.constant 0.000000e+00 : f32
    %899 = vector.broadcast %cst_382 : f32 to vector<1x256xf32>
    %900 = arith.select %898, %897, %899 : vector<1x256xi1>, vector<1x256xf32>
    %c0_383 = arith.constant 0 : index
    %c43 = arith.constant 43 : index
    %c0_384 = arith.constant 0 : index
    %901 = vector.load %arg5[%c0_383, %c43, %c0_384] : memref<1x49x256xf32, #tpu.memory_space<vmem>>, vector<1x1x256xf32>
    %902 = vector.shape_cast %901 : vector<1x1x256xf32> to vector<1x256xf32>
    %903 = vector.shape_cast %900 : vector<1x256xf32> to vector<1x1x256xf32>
    tpu.vector_store %arg5[%c0_383, %c43, %c0_384], %903 {strides = array<i32>} : memref<1x49x256xf32, #tpu.memory_space<vmem>>, vector<1x1x256xf32>,
    %c-1_i32_385 = arith.constant -1 : i32
    %904 = vector.broadcast %c-1_i32_385 : i32 to vector<1x256xi32>
    %905 = arith.addi %5, %904 : vector<1x256xi32>
    %c0_i32_386 = arith.constant 0 : i32
    %906 = vector.broadcast %c0_i32_386 : i32 to vector<1x256xi32>
    %907 = arith.cmpi sge, %905, %906 : vector<1x256xi32>
    %c-1_i32_387 = arith.constant -1 : i32
    %908 = vector.broadcast %c-1_i32_387 : i32 to vector<1x256xi32>
    %909 = arith.addi %5, %908 : vector<1x256xi32>
    %c16_i32_388 = arith.constant 16 : i32
    %910 = vector.broadcast %c16_i32_388 : i32 to vector<1x256xi32>
    %911 = arith.cmpi slt, %909, %910 : vector<1x256xi32>
    %912 = arith.andi %907, %911 : vector<1x256xi1>
    %c209_i32 = arith.constant 209 : i32
    %913 = tpu.dynamic_rotate %3 by %c209_i32 dim 1 : vector<4x256xf32>, i32 -> vector<4x256xf32>
    %914 = arith.mulf %1, %913 : vector<4x256xf32>
    %cst_389 = arith.constant dense<0.000000e+00> : vector<256xf32>
    %915 = vector.multi_reduction <add>, %914, %cst_389 [0] : vector<4x256xf32> to vector<256xf32>
    %916 = vector.shape_cast %915 : vector<256xf32> to vector<1x256xf32>
    %917 = arith.andi %865, %912 : vector<1x256xi1>
    %cst_390 = arith.constant 0.000000e+00 : f32
    %918 = vector.broadcast %cst_390 : f32 to vector<1x256xf32>
    %919 = arith.select %917, %916, %918 : vector<1x256xi1>, vector<1x256xf32>
    %c0_391 = arith.constant 0 : index
    %c44 = arith.constant 44 : index
    %c0_392 = arith.constant 0 : index
    %920 = vector.load %arg5[%c0_391, %c44, %c0_392] : memref<1x49x256xf32, #tpu.memory_space<vmem>>, vector<1x1x256xf32>
    %921 = vector.shape_cast %920 : vector<1x1x256xf32> to vector<1x256xf32>
    %922 = vector.shape_cast %919 : vector<1x256xf32> to vector<1x1x256xf32>
    tpu.vector_store %arg5[%c0_391, %c44, %c0_392], %922 {strides = array<i32>} : memref<1x49x256xf32, #tpu.memory_space<vmem>>, vector<1x1x256xf32>,
    %c0_i32_393 = arith.constant 0 : i32
    %923 = vector.broadcast %c0_i32_393 : i32 to vector<1x256xi32>
    %924 = arith.addi %5, %923 : vector<1x256xi32>
    %c0_i32_394 = arith.constant 0 : i32
    %925 = vector.broadcast %c0_i32_394 : i32 to vector<1x256xi32>
    %926 = arith.cmpi sge, %924, %925 : vector<1x256xi32>
    %c0_i32_395 = arith.constant 0 : i32
    %927 = vector.broadcast %c0_i32_395 : i32 to vector<1x256xi32>
    %928 = arith.addi %5, %927 : vector<1x256xi32>
    %c16_i32_396 = arith.constant 16 : i32
    %929 = vector.broadcast %c16_i32_396 : i32 to vector<1x256xi32>
    %930 = arith.cmpi slt, %928, %929 : vector<1x256xi32>
    %931 = arith.andi %926, %930 : vector<1x256xi1>
    %c208_i32 = arith.constant 208 : i32
    %932 = tpu.dynamic_rotate %3 by %c208_i32 dim 1 : vector<4x256xf32>, i32 -> vector<4x256xf32>
    %933 = arith.mulf %1, %932 : vector<4x256xf32>
    %cst_397 = arith.constant dense<0.000000e+00> : vector<256xf32>
    %934 = vector.multi_reduction <add>, %933, %cst_397 [0] : vector<4x256xf32> to vector<256xf32>
    %935 = vector.shape_cast %934 : vector<256xf32> to vector<1x256xf32>
    %936 = arith.andi %865, %931 : vector<1x256xi1>
    %cst_398 = arith.constant 0.000000e+00 : f32
    %937 = vector.broadcast %cst_398 : f32 to vector<1x256xf32>
    %938 = arith.select %936, %935, %937 : vector<1x256xi1>, vector<1x256xf32>
    %c0_399 = arith.constant 0 : index
    %c45 = arith.constant 45 : index
    %c0_400 = arith.constant 0 : index
    %939 = vector.load %arg5[%c0_399, %c45, %c0_400] : memref<1x49x256xf32, #tpu.memory_space<vmem>>, vector<1x1x256xf32>
    %940 = vector.shape_cast %939 : vector<1x1x256xf32> to vector<1x256xf32>
    %941 = vector.shape_cast %938 : vector<1x256xf32> to vector<1x1x256xf32>
    tpu.vector_store %arg5[%c0_399, %c45, %c0_400], %941 {strides = array<i32>} : memref<1x49x256xf32, #tpu.memory_space<vmem>>, vector<1x1x256xf32>,
    %c1_i32_401 = arith.constant 1 : i32
    %942 = vector.broadcast %c1_i32_401 : i32 to vector<1x256xi32>
    %943 = arith.addi %5, %942 : vector<1x256xi32>
    %c0_i32_402 = arith.constant 0 : i32
    %944 = vector.broadcast %c0_i32_402 : i32 to vector<1x256xi32>
    %945 = arith.cmpi sge, %943, %944 : vector<1x256xi32>
    %c1_i32_403 = arith.constant 1 : i32
    %946 = vector.broadcast %c1_i32_403 : i32 to vector<1x256xi32>
    %947 = arith.addi %5, %946 : vector<1x256xi32>
    %c16_i32_404 = arith.constant 16 : i32
    %948 = vector.broadcast %c16_i32_404 : i32 to vector<1x256xi32>
    %949 = arith.cmpi slt, %947, %948 : vector<1x256xi32>
    %950 = arith.andi %945, %949 : vector<1x256xi1>
    %c207_i32 = arith.constant 207 : i32
    %951 = tpu.dynamic_rotate %3 by %c207_i32 dim 1 : vector<4x256xf32>, i32 -> vector<4x256xf32>
    %952 = arith.mulf %1, %951 : vector<4x256xf32>
    %cst_405 = arith.constant dense<0.000000e+00> : vector<256xf32>
    %953 = vector.multi_reduction <add>, %952, %cst_405 [0] : vector<4x256xf32> to vector<256xf32>
    %954 = vector.shape_cast %953 : vector<256xf32> to vector<1x256xf32>
    %955 = arith.andi %865, %950 : vector<1x256xi1>
    %cst_406 = arith.constant 0.000000e+00 : f32
    %956 = vector.broadcast %cst_406 : f32 to vector<1x256xf32>
    %957 = arith.select %955, %954, %956 : vector<1x256xi1>, vector<1x256xf32>
    %c0_407 = arith.constant 0 : index
    %c46 = arith.constant 46 : index
    %c0_408 = arith.constant 0 : index
    %958 = vector.load %arg5[%c0_407, %c46, %c0_408] : memref<1x49x256xf32, #tpu.memory_space<vmem>>, vector<1x1x256xf32>
    %959 = vector.shape_cast %958 : vector<1x1x256xf32> to vector<1x256xf32>
    %960 = vector.shape_cast %957 : vector<1x256xf32> to vector<1x1x256xf32>
    tpu.vector_store %arg5[%c0_407, %c46, %c0_408], %960 {strides = array<i32>} : memref<1x49x256xf32, #tpu.memory_space<vmem>>, vector<1x1x256xf32>,
    %c2_i32_409 = arith.constant 2 : i32
    %961 = vector.broadcast %c2_i32_409 : i32 to vector<1x256xi32>
    %962 = arith.addi %5, %961 : vector<1x256xi32>
    %c0_i32_410 = arith.constant 0 : i32
    %963 = vector.broadcast %c0_i32_410 : i32 to vector<1x256xi32>
    %964 = arith.cmpi sge, %962, %963 : vector<1x256xi32>
    %c2_i32_411 = arith.constant 2 : i32
    %965 = vector.broadcast %c2_i32_411 : i32 to vector<1x256xi32>
    %966 = arith.addi %5, %965 : vector<1x256xi32>
    %c16_i32_412 = arith.constant 16 : i32
    %967 = vector.broadcast %c16_i32_412 : i32 to vector<1x256xi32>
    %968 = arith.cmpi slt, %966, %967 : vector<1x256xi32>
    %969 = arith.andi %964, %968 : vector<1x256xi1>
    %c206_i32 = arith.constant 206 : i32
    %970 = tpu.dynamic_rotate %3 by %c206_i32 dim 1 : vector<4x256xf32>, i32 -> vector<4x256xf32>
    %971 = arith.mulf %1, %970 : vector<4x256xf32>
    %cst_413 = arith.constant dense<0.000000e+00> : vector<256xf32>
    %972 = vector.multi_reduction <add>, %971, %cst_413 [0] : vector<4x256xf32> to vector<256xf32>
    %973 = vector.shape_cast %972 : vector<256xf32> to vector<1x256xf32>
    %974 = arith.andi %865, %969 : vector<1x256xi1>
    %cst_414 = arith.constant 0.000000e+00 : f32
    %975 = vector.broadcast %cst_414 : f32 to vector<1x256xf32>
    %976 = arith.select %974, %973, %975 : vector<1x256xi1>, vector<1x256xf32>
    %c0_415 = arith.constant 0 : index
    %c47 = arith.constant 47 : index
    %c0_416 = arith.constant 0 : index
    %977 = vector.load %arg5[%c0_415, %c47, %c0_416] : memref<1x49x256xf32, #tpu.memory_space<vmem>>, vector<1x1x256xf32>
    %978 = vector.shape_cast %977 : vector<1x1x256xf32> to vector<1x256xf32>
    %979 = vector.shape_cast %976 : vector<1x256xf32> to vector<1x1x256xf32>
    tpu.vector_store %arg5[%c0_415, %c47, %c0_416], %979 {strides = array<i32>} : memref<1x49x256xf32, #tpu.memory_space<vmem>>, vector<1x1x256xf32>,
    %c3_i32_417 = arith.constant 3 : i32
    %980 = vector.broadcast %c3_i32_417 : i32 to vector<1x256xi32>
    %981 = arith.addi %5, %980 : vector<1x256xi32>
    %c0_i32_418 = arith.constant 0 : i32
    %982 = vector.broadcast %c0_i32_418 : i32 to vector<1x256xi32>
    %983 = arith.cmpi sge, %981, %982 : vector<1x256xi32>
    %c3_i32_419 = arith.constant 3 : i32
    %984 = vector.broadcast %c3_i32_419 : i32 to vector<1x256xi32>
    %985 = arith.addi %5, %984 : vector<1x256xi32>
    %c16_i32_420 = arith.constant 16 : i32
    %986 = vector.broadcast %c16_i32_420 : i32 to vector<1x256xi32>
    %987 = arith.cmpi slt, %985, %986 : vector<1x256xi32>
    %988 = arith.andi %983, %987 : vector<1x256xi1>
    %c205_i32 = arith.constant 205 : i32
    %989 = tpu.dynamic_rotate %3 by %c205_i32 dim 1 : vector<4x256xf32>, i32 -> vector<4x256xf32>
    %990 = arith.mulf %1, %989 : vector<4x256xf32>
    %cst_421 = arith.constant dense<0.000000e+00> : vector<256xf32>
    %991 = vector.multi_reduction <add>, %990, %cst_421 [0] : vector<4x256xf32> to vector<256xf32>
    %992 = vector.shape_cast %991 : vector<256xf32> to vector<1x256xf32>
    %993 = arith.andi %865, %988 : vector<1x256xi1>
    %cst_422 = arith.constant 0.000000e+00 : f32
    %994 = vector.broadcast %cst_422 : f32 to vector<1x256xf32>
    %995 = arith.select %993, %992, %994 : vector<1x256xi1>, vector<1x256xf32>
    %c0_423 = arith.constant 0 : index
    %c48 = arith.constant 48 : index
    %c0_424 = arith.constant 0 : index
    %996 = vector.load %arg5[%c0_423, %c48, %c0_424] : memref<1x49x256xf32, #tpu.memory_space<vmem>>, vector<1x1x256xf32>
    %997 = vector.shape_cast %996 : vector<1x1x256xf32> to vector<1x256xf32>
    %998 = vector.shape_cast %995 : vector<1x256xf32> to vector<1x1x256xf32>
    tpu.vector_store %arg5[%c0_423, %c48, %c0_424], %998 {strides = array<i32>} : memref<1x49x256xf32, #tpu.memory_space<vmem>>, vector<1x1x256xf32>,
    return
  }
  func.func @transform_0(%arg0: i32) -> (i32, i32) {
    %c0_i32 = arith.constant 0 : i32
    %c0_i32_0 = arith.constant 0 : i32
    %c0_i32_1 = arith.constant 0 : i32
    return %c0_i32, %c0_i32_0 : i32, i32
  }
  func.func @transform_1(%arg0: i32) -> (i32, i32) {
    %c0_i32 = arith.constant 0 : i32
    %c0_i32_0 = arith.constant 0 : i32
    %c0_i32_1 = arith.constant 0 : i32
    return %c0_i32, %c0_i32_0 : i32, i32
  }
  func.func @transform_2(%arg0: i32) -> (i32, i32, i32) {
    %c0_i32 = arith.constant 0 : i32
    %c0_i32_0 = arith.constant 0 : i32
    %c0_i32_1 = arith.constant 0 : i32
    return %arg0, %c0_i32, %c0_i32_0 : i32, i32, i32
  }
  func.func @transform_3(%arg0: i32) -> (i32, i32, i32) {
    %c0_i32 = arith.constant 0 : i32
    %c0_i32_0 = arith.constant 0 : i32
    %c0_i32_1 = arith.constant 0 : i32
    return %arg0, %c0_i32, %c0_i32_0 : i32, i32, i32
  }
  func.func @transform_4(%arg0: i32) -> (i32, i32, i32) {
    %c0_i32 = arith.constant 0 : i32
    %c0_i32_0 = arith.constant 0 : i32
    %c0_i32_1 = arith.constant 0 : i32
    return %arg0, %c0_i32, %c0_i32_0 : i32, i32, i32
  }
}

</mosaic_0001>

<llo_original>
// kernel: tpu_custom_call.1
$region0: #{tpu_custom_call.1}
  #allocation0 [shape = 'u32[]', space=smem, size = 0x4, offset = 0x4, fixed_abs, tag = 'smem constant byte address 0x4 - core index']
  #allocation1 [shape = 'u32[72,128]{1,0:T(1,128)}', space=vmem, size = 0x9000, scoped, tag = 'internal scratch']
  %s0 = inlined_call_operand.hbm [shape: s32[1,256], index: 0, kind: input, shape index: {}]
  %s1 = inlined_call_operand.hbm [shape: s32[1,256], index: 1, kind: input, shape index: {}]
  %s2 = inlined_call_operand.hbm [shape: f32[2,4,256], index: 2, kind: input, shape index: {}]
  %s3 = inlined_call_operand.hbm [shape: f32[2,4,256], index: 3, kind: input, shape index: {}]
  %s4 = inlined_call_operand.vmem [shape: f32[2,49,256], index: 4, kind: output, shape index: {}]
  %s5 = sld [smem:[#allocation0]]
  $region65: #{tpu_custom_call.1} parent=0
    _
  %s7 = ssub.s32 1, %s5
  %s8 = scalar_select 0, %s7, %s5
  $region1: #{tpu_custom_call.1} parent=0
    #allocation2 [shape = 'u8[1024]{0}', space=vmem, size = 0x400, scoped, tag = 'input window, operand 0, single buffered']
    #allocation3 [shape = 's32[2]{0}', space=sflag, size = 0x8, scoped, tag = 'scoped memory for tpu_custom_call.1']
    #allocation4 [shape = 'u8[1024]{0}', space=vmem, size = 0x400, scoped, tag = 'input window, operand 1, single buffered']
    #allocation5 [shape = 's32[1]{0}', space=sflag, size = 0x4, scoped, tag = 'scoped memory for tpu_custom_call.1']
    #allocation6 [shape = 'u8[8192]{0}', space=vmem, size = 0x2000, scoped, tag = 'input window, operand 2']
    #allocation7 [shape = 'u8[8192]{0}', space=vmem, size = 0x2000, scoped, tag = 'input window, operand 3']
    %9 = vsyncpa [#allocation3], 0
    %10 = vsyncpa [#allocation5], 0
    loop: start=0, step=1, limit=4
    $region2: #{tpu_custom_call.1} parent=1 // loop_pre_header
      _
    $region3: #{tpu_custom_call.1} parent=1 // loop_header
      %s12 = sphi 0, %s16
      %p13 = scmp.ge.s32.totalorder %s12, 4
      %s20 = sphi 0, %s20
      %s22 = sphi 0, %s20
      %s23 = sphi 0, %s22
      %s37 = sphi 0, %s23
      %s41 = sphi 0, %s41
      %s43 = sphi 0, %s41
      %s44 = sphi 0, %s43
      %s58 = sphi 0, %s44
      %s64 = sphi 0, %s66
      %s67 = sphi 0, %s64
      %s68 = sphi 0, %s67
      %s84 = sphi 0, %s68
      %s90 = sphi 0, %s92
      %s93 = sphi 0, %s90
      %s94 = sphi 0, %s93
      %s110 = sphi 0, %s94
      %s116 = sphi 0, %s118
      %s119 = sphi 0, %s116
      %s120 = sphi 0, %s119
      %s136 = sphi 0, %s120
    $region4: #{tpu_custom_call.1} parent=1 // loop_header_branch
      %15 = sbr.rel (%p13) target = $region8
    $region5: #{tpu_custom_call.1} parent=1 // loop_body
      %s17 = ssub.s32 %s12, 1
      %s18 = ssub.s32 %s12, 2
      %s19 = sadd.s32 %s12, 1
      %s21 = sadd.s32 %s20, 1
      %p24 = scmp.eq.s32.totalorder %s12, 1
      %p25 = scmp.ne.s32.totalorder %s20, %s22
      %p26 = scmp.eq.s32.totalorder %s12, 0
      %p27 = por %p25, %p26
      %p28 = scmp.ne.s32.totalorder %s20, %s22
      %p29 = scmp.eq.s32.totalorder %s17, 1
      %p30 = por %p28, %p29
      %p31 = scmp.ne.s32.totalorder %s22, %s23
      %p32 = scmp.eq.s32.totalorder %s17, 0
      %p33 = por %p31, %p32
      %p34 = scmp.ne.s32.totalorder %s22, %s23
      %p35 = scmp.eq.s32.totalorder %s18, 1
      %p36 = por %p34, %p35
      %p38 = scmp.ne.s32.totalorder %s23, %s37
      %p39 = scmp.eq.s32.totalorder %s18, 0
      %p40 = por %p38, %p39
      %s42 = sadd.s32 %s41, 1
      %p45 = scmp.eq.s32.totalorder %s12, 1
      %p46 = scmp.ne.s32.totalorder %s41, %s43
      %p47 = scmp.eq.s32.totalorder %s12, 0
      %p48 = por %p46, %p47
      %p49 = scmp.ne.s32.totalorder %s41, %s43
      %p50 = scmp.eq.s32.totalorder %s17, 1
      %p51 = por %p49, %p50
      %p52 = scmp.ne.s32.totalorder %s43, %s44
      %p53 = scmp.eq.s32.totalorder %s17, 0
      %p54 = por %p52, %p53
      %p55 = scmp.ne.s32.totalorder %s43, %s44
      %p56 = scmp.eq.s32.totalorder %s18, 1
      %p57 = por %p55, %p56
      %p59 = scmp.ne.s32.totalorder %s44, %s58
      %p60 = scmp.eq.s32.totalorder %s18, 0
      %p61 = por %p59, %p60
      %s62 = ssub.s32 %s12, %s19
      %p63 = scmp.eq.s32.totalorder %s62, 0
      %s65 = sadd.s32 %s64, 1
      %s66 = scalar_select %p63, %s64, %s65
      %p69 = pneg %p63
      %p70 = scmp.eq.s32.totalorder %s12, 1
      %p71 = por %p69, %p70
      %p72 = scmp.ne.s32.totalorder %s64, %s67
      %p73 = scmp.eq.s32.totalorder %s12, 0
      %p74 = por %p72, %p73
      %p75 = scmp.ne.s32.totalorder %s64, %s67
      %p76 = scmp.eq.s32.totalorder %s17, 1
      %p77 = por %p75, %p76
      %p78 = scmp.ne.s32.totalorder %s67, %s68
      %p79 = scmp.eq.s32.totalorder %s17, 0
      %p80 = por %p78, %p79
      %p81 = scmp.ne.s32.totalorder %s67, %s68
      %p82 = scmp.eq.s32.totalorder %s18, 1
      %p83 = por %p81, %p82
      %p85 = scmp.ne.s32.totalorder %s68, %s84
      %p86 = scmp.eq.s32.totalorder %s18, 0
      %p87 = por %p85, %p86
      %s88 = ssub.s32 %s12, %s19
      %p89 = scmp.eq.s32.totalorder %s88, 0
      %s91 = sadd.s32 %s90, 1
      %s92 = scalar_select %p89, %s90, %s91
      %p95 = pneg %p89
      %p96 = scmp.eq.s32.totalorder %s12, 1
      %p97 = por %p95, %p96
      %p98 = scmp.ne.s32.totalorder %s90, %s93
      %p99 = scmp.eq.s32.totalorder %s12, 0
      %p100 = por %p98, %p99
      %p101 = scmp.ne.s32.totalorder %s90, %s93
      %p102 = scmp.eq.s32.totalorder %s17, 1
      %p103 = por %p101, %p102
      %p104 = scmp.ne.s32.totalorder %s93, %s94
      %p105 = scmp.eq.s32.totalorder %s17, 0
      %p106 = por %p104, %p105
      %p107 = scmp.ne.s32.totalorder %s93, %s94
      %p108 = scmp.eq.s32.totalorder %s18, 1
      %p109 = por %p107, %p108
      %p111 = scmp.ne.s32.totalorder %s94, %s110
      %p112 = scmp.eq.s32.totalorder %s18, 0
      %p113 = por %p111, %p112
      %s114 = ssub.s32 %s12, %s19
      %p115 = scmp.eq.s32.totalorder %s114, 0
      %s117 = sadd.s32 %s116, 1
      %s118 = scalar_select %p115, %s116, %s117
      %p121 = pneg %p115
      %p122 = scmp.eq.s32.totalorder %s12, 1
      %p123 = por %p121, %p122
      %p124 = scmp.ne.s32.totalorder %s116, %s119
      %p125 = scmp.eq.s32.totalorder %s12, 0
      %p126 = por %p124, %p125
      %p127 = scmp.ne.s32.totalorder %s116, %s119
      %p128 = scmp.eq.s32.totalorder %s17, 1
      %p129 = por %p127, %p128
      %p130 = scmp.ne.s32.totalorder %s119, %s120
      %p131 = scmp.eq.s32.totalorder %s17, 0
      %p132 = por %p130, %p131
      %p133 = scmp.ne.s32.totalorder %s119, %s120
      %p134 = scmp.eq.s32.totalorder %s18, 1
      %p135 = por %p133, %p134
      %p137 = scmp.ne.s32.totalorder %s120, %s136
      %p138 = scmp.eq.s32.totalorder %s18, 0
      %p139 = por %p137, %p138
      %p140 = scmp.le.s32.totalorder 1, %s12
      %p141 = scmp.lt.s32.totalorder %s12, 3
      %p142 = pnand %p140, %p141
      %p143 = pneg %p142
      // Predicated region
      $region9: #{tpu_custom_call.1} parent=5 // pred_check
        _
      $region10: #{tpu_custom_call.1} parent=5 // pred_check_branch
        %145 = sbr.rel (%p142) target = $region12
      $region11: #{tpu_custom_call.1} parent=5 // pred_region
        %s146 = ssub.s32 %s12, 1
        // Predicated region
        $region13: #{tpu_custom_call.1} parent=11 // pred_check
          %p147 = pneg %p33
        $region14: #{tpu_custom_call.1} parent=11 // pred_check_branch
          %149 = sbr.rel (%p147) target = $region16
        $region15: #{tpu_custom_call.1} parent=11 // pred_region
          %151 = vsyncadd [#allocation3], 0
          %s153 = sshll.u32 %s0, 4
          %s154 = int_to_ptr.hbm [resolvable:$true] %s153
          %s155 = sshll.u32 [#allocation2], 4
          %s156 = int_to_ptr.vmem [resolvable:$true] %s155
          %158 = dma.hbm_to_vmem [thread:$0]  %s154, 32, %s156, [#allocation3]
        $region16: #{tpu_custom_call.1} parent=11 // pred_fallthru
          _
        // Predicated region
        $region17: #{tpu_custom_call.1} parent=11 // pred_check
          %p159 = pneg %p54
        $region18: #{tpu_custom_call.1} parent=11 // pred_check_branch
          %161 = sbr.rel (%p159) target = $region20
        $region19: #{tpu_custom_call.1} parent=11 // pred_region
          %163 = vsyncadd [#allocation5], 0
          %s165 = sshll.u32 %s1, 4
          %s166 = int_to_ptr.hbm [resolvable:$true] %s165
          %s167 = sshll.u32 [#allocation4], 4
          %s168 = int_to_ptr.vmem [resolvable:$true] %s167
          %170 = dma.hbm_to_vmem [thread:$0]  %s166, 32, %s168, [#allocation5]
        $region20: #{tpu_custom_call.1} parent=11 // pred_fallthru
          _
      $region12: #{tpu_custom_call.1} parent=5 // pred_fallthru
        _
      %p171 = scmp.lt.s32.totalorder %s12, 2
      // Predicated region
      $region21: #{tpu_custom_call.1} parent=5 // pred_check
        %p172 = pneg %p171
      $region22: #{tpu_custom_call.1} parent=5 // pred_check_branch
        %174 = sbr.rel (%p172) target = $region24
      $region23: #{tpu_custom_call.1} parent=5 // pred_region
        // Predicated region
        $region25: #{tpu_custom_call.1} parent=23 // pred_check
          %p175 = pneg %p74
        $region26: #{tpu_custom_call.1} parent=23 // pred_check_branch
          %177 = sbr.rel (%p175) target = $region28
        $region27: #{tpu_custom_call.1} parent=23 // pred_region
          %s178 = sand.u32 %s12, 1
          %s179 = scalar_lea.sflag [#allocation3], %s178
          %s180 = sand.u32 %s64, 1
          %s181 = smul.addr %s180, 8
          %s182 = scalar_lea.vmem [#allocation6], %s181
          %184 = vsyncadd %s179, 0
          %s185 = smul.addr %s12, 2
          %s186 = smul.addr %s185, 4
          %s187 = scalar_lea.hbm %s2, %s186
          %s189 = sshll.u32 %s187, 4
          %s190 = int_to_ptr.hbm [resolvable:$true] %s189
          %s191 = sshll.u32 %s182, 4
          %s192 = int_to_ptr.vmem [resolvable:$true] %s191
          %194 = dma.hbm_to_vmem [thread:$0]  %s190, 128, %s192, %s179
        $region28: #{tpu_custom_call.1} parent=23 // pred_fallthru
          _
        // Predicated region
        $region29: #{tpu_custom_call.1} parent=23 // pred_check
          %p195 = pneg %p100
        $region30: #{tpu_custom_call.1} parent=23 // pred_check_branch
          %197 = sbr.rel (%p195) target = $region32
        $region31: #{tpu_custom_call.1} parent=23 // pred_region
          %s198 = sand.u32 %s12, 1
          %s199 = scalar_lea.sflag [#allocation3], %s198
          %s200 = sand.u32 %s90, 1
          %s201 = smul.addr %s200, 8
          %s202 = scalar_lea.vmem [#allocation7], %s201
          %204 = vsyncadd %s199, 0
          %s205 = smul.addr %s12, 2
          %s206 = smul.addr %s205, 4
          %s207 = scalar_lea.hbm %s3, %s206
          %s209 = sshll.u32 %s207, 4
          %s210 = int_to_ptr.hbm [resolvable:$true] %s209
          %s211 = sshll.u32 %s202, 4
          %s212 = int_to_ptr.vmem [resolvable:$true] %s211
          %214 = dma.hbm_to_vmem [thread:$0]  %s210, 128, %s212, %s199
        $region32: #{tpu_custom_call.1} parent=23 // pred_fallthru
          _
      $region24: #{tpu_custom_call.1} parent=5 // pred_fallthru
        _
      %p215 = scmp.le.s32.totalorder 1, %s12
      %p216 = scmp.lt.s32.totalorder %s12, 3
      %p217 = pnand %p215, %p216
      %p218 = pneg %p217
      // Predicated region
      $region33: #{tpu_custom_call.1} parent=5 // pred_check
        _
      $region34: #{tpu_custom_call.1} parent=5 // pred_check_branch
        %220 = sbr.rel (%p217) target = $region36
      $region35: #{tpu_custom_call.1} parent=5 // pred_region
        %s221 = ssub.s32 %s12, 1
        // Predicated region
        $region37: #{tpu_custom_call.1} parent=35 // pred_check
          %p222 = pneg %p33
        $region38: #{tpu_custom_call.1} parent=35 // pred_check_branch
          %224 = sbr.rel (%p222) target = $region40
        $region39: #{tpu_custom_call.1} parent=35 // pred_region
          %226 = dma.done [#allocation3], 32
        $region40: #{tpu_custom_call.1} parent=35 // pred_fallthru
          _
        // Predicated region
        $region41: #{tpu_custom_call.1} parent=35 // pred_check
          %p227 = pneg %p54
        $region42: #{tpu_custom_call.1} parent=35 // pred_check_branch
          %229 = sbr.rel (%p227) target = $region44
        $region43: #{tpu_custom_call.1} parent=35 // pred_region
          %231 = dma.done [#allocation5], 32
        $region44: #{tpu_custom_call.1} parent=35 // pred_fallthru
          _
        %s232 = sand.u32 %s17, 1
        %s233 = scalar_lea.sflag [#allocation3], %s232
        %s234 = sand.u32 %s67, 1
        %s235 = smul.addr %s234, 8
        %s236 = scalar_lea.vmem [#allocation6], %s235
        // Predicated region
        $region45: #{tpu_custom_call.1} parent=35 // pred_check
          %p237 = pneg %p80
        $region46: #{tpu_custom_call.1} parent=35 // pred_check_branch
          %239 = sbr.rel (%p237) target = $region48
        $region47: #{tpu_custom_call.1} parent=35 // pred_region
          %241 = dma.done %s233, 128
        $region48: #{tpu_custom_call.1} parent=35 // pred_fallthru
          _
        %s242 = sand.u32 %s17, 1
        %s243 = scalar_lea.sflag [#allocation3], %s242
        %s244 = sand.u32 %s93, 1
        %s245 = smul.addr %s244, 8
        %s246 = scalar_lea.vmem [#allocation7], %s245
        // Predicated region
        $region49: #{tpu_custom_call.1} parent=35 // pred_check
          %p247 = pneg %p106
        $region50: #{tpu_custom_call.1} parent=35 // pred_check_branch
          %249 = sbr.rel (%p247) target = $region52
        $region51: #{tpu_custom_call.1} parent=35 // pred_region
          %251 = dma.done %s243, 128
        $region52: #{tpu_custom_call.1} parent=35 // pred_fallthru
          _
        %p252 = pneg %p33
        %p253 = pneg %p30
        %p254 = pneg %p54
        %p255 = pneg %p51
        %s256 = sand.u32 %s17, 1
        %s257 = scalar_lea.sflag [#allocation3], %s256
        %s258 = sand.u32 %s67, 1
        %s259 = smul.addr %s258, 8
        %s260 = scalar_lea.vmem [#allocation6], %s259
        %p261 = pneg %p80
        %p262 = pneg %p77
        %s263 = sand.u32 %s17, 1
        %s264 = scalar_lea.sflag [#allocation3], %s263
        %s265 = sand.u32 %s93, 1
        %s266 = smul.addr %s265, 8
        %s267 = scalar_lea.vmem [#allocation7], %s266
        %p268 = pneg %p106
        %p269 = pneg %p103
        %p270 = pneg %p132
        %p271 = pneg %p129
        %p272 = scmp.lt.s32.totalorder %s17, 1
        %s273 = scalar_select %p272, %s17, 1
        %s274 = smul.addr %s273, 14
        %s275 = smul.addr %s274, 8
        %s276 = scalar_lea.vmem %s4, %s275
        %p277 = scmp.lt.s32.totalorder %s17, 1
        %s278 = scalar_select %p277, %s17, 1
        %s279 = smul.addr %s278, 14
        %s280 = smul.addr %s279, 8
        %s281 = scalar_lea.vmem %s4, %s280
        %v282 = vld [vmem:[%s236] sm:$0xff]
        %v283 = vld [vmem:[%s246] sm:$0xff]
        %v284 = vld [vmem:[#allocation2] sm:$0x3]
        %v285 = vld [vmem:[#allocation4] sm:$0x3]
        %v286 = vadd.s32 %v284, 4294967293
        %vm287 = vcmp.ge.s32.totalorder %v286, 0
        %vm288 = vcmp.lt.s32.totalorder %v286, 16
        %vm289 = vmand %vm287, %vm288
        %v290 = vadd.s32 %v285, 4294967293
        %vm291 = vcmp.ge.s32.totalorder %v290, 0
        %vm292 = vcmp.lt.s32.totalorder %v290, 16
        %vm293 = vmand %vm291, %vm292
        %295 = vst [vmem:[#allocation1] ss:$2 sm:$0xff] %v283
        %v296 = vld.sshfl [vmem:[#allocation1] sm:$0xff pattern:$0x75316420]
        %v297 = vld.sshfl [vmem:[#allocation1 + $0x8] sm:$0xff pattern:$0x75316420]
        %300 = vrot.lane.b32.xlu0 %v296, 51
        %v301 = vpop.permute.xlu0 %300
        %302 = vrot.lane.b32.xlu0 %v297, 51
        %v303 = vpop.permute.xlu0 %302
        %v304 = vlaneseq
        %v305 = vand.u32 %v304, 127
        %vm306 = vcmp.lt.s32.totalorder %v305, 51
        %v307 = vsel %vm306, %v301, %v303
        %v308 = vsel %vm306, %v303, %v301
        %v311 = vrot.slane %v307, 4
        %vm312 = vcmask 1043456
        %v313 = vsel %vm312, %v308, %v311
        %v315 = vmul.f32 %v282, %v313
        %317 = vst [vmem:[#allocation1] ss:$2 sm:$0xff] %v315
        %v318 = vld.sshfl [vmem:[#allocation1] sm:$0xff pattern:$0x75316420]
        %v319 = vld.sshfl [vmem:[#allocation1 + $0x8] sm:$0xff pattern:$0x75316420]
        %v322 = vsel %vm312, %v318, 0.0
        %v323 = vrot.slane %v322, 4
        %v324 = vadd.f32 %v322, %v323
        %v325 = vrot.slane %v324, 2
        %v326 = vadd.f32 %v324, %v325
        %v327 = vrot.slane %v326, 1
        %v328 = vadd.f32 %v326, %v327
        %v329 = vsel %vm312, %v319, 0.0
        %v330 = vrot.slane %v329, 4
        %v331 = vadd.f32 %v329, %v330
        %v332 = vrot.slane %v331, 2
        %v333 = vadd.f32 %v331, %v332
        %v334 = vrot.slane %v333, 1
        %v335 = vadd.f32 %v333, %v334
        %vm336 = vmand %vm289, %vm293
        %v339 = vrot.slane %v335, 7
        %vm340 = vcmask 1040384
        %v341 = vsel %vm340, %v328, %v339
        %v343 = vsel %vm336, %v341, 0.0
        %v344 = vlaneseq
        %vm345 = vcmp.ge.s32.totalorder %v344, 0
        %vm346 = vcmp.lt.s32.totalorder %v344, 256
        %vm347 = vmand %vm345, %vm346
        %348 = vst.msk [vmem:[%s281] ss:$8 sm:$0x3] %vm347, %v343
        %349 = vst.msk [vmem:[%s281] ss:$8 sm:$0x0] %vm347, %v343
        %v350 = vadd.s32 %v285, 4294967294
        %vm351 = vcmp.ge.s32.totalorder %v350, 0
        %vm352 = vcmp.lt.s32.totalorder %v350, 16
        %vm353 = vmand %vm351, %vm352
        %354 = vst [vmem:[#allocation1] ss:$2 sm:$0xff] %v283
        %v355 = vld.sshfl [vmem:[#allocation1] sm:$0xff pattern:$0x75316420]
        %v356 = vld.sshfl [vmem:[#allocation1 + $0x8] sm:$0xff pattern:$0x75316420]
        %359 = vrot.lane.b32.xlu0 %v355, 50
        %v360 = vpop.permute.xlu0 %359
        %361 = vrot.lane.b32.xlu0 %v356, 50
        %v362 = vpop.permute.xlu0 %361
        %vm363 = vcmp.lt.s32.totalorder %v305, 50
        %v364 = vsel %vm363, %v360, %v362
        %v365 = vsel %vm363, %v362, %v360
        %v368 = vrot.slane %v364, 4
        %v369 = vsel %vm312, %v365, %v368
        %v371 = vmul.f32 %v282, %v369
        %373 = vst [vmem:[#allocation1] ss:$2 sm:$0xff] %v371
        %v374 = vld.sshfl [vmem:[#allocation1] sm:$0xff pattern:$0x75316420]
        %v375 = vld.sshfl [vmem:[#allocation1 + $0x8] sm:$0xff pattern:$0x75316420]
        %v378 = vsel %vm312, %v374, 0.0
        %v379 = vrot.slane %v378, 4
        %v380 = vadd.f32 %v378, %v379
        %v381 = vrot.slane %v380, 2
        %v382 = vadd.f32 %v380, %v381
        %v383 = vrot.slane %v382, 1
        %v384 = vadd.f32 %v382, %v383
        %v385 = vsel %vm312, %v375, 0.0
        %v386 = vrot.slane %v385, 4
        %v387 = vadd.f32 %v385, %v386
        %v388 = vrot.slane %v387, 2
        %v389 = vadd.f32 %v387, %v388
        %v390 = vrot.slane %v389, 1
        %v391 = vadd.f32 %v389, %v390
        %vm392 = vmand %vm289, %vm353
        %v395 = vrot.slane %v391, 7
        %v396 = vsel %vm340, %v384, %v395
        %v398 = vsel %vm392, %v396, 0.0
        %s399 = scalar_lea.vmem %s281, 1
        %400 = vst.msk [vmem:[%s399] ss:$8 sm:$0x3] %vm347, %v398
        %401 = vst.msk [vmem:[%s399] ss:$8 sm:$0x0] %vm347, %v398
        %v402 = vadd.s32 %v285, 4294967295
        %vm403 = vcmp.ge.s32.totalorder %v402, 0
        %vm404 = vcmp.lt.s32.totalorder %v402, 16
        %vm405 = vmand %vm403, %vm404
        %406 = vst [vmem:[#allocation1] ss:$2 sm:$0xff] %v283
        %v407 = vld.sshfl [vmem:[#allocation1] sm:$0xff pattern:$0x75316420]
        %v408 = vld.sshfl [vmem:[#allocation1 + $0x8] sm:$0xff pattern:$0x75316420]
        %411 = vrot.lane.b32.xlu0 %v407, 49
        %v412 = vpop.permute.xlu0 %411
        %413 = vrot.lane.b32.xlu0 %v408, 49
        %v414 = vpop.permute.xlu0 %413
        %vm415 = vcmp.lt.s32.totalorder %v305, 49
        %v416 = vsel %vm415, %v412, %v414
        %v417 = vsel %vm415, %v414, %v412
        %v420 = vrot.slane %v416, 4
        %v421 = vsel %vm312, %v417, %v420
        %v423 = vmul.f32 %v282, %v421
        %425 = vst [vmem:[#allocation1] ss:$2 sm:$0xff] %v423
        %v426 = vld.sshfl [vmem:[#allocation1] sm:$0xff pattern:$0x75316420]
        %v427 = vld.sshfl [vmem:[#allocation1 + $0x8] sm:$0xff pattern:$0x75316420]
        %v430 = vsel %vm312, %v426, 0.0
        %v431 = vrot.slane %v430, 4
        %v432 = vadd.f32 %v430, %v431
        %v433 = vrot.slane %v432, 2
        %v434 = vadd.f32 %v432, %v433
        %v435 = vrot.slane %v434, 1
        %v436 = vadd.f32 %v434, %v435
        %v437 = vsel %vm312, %v427, 0.0
        %v438 = vrot.slane %v437, 4
        %v439 = vadd.f32 %v437, %v438
        %v440 = vrot.slane %v439, 2
        %v441 = vadd.f32 %v439, %v440
        %v442 = vrot.slane %v441, 1
        %v443 = vadd.f32 %v441, %v442
        %vm444 = vmand %vm289, %vm405
        %v447 = vrot.slane %v443, 7
        %v448 = vsel %vm340, %v436, %v447
        %v450 = vsel %vm444, %v448, 0.0
        %s451 = scalar_lea.vmem %s281, 2
        %452 = vst.msk [vmem:[%s451] ss:$8 sm:$0x3] %vm347, %v450
        %453 = vst.msk [vmem:[%s451] ss:$8 sm:$0x0] %vm347, %v450
        %vm454 = vcmp.ge.s32.totalorder %v285, 0
        %vm455 = vcmp.lt.s32.totalorder %v285, 16
        %vm456 = vmand %vm454, %vm455
        %457 = vst [vmem:[#allocation1] ss:$2 sm:$0xff] %v283
        %v458 = vld.sshfl [vmem:[#allocation1] sm:$0xff pattern:$0x75316420]
        %v459 = vld.sshfl [vmem:[#allocation1 + $0x8] sm:$0xff pattern:$0x75316420]
        %462 = vrot.lane.b32.xlu0 %v458, 48
        %v463 = vpop.permute.xlu0 %462
        %464 = vrot.lane.b32.xlu0 %v459, 48
        %v465 = vpop.permute.xlu0 %464
        %vm466 = vcmp.lt.s32.totalorder %v305, 48
        %v467 = vsel %vm466, %v463, %v465
        %v468 = vsel %vm466, %v465, %v463
        %v471 = vrot.slane %v467, 4
        %v472 = vsel %vm312, %v468, %v471
        %v474 = vmul.f32 %v282, %v472
        %476 = vst [vmem:[#allocation1] ss:$2 sm:$0xff] %v474
        %v477 = vld.sshfl [vmem:[#allocation1] sm:$0xff pattern:$0x75316420]
        %v478 = vld.sshfl [vmem:[#allocation1 + $0x8] sm:$0xff pattern:$0x75316420]
        %v481 = vsel %vm312, %v477, 0.0
        %v482 = vrot.slane %v481, 4
        %v483 = vadd.f32 %v481, %v482
        %v484 = vrot.slane %v483, 2
        %v485 = vadd.f32 %v483, %v484
        %v486 = vrot.slane %v485, 1
        %v487 = vadd.f32 %v485, %v486
        %v488 = vsel %vm312, %v478, 0.0
        %v489 = vrot.slane %v488, 4
        %v490 = vadd.f32 %v488, %v489
        %v491 = vrot.slane %v490, 2
        %v492 = vadd.f32 %v490, %v491
        %v493 = vrot.slane %v492, 1
        %v494 = vadd.f32 %v492, %v493
        %vm495 = vmand %vm289, %vm456
        %v498 = vrot.slane %v494, 7
        %v499 = vsel %vm340, %v487, %v498
        %v501 = vsel %vm495, %v499, 0.0
        %s502 = scalar_lea.vmem %s281, 3
        %503 = vst.msk [vmem:[%s502] ss:$8 sm:$0x3] %vm347, %v501
        %504 = vst.msk [vmem:[%s502] ss:$8 sm:$0x0] %vm347, %v501
        %v505 = vadd.s32 %v285, 1
        %vm506 = vcmp.ge.s32.totalorder %v505, 0
        %vm507 = vcmp.lt.s32.totalorder %v505, 16
        %vm508 = vmand %vm506, %vm507
        %509 = vst [vmem:[#allocation1] ss:$2 sm:$0xff] %v283
        %v510 = vld.sshfl [vmem:[#allocation1] sm:$0xff pattern:$0x75316420]
        %v511 = vld.sshfl [vmem:[#allocation1 + $0x8] sm:$0xff pattern:$0x75316420]
        %514 = vrot.lane.b32.xlu0 %v510, 47
        %v515 = vpop.permute.xlu0 %514
        %516 = vrot.lane.b32.xlu0 %v511, 47
        %v517 = vpop.permute.xlu0 %516
        %vm518 = vcmp.lt.s32.totalorder %v305, 47
        %v519 = vsel %vm518, %v515, %v517
        %v520 = vsel %vm518, %v517, %v515
        %v523 = vrot.slane %v519, 4
        %v524 = vsel %vm312, %v520, %v523
        %v526 = vmul.f32 %v282, %v524
        %528 = vst [vmem:[#allocation1] ss:$2 sm:$0xff] %v526
        %v529 = vld.sshfl [vmem:[#allocation1] sm:$0xff pattern:$0x75316420]
        %v530 = vld.sshfl [vmem:[#allocation1 + $0x8] sm:$0xff pattern:$0x75316420]
        %v533 = vsel %vm312, %v529, 0.0
        %v534 = vrot.slane %v533, 4
        %v535 = vadd.f32 %v533, %v534
        %v536 = vrot.slane %v535, 2
        %v537 = vadd.f32 %v535, %v536
        %v538 = vrot.slane %v537, 1
        %v539 = vadd.f32 %v537, %v538
        %v540 = vsel %vm312, %v530, 0.0
        %v541 = vrot.slane %v540, 4
        %v542 = vadd.f32 %v540, %v541
        %v543 = vrot.slane %v542, 2
        %v544 = vadd.f32 %v542, %v543
        %v545 = vrot.slane %v544, 1
        %v546 = vadd.f32 %v544, %v545
        %vm547 = vmand %vm289, %vm508
        %v550 = vrot.slane %v546, 7
        %v551 = vsel %vm340, %v539, %v550
        %v553 = vsel %vm547, %v551, 0.0
        %s554 = scalar_lea.vmem %s281, 4
        %555 = vst.msk [vmem:[%s554] ss:$8 sm:$0x3] %vm347, %v553
        %556 = vst.msk [vmem:[%s554] ss:$8 sm:$0x0] %vm347, %v553
        %v557 = vadd.s32 %v285, 2
        %vm558 = vcmp.ge.s32.totalorder %v557, 0
        %vm559 = vcmp.lt.s32.totalorder %v557, 16
        %vm560 = vmand %vm558, %vm559
        %561 = vst [vmem:[#allocation1] ss:$2 sm:$0xff] %v283
        %v562 = vld.sshfl [vmem:[#allocation1] sm:$0xff pattern:$0x75316420]
        %v563 = vld.sshfl [vmem:[#allocation1 + $0x8] sm:$0xff pattern:$0x75316420]
        %566 = vrot.lane.b32.xlu0 %v562, 46
        %v567 = vpop.permute.xlu0 %566
        %568 = vrot.lane.b32.xlu0 %v563, 46
        %v569 = vpop.permute.xlu0 %568
        %vm570 = vcmp.lt.s32.totalorder %v305, 46
        %v571 = vsel %vm570, %v567, %v569
        %v572 = vsel %vm570, %v569, %v567
        %v575 = vrot.slane %v571, 4
        %v576 = vsel %vm312, %v572, %v575
        %v578 = vmul.f32 %v282, %v576
        %580 = vst [vmem:[#allocation1] ss:$2 sm:$0xff] %v578
        %v581 = vld.sshfl [vmem:[#allocation1] sm:$0xff pattern:$0x75316420]
        %v582 = vld.sshfl [vmem:[#allocation1 + $0x8] sm:$0xff pattern:$0x75316420]
        %v585 = vsel %vm312, %v581, 0.0
        %v586 = vrot.slane %v585, 4
        %v587 = vadd.f32 %v585, %v586
        %v588 = vrot.slane %v587, 2
        %v589 = vadd.f32 %v587, %v588
        %v590 = vrot.slane %v589, 1
        %v591 = vadd.f32 %v589, %v590
        %v592 = vsel %vm312, %v582, 0.0
        %v593 = vrot.slane %v592, 4
        %v594 = vadd.f32 %v592, %v593
        %v595 = vrot.slane %v594, 2
        %v596 = vadd.f32 %v594, %v595
        %v597 = vrot.slane %v596, 1
        %v598 = vadd.f32 %v596, %v597
        %vm599 = vmand %vm289, %vm560
        %v602 = vrot.slane %v598, 7
        %v603 = vsel %vm340, %v591, %v602
        %v605 = vsel %vm599, %v603, 0.0
        %s606 = scalar_lea.vmem %s281, 5
        %607 = vst.msk [vmem:[%s606] ss:$8 sm:$0x3] %vm347, %v605
        %608 = vst.msk [vmem:[%s606] ss:$8 sm:$0x0] %vm347, %v605
        %v609 = vadd.s32 %v285, 3
        %vm610 = vcmp.ge.s32.totalorder %v609, 0
        %vm611 = vcmp.lt.s32.totalorder %v609, 16
        %vm612 = vmand %vm610, %vm611
        %613 = vst [vmem:[#allocation1] ss:$2 sm:$0xff] %v283
        %v614 = vld.sshfl [vmem:[#allocation1] sm:$0xff pattern:$0x75316420]
        %v615 = vld.sshfl [vmem:[#allocation1 + $0x8] sm:$0xff pattern:$0x75316420]
        %618 = vrot.lane.b32.xlu0 %v614, 45
        %v619 = vpop.permute.xlu0 %618
        %620 = vrot.lane.b32.xlu0 %v615, 45
        %v621 = vpop.permute.xlu0 %620
        %vm622 = vcmp.lt.s32.totalorder %v305, 45
        %v623 = vsel %vm622, %v619, %v621
        %v624 = vsel %vm622, %v621, %v619
        %v627 = vrot.slane %v623, 4
        %v628 = vsel %vm312, %v624, %v627
        %v630 = vmul.f32 %v282, %v628
        %632 = vst [vmem:[#allocation1] ss:$2 sm:$0xff] %v630
        %v633 = vld.sshfl [vmem:[#allocation1] sm:$0xff pattern:$0x75316420]
        %v634 = vld.sshfl [vmem:[#allocation1 + $0x8] sm:$0xff pattern:$0x75316420]
        %v637 = vsel %vm312, %v633, 0.0
        %v638 = vrot.slane %v637, 4
        %v639 = vadd.f32 %v637, %v638
        %v640 = vrot.slane %v639, 2
        %v641 = vadd.f32 %v639, %v640
        %v642 = vrot.slane %v641, 1
        %v643 = vadd.f32 %v641, %v642
        %v644 = vsel %vm312, %v634, 0.0
        %v645 = vrot.slane %v644, 4
        %v646 = vadd.f32 %v644, %v645
        %v647 = vrot.slane %v646, 2
        %v648 = vadd.f32 %v646, %v647
        %v649 = vrot.slane %v648, 1
        %v650 = vadd.f32 %v648, %v649
        %vm651 = vmand %vm289, %vm612
        %v654 = vrot.slane %v650, 7
        %v655 = vsel %vm340, %v643, %v654
        %v657 = vsel %vm651, %v655, 0.0
        %s658 = scalar_lea.vmem %s281, 6
        %659 = vst.msk [vmem:[%s658] ss:$8 sm:$0x3] %vm347, %v657
        %660 = vst.msk [vmem:[%s658] ss:$8 sm:$0x0] %vm347, %v657
        %v661 = vadd.s32 %v284, 4294967294
        %vm662 = vcmp.ge.s32.totalorder %v661, 0
        %vm663 = vcmp.lt.s32.totalorder %v661, 16
        %vm664 = vmand %vm662, %vm663
        %665 = vst [vmem:[#allocation1] ss:$2 sm:$0xff] %v283
        %v666 = vld.sshfl [vmem:[#allocation1] sm:$0xff pattern:$0x75316420]
        %v667 = vld.sshfl [vmem:[#allocation1 + $0x8] sm:$0xff pattern:$0x75316420]
        %670 = vrot.lane.b32.xlu0 %v666, 35
        %v671 = vpop.permute.xlu0 %670
        %672 = vrot.lane.b32.xlu0 %v667, 35
        %v673 = vpop.permute.xlu0 %672
        %vm674 = vcmp.lt.s32.totalorder %v305, 35
        %v675 = vsel %vm674, %v671, %v673
        %v676 = vsel %vm674, %v673, %v671
        %v679 = vrot.slane %v675, 4
        %v680 = vsel %vm312, %v676, %v679
        %v682 = vmul.f32 %v282, %v680
        %684 = vst [vmem:[#allocation1] ss:$2 sm:$0xff] %v682
        %v685 = vld.sshfl [vmem:[#allocation1] sm:$0xff pattern:$0x75316420]
        %v686 = vld.sshfl [vmem:[#allocation1 + $0x8] sm:$0xff pattern:$0x75316420]
        %v689 = vsel %vm312, %v685, 0.0
        %v690 = vrot.slane %v689, 4
        %v691 = vadd.f32 %v689, %v690
        %v692 = vrot.slane %v691, 2
        %v693 = vadd.f32 %v691, %v692
        %v694 = vrot.slane %v693, 1
        %v695 = vadd.f32 %v693, %v694
        %v696 = vsel %vm312, %v686, 0.0
        %v697 = vrot.slane %v696, 4
        %v698 = vadd.f32 %v696, %v697
        %v699 = vrot.slane %v698, 2
        %v700 = vadd.f32 %v698, %v699
        %v701 = vrot.slane %v700, 1
        %v702 = vadd.f32 %v700, %v701
        %vm703 = vmand %vm664, %vm293
        %v706 = vrot.slane %v702, 7
        %v707 = vsel %vm340, %v695, %v706
        %v709 = vsel %vm703, %v707, 0.0
        %s710 = scalar_lea.vmem %s281, 7
        %711 = vst.msk [vmem:[%s710] ss:$8 sm:$0x3] %vm347, %v709
        %712 = vst.msk [vmem:[%s710] ss:$8 sm:$0x0] %vm347, %v709
        %713 = vst [vmem:[#allocation1] ss:$2 sm:$0xff] %v283
        %v714 = vld.sshfl [vmem:[#allocation1] sm:$0xff pattern:$0x75316420]
        %v715 = vld.sshfl [vmem:[#allocation1 + $0x8] sm:$0xff pattern:$0x75316420]
        %718 = vrot.lane.b32.xlu0 %v714, 34
        %v719 = vpop.permute.xlu0 %718
        %720 = vrot.lane.b32.xlu0 %v715, 34
        %v721 = vpop.permute.xlu0 %720
        %vm722 = vcmp.lt.s32.totalorder %v305, 34
        %v723 = vsel %vm722, %v719, %v721
        %v724 = vsel %vm722, %v721, %v719
        %v727 = vrot.slane %v723, 4
        %v728 = vsel %vm312, %v724, %v727
        %v730 = vmul.f32 %v282, %v728
        %732 = vst [vmem:[#allocation1] ss:$2 sm:$0xff] %v730
        %v733 = vld.sshfl [vmem:[#allocation1] sm:$0xff pattern:$0x75316420]
        %v734 = vld.sshfl [vmem:[#allocation1 + $0x8] sm:$0xff pattern:$0x75316420]
        %v737 = vsel %vm312, %v733, 0.0
        %v738 = vrot.slane %v737, 4
        %v739 = vadd.f32 %v737, %v738
        %v740 = vrot.slane %v739, 2
        %v741 = vadd.f32 %v739, %v740
        %v742 = vrot.slane %v741, 1
        %v743 = vadd.f32 %v741, %v742
        %v744 = vsel %vm312, %v734, 0.0
        %v745 = vrot.slane %v744, 4
        %v746 = vadd.f32 %v744, %v745
        %v747 = vrot.slane %v746, 2
        %v748 = vadd.f32 %v746, %v747
        %v749 = vrot.slane %v748, 1
        %v750 = vadd.f32 %v748, %v749
        %vm751 = vmand %vm664, %vm353
        %v754 = vrot.slane %v750, 7
        %v755 = vsel %vm340, %v743, %v754
        %v757 = vsel %vm751, %v755, 0.0
        %s758 = scalar_lea.vmem %s281, 16
        %759 = vst.msk [vmem:[%s758] ss:$8 sm:$0x3] %vm347, %v757
        %760 = vst.msk [vmem:[%s758] ss:$8 sm:$0x0] %vm347, %v757
        %761 = vst [vmem:[#allocation1] ss:$2 sm:$0xff] %v283
        %v762 = vld.sshfl [vmem:[#allocation1] sm:$0xff pattern:$0x75316420]
        %v763 = vld.sshfl [vmem:[#allocation1 + $0x8] sm:$0xff pattern:$0x75316420]
        %766 = vrot.lane.b32.xlu0 %v762, 33
        %v767 = vpop.permute.xlu0 %766
        %768 = vrot.lane.b32.xlu0 %v763, 33
        %v769 = vpop.permute.xlu0 %768
        %vm770 = vcmp.lt.s32.totalorder %v305, 33
        %v771 = vsel %vm770, %v767, %v769
        %v772 = vsel %vm770, %v769, %v767
        %v775 = vrot.slane %v771, 4
        %v776 = vsel %vm312, %v772, %v775
        %v778 = vmul.f32 %v282, %v776
        %780 = vst [vmem:[#allocation1] ss:$2 sm:$0xff] %v778
        %v781 = vld.sshfl [vmem:[#allocation1] sm:$0xff pattern:$0x75316420]
        %v782 = vld.sshfl [vmem:[#allocation1 + $0x8] sm:$0xff pattern:$0x75316420]
        %v785 = vsel %vm312, %v781, 0.0
        %v786 = vrot.slane %v785, 4
        %v787 = vadd.f32 %v785, %v786
        %v788 = vrot.slane %v787, 2
        %v789 = vadd.f32 %v787, %v788
        %v790 = vrot.slane %v789, 1
        %v791 = vadd.f32 %v789, %v790
        %v792 = vsel %vm312, %v782, 0.0
        %v793 = vrot.slane %v792, 4
        %v794 = vadd.f32 %v792, %v793
        %v795 = vrot.slane %v794, 2
        %v796 = vadd.f32 %v794, %v795
        %v797 = vrot.slane %v796, 1
        %v798 = vadd.f32 %v796, %v797
        %vm799 = vmand %vm664, %vm405
        %v802 = vrot.slane %v798, 7
        %v803 = vsel %vm340, %v791, %v802
        %v805 = vsel %vm799, %v803, 0.0
        %s806 = scalar_lea.vmem %s281, 17
        %807 = vst.msk [vmem:[%s806] ss:$8 sm:$0x3] %vm347, %v805
        %808 = vst.msk [vmem:[%s806] ss:$8 sm:$0x0] %vm347, %v805
        %809 = vst [vmem:[#allocation1] ss:$2 sm:$0xff] %v283
        %v810 = vld.sshfl [vmem:[#allocation1] sm:$0xff pattern:$0x75316420]
        %v811 = vld.sshfl [vmem:[#allocation1 + $0x8] sm:$0xff pattern:$0x75316420]
        %814 = vrot.lane.b32.xlu0 %v810, 32
        %v815 = vpop.permute.xlu0 %814
        %816 = vrot.lane.b32.xlu0 %v811, 32
        %v817 = vpop.permute.xlu0 %816
        %vm818 = vcmp.lt.s32.totalorder %v305, 32
        %v819 = vsel %vm818, %v815, %v817
        %v820 = vsel %vm818, %v817, %v815
        %v823 = vrot.slane %v819, 4
        %v824 = vsel %vm312, %v820, %v823
        %v826 = vmul.f32 %v282, %v824
        %828 = vst [vmem:[#allocation1] ss:$2 sm:$0xff] %v826
        %v829 = vld.sshfl [vmem:[#allocation1] sm:$0xff pattern:$0x75316420]
        %v830 = vld.sshfl [vmem:[#allocation1 + $0x8] sm:$0xff pattern:$0x75316420]
        %v833 = vsel %vm312, %v829, 0.0
        %v834 = vrot.slane %v833, 4
        %v835 = vadd.f32 %v833, %v834
        %v836 = vrot.slane %v835, 2
        %v837 = vadd.f32 %v835, %v836
        %v838 = vrot.slane %v837, 1
        %v839 = vadd.f32 %v837, %v838
        %v840 = vsel %vm312, %v830, 0.0
        %v841 = vrot.slane %v840, 4
        %v842 = vadd.f32 %v840, %v841
        %v843 = vrot.slane %v842, 2
        %v844 = vadd.f32 %v842, %v843
        %v845 = vrot.slane %v844, 1
        %v846 = vadd.f32 %v844, %v845
        %vm847 = vmand %vm664, %vm456
        %v850 = vrot.slane %v846, 7
        %v851 = vsel %vm340, %v839, %v850
        %v853 = vsel %vm847, %v851, 0.0
        %s854 = scalar_lea.vmem %s281, 18
        %855 = vst.msk [vmem:[%s854] ss:$8 sm:$0x3] %vm347, %v853
        %856 = vst.msk [vmem:[%s854] ss:$8 sm:$0x0] %vm347, %v853
        %857 = vst [vmem:[#allocation1] ss:$2 sm:$0xff] %v283
        %v858 = vld.sshfl [vmem:[#allocation1] sm:$0xff pattern:$0x75316420]
        %v859 = vld.sshfl [vmem:[#allocation1 + $0x8] sm:$0xff pattern:$0x75316420]
        %862 = vrot.lane.b32.xlu0 %v858, 31
        %v863 = vpop.permute.xlu0 %862
        %864 = vrot.lane.b32.xlu0 %v859, 31
        %v865 = vpop.permute.xlu0 %864
        %vm866 = vcmp.lt.s32.totalorder %v305, 31
        %v867 = vsel %vm866, %v863, %v865
        %v868 = vsel %vm866, %v865, %v863
        %v871 = vrot.slane %v867, 4
        %v872 = vsel %vm312, %v868, %v871
        %v874 = vmul.f32 %v282, %v872
        %876 = vst [vmem:[#allocation1] ss:$2 sm:$0xff] %v874
        %v877 = vld.sshfl [vmem:[#allocation1] sm:$0xff pattern:$0x75316420]
        %v878 = vld.sshfl [vmem:[#allocation1 + $0x8] sm:$0xff pattern:$0x75316420]
        %v881 = vsel %vm312, %v877, 0.0
        %v882 = vrot.slane %v881, 4
        %v883 = vadd.f32 %v881, %v882
        %v884 = vrot.slane %v883, 2
        %v885 = vadd.f32 %v883, %v884
        %v886 = vrot.slane %v885, 1
        %v887 = vadd.f32 %v885, %v886
        %v888 = vsel %vm312, %v878, 0.0
        %v889 = vrot.slane %v888, 4
        %v890 = vadd.f32 %v888, %v889
        %v891 = vrot.slane %v890, 2
        %v892 = vadd.f32 %v890, %v891
        %v893 = vrot.slane %v892, 1
        %v894 = vadd.f32 %v892, %v893
        %vm895 = vmand %vm664, %vm508
        %v898 = vrot.slane %v894, 7
        %v899 = vsel %vm340, %v887, %v898
        %v901 = vsel %vm895, %v899, 0.0
        %s902 = scalar_lea.vmem %s281, 19
        %903 = vst.msk [vmem:[%s902] ss:$8 sm:$0x3] %vm347, %v901
        %904 = vst.msk [vmem:[%s902] ss:$8 sm:$0x0] %vm347, %v901
        %905 = vst [vmem:[#allocation1] ss:$2 sm:$0xff] %v283
        %v906 = vld.sshfl [vmem:[#allocation1] sm:$0xff pattern:$0x75316420]
        %v907 = vld.sshfl [vmem:[#allocation1 + $0x8] sm:$0xff pattern:$0x75316420]
        %910 = vrot.lane.b32.xlu0 %v906, 30
        %v911 = vpop.permute.xlu0 %910
        %912 = vrot.lane.b32.xlu0 %v907, 30
        %v913 = vpop.permute.xlu0 %912
        %vm914 = vcmp.lt.s32.totalorder %v305, 30
        %v915 = vsel %vm914, %v911, %v913
        %v916 = vsel %vm914, %v913, %v911
        %v919 = vrot.slane %v915, 4
        %v920 = vsel %vm312, %v916, %v919
        %v922 = vmul.f32 %v282, %v920
        %924 = vst [vmem:[#allocation1] ss:$2 sm:$0xff] %v922
        %v925 = vld.sshfl [vmem:[#allocation1] sm:$0xff pattern:$0x75316420]
        %v926 = vld.sshfl [vmem:[#allocation1 + $0x8] sm:$0xff pattern:$0x75316420]
        %v929 = vsel %vm312, %v925, 0.0
        %v930 = vrot.slane %v929, 4
        %v931 = vadd.f32 %v929, %v930
        %v932 = vrot.slane %v931, 2
        %v933 = vadd.f32 %v931, %v932
        %v934 = vrot.slane %v933, 1
        %v935 = vadd.f32 %v933, %v934
        %v936 = vsel %vm312, %v926, 0.0
        %v937 = vrot.slane %v936, 4
        %v938 = vadd.f32 %v936, %v937
        %v939 = vrot.slane %v938, 2
        %v940 = vadd.f32 %v938, %v939
        %v941 = vrot.slane %v940, 1
        %v942 = vadd.f32 %v940, %v941
        %vm943 = vmand %vm664, %vm560
        %v946 = vrot.slane %v942, 7
        %v947 = vsel %vm340, %v935, %v946
        %v949 = vsel %vm943, %v947, 0.0
        %s950 = scalar_lea.vmem %s281, 20
        %951 = vst.msk [vmem:[%s950] ss:$8 sm:$0x3] %vm347, %v949
        %952 = vst.msk [vmem:[%s950] ss:$8 sm:$0x0] %vm347, %v949
        %953 = vst [vmem:[#allocation1] ss:$2 sm:$0xff] %v283
        %v954 = vld.sshfl [vmem:[#allocation1] sm:$0xff pattern:$0x75316420]
        %v955 = vld.sshfl [vmem:[#allocation1 + $0x8] sm:$0xff pattern:$0x75316420]
        %958 = vrot.lane.b32.xlu0 %v954, 29
        %v959 = vpop.permute.xlu0 %958
        %960 = vrot.lane.b32.xlu0 %v955, 29
        %v961 = vpop.permute.xlu0 %960
        %vm962 = vcmp.lt.s32.totalorder %v305, 29
        %v963 = vsel %vm962, %v959, %v961
        %v964 = vsel %vm962, %v961, %v959
        %v967 = vrot.slane %v963, 4
        %v968 = vsel %vm312, %v964, %v967
        %v970 = vmul.f32 %v282, %v968
        %972 = vst [vmem:[#allocation1] ss:$2 sm:$0xff] %v970
        %v973 = vld.sshfl [vmem:[#allocation1] sm:$0xff pattern:$0x75316420]
        %v974 = vld.sshfl [vmem:[#allocation1 + $0x8] sm:$0xff pattern:$0x75316420]
        %v977 = vsel %vm312, %v973, 0.0
        %v978 = vrot.slane %v977, 4
        %v979 = vadd.f32 %v977, %v978
        %v980 = vrot.slane %v979, 2
        %v981 = vadd.f32 %v979, %v980
        %v982 = vrot.slane %v981, 1
        %v983 = vadd.f32 %v981, %v982
        %v984 = vsel %vm312, %v974, 0.0
        %v985 = vrot.slane %v984, 4
        %v986 = vadd.f32 %v984, %v985
        %v987 = vrot.slane %v986, 2
        %v988 = vadd.f32 %v986, %v987
        %v989 = vrot.slane %v988, 1
        %v990 = vadd.f32 %v988, %v989
        %vm991 = vmand %vm664, %vm612
        %v994 = vrot.slane %v990, 7
        %v995 = vsel %vm340, %v983, %v994
        %v997 = vsel %vm991, %v995, 0.0
        %s998 = scalar_lea.vmem %s281, 21
        %999 = vst.msk [vmem:[%s998] ss:$8 sm:$0x3] %vm347, %v997
        %1000 = vst.msk [vmem:[%s998] ss:$8 sm:$0x0] %vm347, %v997
        %v1001 = vadd.s32 %v284, 4294967295
        %vm1002 = vcmp.ge.s32.totalorder %v1001, 0
        %vm1003 = vcmp.lt.s32.totalorder %v1001, 16
        %vm1004 = vmand %vm1002, %vm1003
        %1005 = vst [vmem:[#allocation1] ss:$2 sm:$0xff] %v283
        %v1006 = vld.sshfl [vmem:[#allocation1] sm:$0xff pattern:$0x75316420]
        %v1007 = vld.sshfl [vmem:[#allocation1 + $0x8] sm:$0xff pattern:$0x75316420]
        %1010 = vrot.lane.b32.xlu0 %v1006, 19
        %v1011 = vpop.permute.xlu0 %1010
        %1012 = vrot.lane.b32.xlu0 %v1007, 19
        %v1013 = vpop.permute.xlu0 %1012
        %vm1014 = vcmp.lt.s32.totalorder %v305, 19
        %v1015 = vsel %vm1014, %v1011, %v1013
        %v1016 = vsel %vm1014, %v1013, %v1011
        %v1019 = vrot.slane %v1015, 4
        %v1020 = vsel %vm312, %v1016, %v1019
        %v1022 = vmul.f32 %v282, %v1020
        %1024 = vst [vmem:[#allocation1] ss:$2 sm:$0xff] %v1022
        %v1025 = vld.sshfl [vmem:[#allocation1] sm:$0xff pattern:$0x75316420]
        %v1026 = vld.sshfl [vmem:[#allocation1 + $0x8] sm:$0xff pattern:$0x75316420]
        %v1029 = vsel %vm312, %v1025, 0.0
        %v1030 = vrot.slane %v1029, 4
        %v1031 = vadd.f32 %v1029, %v1030
        %v1032 = vrot.slane %v1031, 2
        %v1033 = vadd.f32 %v1031, %v1032
        %v1034 = vrot.slane %v1033, 1
        %v1035 = vadd.f32 %v1033, %v1034
        %v1036 = vsel %vm312, %v1026, 0.0
        %v1037 = vrot.slane %v1036, 4
        %v1038 = vadd.f32 %v1036, %v1037
        %v1039 = vrot.slane %v1038, 2
        %v1040 = vadd.f32 %v1038, %v1039
        %v1041 = vrot.slane %v1040, 1
        %v1042 = vadd.f32 %v1040, %v1041
        %vm1043 = vmand %vm1004, %vm293
        %v1046 = vrot.slane %v1042, 7
        %v1047 = vsel %vm340, %v1035, %v1046
        %v1049 = vsel %vm1043, %v1047, 0.0
        %s1050 = scalar_lea.vmem %s281, 22
        %1051 = vst.msk [vmem:[%s1050] ss:$8 sm:$0x3] %vm347, %v1049
        %1052 = vst.msk [vmem:[%s1050] ss:$8 sm:$0x0] %vm347, %v1049
        %1053 = vst [vmem:[#allocation1] ss:$2 sm:$0xff] %v283
        %v1054 = vld.sshfl [vmem:[#allocation1] sm:$0xff pattern:$0x75316420]
        %v1055 = vld.sshfl [vmem:[#allocation1 + $0x8] sm:$0xff pattern:$0x75316420]
        %1058 = vrot.lane.b32.xlu0 %v1054, 18
        %v1059 = vpop.permute.xlu0 %1058
        %1060 = vrot.lane.b32.xlu0 %v1055, 18
        %v1061 = vpop.permute.xlu0 %1060
        %vm1062 = vcmp.lt.s32.totalorder %v305, 18
        %v1063 = vsel %vm1062, %v1059, %v1061
        %v1064 = vsel %vm1062, %v1061, %v1059
        %v1067 = vrot.slane %v1063, 4
        %v1068 = vsel %vm312, %v1064, %v1067
        %v1070 = vmul.f32 %v282, %v1068
        %1072 = vst [vmem:[#allocation1] ss:$2 sm:$0xff] %v1070
        %v1073 = vld.sshfl [vmem:[#allocation1] sm:$0xff pattern:$0x75316420]
        %v1074 = vld.sshfl [vmem:[#allocation1 + $0x8] sm:$0xff pattern:$0x75316420]
        %v1077 = vsel %vm312, %v1073, 0.0
        %v1078 = vrot.slane %v1077, 4
        %v1079 = vadd.f32 %v1077, %v1078
        %v1080 = vrot.slane %v1079, 2
        %v1081 = vadd.f32 %v1079, %v1080
        %v1082 = vrot.slane %v1081, 1
        %v1083 = vadd.f32 %v1081, %v1082
        %v1084 = vsel %vm312, %v1074, 0.0
        %v1085 = vrot.slane %v1084, 4
        %v1086 = vadd.f32 %v1084, %v1085
        %v1087 = vrot.slane %v1086, 2
        %v1088 = vadd.f32 %v1086, %v1087
        %v1089 = vrot.slane %v1088, 1
        %v1090 = vadd.f32 %v1088, %v1089
        %vm1091 = vmand %vm1004, %vm353
        %v1094 = vrot.slane %v1090, 7
        %v1095 = vsel %vm340, %v1083, %v1094
        %v1097 = vsel %vm1091, %v1095, 0.0
        %s1098 = scalar_lea.vmem %s281, 23
        %1099 = vst.msk [vmem:[%s1098] ss:$8 sm:$0x3] %vm347, %v1097
        %1100 = vst.msk [vmem:[%s1098] ss:$8 sm:$0x0] %vm347, %v1097
        %1101 = vst [vmem:[#allocation1] ss:$2 sm:$0xff] %v283
        %v1102 = vld.sshfl [vmem:[#allocation1] sm:$0xff pattern:$0x75316420]
        %v1103 = vld.sshfl [vmem:[#allocation1 + $0x8] sm:$0xff pattern:$0x75316420]
        %1106 = vrot.lane.b32.xlu0 %v1102, 17
        %v1107 = vpop.permute.xlu0 %1106
        %1108 = vrot.lane.b32.xlu0 %v1103, 17
        %v1109 = vpop.permute.xlu0 %1108
        %vm1110 = vcmp.lt.s32.totalorder %v305, 17
        %v1111 = vsel %vm1110, %v1107, %v1109
        %v1112 = vsel %vm1110, %v1109, %v1107
        %v1115 = vrot.slane %v1111, 4
        %v1116 = vsel %vm312, %v1112, %v1115
        %v1118 = vmul.f32 %v282, %v1116
        %1120 = vst [vmem:[#allocation1] ss:$2 sm:$0xff] %v1118
        %v1121 = vld.sshfl [vmem:[#allocation1] sm:$0xff pattern:$0x75316420]
        %v1122 = vld.sshfl [vmem:[#allocation1 + $0x8] sm:$0xff pattern:$0x75316420]
        %v1125 = vsel %vm312, %v1121, 0.0
        %v1126 = vrot.slane %v1125, 4
        %v1127 = vadd.f32 %v1125, %v1126
        %v1128 = vrot.slane %v1127, 2
        %v1129 = vadd.f32 %v1127, %v1128
        %v1130 = vrot.slane %v1129, 1
        %v1131 = vadd.f32 %v1129, %v1130
        %v1132 = vsel %vm312, %v1122, 0.0
        %v1133 = vrot.slane %v1132, 4
        %v1134 = vadd.f32 %v1132, %v1133
        %v1135 = vrot.slane %v1134, 2
        %v1136 = vadd.f32 %v1134, %v1135
        %v1137 = vrot.slane %v1136, 1
        %v1138 = vadd.f32 %v1136, %v1137
        %vm1139 = vmand %vm1004, %vm405
        %v1142 = vrot.slane %v1138, 7
        %v1143 = vsel %vm340, %v1131, %v1142
        %v1145 = vsel %vm1139, %v1143, 0.0
        %s1146 = scalar_lea.vmem %s281, 32
        %1147 = vst.msk [vmem:[%s1146] ss:$8 sm:$0x3] %vm347, %v1145
        %1148 = vst.msk [vmem:[%s1146] ss:$8 sm:$0x0] %vm347, %v1145
        %1149 = vst [vmem:[#allocation1] ss:$2 sm:$0xff] %v283
        %v1150 = vld.sshfl [vmem:[#allocation1] sm:$0xff pattern:$0x75316420]
        %v1151 = vld.sshfl [vmem:[#allocation1 + $0x8] sm:$0xff pattern:$0x75316420]
        %1154 = vrot.lane.b32.xlu0 %v1150, 16
        %v1155 = vpop.permute.xlu0 %1154
        %1156 = vrot.lane.b32.xlu0 %v1151, 16
        %v1157 = vpop.permute.xlu0 %1156
        %vm1158 = vcmp.lt.s32.totalorder %v305, 16
        %v1159 = vsel %vm1158, %v1155, %v1157
        %v1160 = vsel %vm1158, %v1157, %v1155
        %v1163 = vrot.slane %v1159, 4
        %v1164 = vsel %vm312, %v1160, %v1163
        %v1166 = vmul.f32 %v282, %v1164
        %1168 = vst [vmem:[#allocation1] ss:$2 sm:$0xff] %v1166
        %v1169 = vld.sshfl [vmem:[#allocation1] sm:$0xff pattern:$0x75316420]
        %v1170 = vld.sshfl [vmem:[#allocation1 + $0x8] sm:$0xff pattern:$0x75316420]
        %v1173 = vsel %vm312, %v1169, 0.0
        %v1174 = vrot.slane %v1173, 4
        %v1175 = vadd.f32 %v1173, %v1174
        %v1176 = vrot.slane %v1175, 2
        %v1177 = vadd.f32 %v1175, %v1176
        %v1178 = vrot.slane %v1177, 1
        %v1179 = vadd.f32 %v1177, %v1178
        %v1180 = vsel %vm312, %v1170, 0.0
        %v1181 = vrot.slane %v1180, 4
        %v1182 = vadd.f32 %v1180, %v1181
        %v1183 = vrot.slane %v1182, 2
        %v1184 = vadd.f32 %v1182, %v1183
        %v1185 = vrot.slane %v1184, 1
        %v1186 = vadd.f32 %v1184, %v1185
        %vm1187 = vmand %vm1004, %vm456
        %v1190 = vrot.slane %v1186, 7
        %v1191 = vsel %vm340, %v1179, %v1190
        %v1193 = vsel %vm1187, %v1191, 0.0
        %s1194 = scalar_lea.vmem %s281, 33
        %1195 = vst.msk [vmem:[%s1194] ss:$8 sm:$0x3] %vm347, %v1193
        %1196 = vst.msk [vmem:[%s1194] ss:$8 sm:$0x0] %vm347, %v1193
        %1197 = vst [vmem:[#allocation1] ss:$2 sm:$0xff] %v283
        %v1198 = vld.sshfl [vmem:[#allocation1] sm:$0xff pattern:$0x75316420]
        %v1199 = vld.sshfl [vmem:[#allocation1 + $0x8] sm:$0xff pattern:$0x75316420]
        %1202 = vrot.lane.b32.xlu0 %v1198, 15
        %v1203 = vpop.permute.xlu0 %1202
        %1204 = vrot.lane.b32.xlu0 %v1199, 15
        %v1205 = vpop.permute.xlu0 %1204
        %vm1206 = vcmp.lt.s32.totalorder %v305, 15
        %v1207 = vsel %vm1206, %v1203, %v1205
        %v1208 = vsel %vm1206, %v1205, %v1203
        %v1211 = vrot.slane %v1207, 4
        %v1212 = vsel %vm312, %v1208, %v1211
        %v1214 = vmul.f32 %v282, %v1212
        %1216 = vst [vmem:[#allocation1] ss:$2 sm:$0xff] %v1214
        %v1217 = vld.sshfl [vmem:[#allocation1] sm:$0xff pattern:$0x75316420]
        %v1218 = vld.sshfl [vmem:[#allocation1 + $0x8] sm:$0xff pattern:$0x75316420]
        %v1221 = vsel %vm312, %v1217, 0.0
        %v1222 = vrot.slane %v1221, 4
        %v1223 = vadd.f32 %v1221, %v1222
        %v1224 = vrot.slane %v1223, 2
        %v1225 = vadd.f32 %v1223, %v1224
        %v1226 = vrot.slane %v1225, 1
        %v1227 = vadd.f32 %v1225, %v1226
        %v1228 = vsel %vm312, %v1218, 0.0
        %v1229 = vrot.slane %v1228, 4
        %v1230 = vadd.f32 %v1228, %v1229
        %v1231 = vrot.slane %v1230, 2
        %v1232 = vadd.f32 %v1230, %v1231
        %v1233 = vrot.slane %v1232, 1
        %v1234 = vadd.f32 %v1232, %v1233
        %vm1235 = vmand %vm1004, %vm508
        %v1238 = vrot.slane %v1234, 7
        %v1239 = vsel %vm340, %v1227, %v1238
        %v1241 = vsel %vm1235, %v1239, 0.0
        %s1242 = scalar_lea.vmem %s281, 34
        %1243 = vst.msk [vmem:[%s1242] ss:$8 sm:$0x3] %vm347, %v1241
        %1244 = vst.msk [vmem:[%s1242] ss:$8 sm:$0x0] %vm347, %v1241
        %1245 = vst [vmem:[#allocation1] ss:$2 sm:$0xff] %v283
        %v1246 = vld.sshfl [vmem:[#allocation1] sm:$0xff pattern:$0x75316420]
        %v1247 = vld.sshfl [vmem:[#allocation1 + $0x8] sm:$0xff pattern:$0x75316420]
        %1250 = vrot.lane.b32.xlu0 %v1246, 14
        %v1251 = vpop.permute.xlu0 %1250
        %1252 = vrot.lane.b32.xlu0 %v1247, 14
        %v1253 = vpop.permute.xlu0 %1252
        %vm1254 = vcmp.lt.s32.totalorder %v305, 14
        %v1255 = vsel %vm1254, %v1251, %v1253
        %v1256 = vsel %vm1254, %v1253, %v1251
        %v1259 = vrot.slane %v1255, 4
        %v1260 = vsel %vm312, %v1256, %v1259
        %v1262 = vmul.f32 %v282, %v1260
        %1264 = vst [vmem:[#allocation1] ss:$2 sm:$0xff] %v1262
        %v1265 = vld.sshfl [vmem:[#allocation1] sm:$0xff pattern:$0x75316420]
        %v1266 = vld.sshfl [vmem:[#allocation1 + $0x8] sm:$0xff pattern:$0x75316420]
        %v1269 = vsel %vm312, %v1265, 0.0
        %v1270 = vrot.slane %v1269, 4
        %v1271 = vadd.f32 %v1269, %v1270
        %v1272 = vrot.slane %v1271, 2
        %v1273 = vadd.f32 %v1271, %v1272
        %v1274 = vrot.slane %v1273, 1
        %v1275 = vadd.f32 %v1273, %v1274
        %v1276 = vsel %vm312, %v1266, 0.0
        %v1277 = vrot.slane %v1276, 4
        %v1278 = vadd.f32 %v1276, %v1277
        %v1279 = vrot.slane %v1278, 2
        %v1280 = vadd.f32 %v1278, %v1279
        %v1281 = vrot.slane %v1280, 1
        %v1282 = vadd.f32 %v1280, %v1281
        %vm1283 = vmand %vm1004, %vm560
        %v1286 = vrot.slane %v1282, 7
        %v1287 = vsel %vm340, %v1275, %v1286
        %v1289 = vsel %vm1283, %v1287, 0.0
        %s1290 = scalar_lea.vmem %s281, 35
        %1291 = vst.msk [vmem:[%s1290] ss:$8 sm:$0x3] %vm347, %v1289
        %1292 = vst.msk [vmem:[%s1290] ss:$8 sm:$0x0] %vm347, %v1289
        %1293 = vst [vmem:[#allocation1] ss:$2 sm:$0xff] %v283
        %v1294 = vld.sshfl [vmem:[#allocation1] sm:$0xff pattern:$0x75316420]
        %v1295 = vld.sshfl [vmem:[#allocation1 + $0x8] sm:$0xff pattern:$0x75316420]
        %1298 = vrot.lane.b32.xlu0 %v1294, 13
        %v1299 = vpop.permute.xlu0 %1298
        %1300 = vrot.lane.b32.xlu0 %v1295, 13
        %v1301 = vpop.permute.xlu0 %1300
        %vm1302 = vcmp.lt.s32.totalorder %v305, 13
        %v1303 = vsel %vm1302, %v1299, %v1301
        %v1304 = vsel %vm1302, %v1301, %v1299
        %v1307 = vrot.slane %v1303, 4
        %v1308 = vsel %vm312, %v1304, %v1307
        %v1310 = vmul.f32 %v282, %v1308
        %1312 = vst [vmem:[#allocation1] ss:$2 sm:$0xff] %v1310
        %v1313 = vld.sshfl [vmem:[#allocation1] sm:$0xff pattern:$0x75316420]
        %v1314 = vld.sshfl [vmem:[#allocation1 + $0x8] sm:$0xff pattern:$0x75316420]
        %v1317 = vsel %vm312, %v1313, 0.0
        %v1318 = vrot.slane %v1317, 4
        %v1319 = vadd.f32 %v1317, %v1318
        %v1320 = vrot.slane %v1319, 2
        %v1321 = vadd.f32 %v1319, %v1320
        %v1322 = vrot.slane %v1321, 1
        %v1323 = vadd.f32 %v1321, %v1322
        %v1324 = vsel %vm312, %v1314, 0.0
        %v1325 = vrot.slane %v1324, 4
        %v1326 = vadd.f32 %v1324, %v1325
        %v1327 = vrot.slane %v1326, 2
        %v1328 = vadd.f32 %v1326, %v1327
        %v1329 = vrot.slane %v1328, 1
        %v1330 = vadd.f32 %v1328, %v1329
        %vm1331 = vmand %vm1004, %vm612
        %v1334 = vrot.slane %v1330, 7
        %v1335 = vsel %vm340, %v1323, %v1334
        %v1337 = vsel %vm1331, %v1335, 0.0
        %s1338 = scalar_lea.vmem %s281, 36
        %1339 = vst.msk [vmem:[%s1338] ss:$8 sm:$0x3] %vm347, %v1337
        %1340 = vst.msk [vmem:[%s1338] ss:$8 sm:$0x0] %vm347, %v1337
        %vm1341 = vcmp.ge.s32.totalorder %v284, 0
        %vm1342 = vcmp.lt.s32.totalorder %v284, 16
        %vm1343 = vmand %vm1341, %vm1342
        %1344 = vst [vmem:[#allocation1] ss:$2 sm:$0xff] %v283
        %v1345 = vld.sshfl [vmem:[#allocation1] sm:$0xff pattern:$0x75316420]
        %v1346 = vld.sshfl [vmem:[#allocation1 + $0x8] sm:$0xff pattern:$0x75316420]
        %1349 = vrot.lane.b32.xlu0 %v1345, 3
        %v1350 = vpop.permute.xlu0 %1349
        %1351 = vrot.lane.b32.xlu0 %v1346, 3
        %v1352 = vpop.permute.xlu0 %1351
        %vm1353 = vcmp.lt.s32.totalorder %v305, 3
        %v1354 = vsel %vm1353, %v1350, %v1352
        %v1355 = vsel %vm1353, %v1352, %v1350
        %v1358 = vrot.slane %v1354, 4
        %v1359 = vsel %vm312, %v1355, %v1358
        %v1361 = vmul.f32 %v282, %v1359
        %1363 = vst [vmem:[#allocation1] ss:$2 sm:$0xff] %v1361
        %v1364 = vld.sshfl [vmem:[#allocation1] sm:$0xff pattern:$0x75316420]
        %v1365 = vld.sshfl [vmem:[#allocation1 + $0x8] sm:$0xff pattern:$0x75316420]
        %v1368 = vsel %vm312, %v1364, 0.0
        %v1369 = vrot.slane %v1368, 4
        %v1370 = vadd.f32 %v1368, %v1369
        %v1371 = vrot.slane %v1370, 2
        %v1372 = vadd.f32 %v1370, %v1371
        %v1373 = vrot.slane %v1372, 1
        %v1374 = vadd.f32 %v1372, %v1373
        %v1375 = vsel %vm312, %v1365, 0.0
        %v1376 = vrot.slane %v1375, 4
        %v1377 = vadd.f32 %v1375, %v1376
        %v1378 = vrot.slane %v1377, 2
        %v1379 = vadd.f32 %v1377, %v1378
        %v1380 = vrot.slane %v1379, 1
        %v1381 = vadd.f32 %v1379, %v1380
        %vm1382 = vmand %vm1343, %vm293
        %v1385 = vrot.slane %v1381, 7
        %v1386 = vsel %vm340, %v1374, %v1385
        %v1388 = vsel %vm1382, %v1386, 0.0
        %s1389 = scalar_lea.vmem %s281, 37
        %1390 = vst.msk [vmem:[%s1389] ss:$8 sm:$0x3] %vm347, %v1388
        %1391 = vst.msk [vmem:[%s1389] ss:$8 sm:$0x0] %vm347, %v1388
        %1392 = vst [vmem:[#allocation1] ss:$2 sm:$0xff] %v283
        %v1393 = vld.sshfl [vmem:[#allocation1] sm:$0xff pattern:$0x75316420]
        %v1394 = vld.sshfl [vmem:[#allocation1 + $0x8] sm:$0xff pattern:$0x75316420]
        %1397 = vrot.lane.b32.xlu0 %v1393, 2
        %v1398 = vpop.permute.xlu0 %1397
        %1399 = vrot.lane.b32.xlu0 %v1394, 2
        %v1400 = vpop.permute.xlu0 %1399
        %vm1401 = vcmp.lt.s32.totalorder %v305, 2
        %v1402 = vsel %vm1401, %v1398, %v1400
        %v1403 = vsel %vm1401, %v1400, %v1398
        %v1406 = vrot.slane %v1402, 4
        %v1407 = vsel %vm312, %v1403, %v1406
        %v1409 = vmul.f32 %v282, %v1407
        %1411 = vst [vmem:[#allocation1] ss:$2 sm:$0xff] %v1409
        %v1412 = vld.sshfl [vmem:[#allocation1] sm:$0xff pattern:$0x75316420]
        %v1413 = vld.sshfl [vmem:[#allocation1 + $0x8] sm:$0xff pattern:$0x75316420]
        %v1416 = vsel %vm312, %v1412, 0.0
        %v1417 = vrot.slane %v1416, 4
        %v1418 = vadd.f32 %v1416, %v1417
        %v1419 = vrot.slane %v1418, 2
        %v1420 = vadd.f32 %v1418, %v1419
        %v1421 = vrot.slane %v1420, 1
        %v1422 = vadd.f32 %v1420, %v1421
        %v1423 = vsel %vm312, %v1413, 0.0
        %v1424 = vrot.slane %v1423, 4
        %v1425 = vadd.f32 %v1423, %v1424
        %v1426 = vrot.slane %v1425, 2
        %v1427 = vadd.f32 %v1425, %v1426
        %v1428 = vrot.slane %v1427, 1
        %v1429 = vadd.f32 %v1427, %v1428
        %vm1430 = vmand %vm1343, %vm353
        %v1433 = vrot.slane %v1429, 7
        %v1434 = vsel %vm340, %v1422, %v1433
        %v1436 = vsel %vm1430, %v1434, 0.0
        %s1437 = scalar_lea.vmem %s281, 38
        %1438 = vst.msk [vmem:[%s1437] ss:$8 sm:$0x3] %vm347, %v1436
        %1439 = vst.msk [vmem:[%s1437] ss:$8 sm:$0x0] %vm347, %v1436
        %1440 = vst [vmem:[#allocation1] ss:$2 sm:$0xff] %v283
        %v1441 = vld.sshfl [vmem:[#allocation1] sm:$0xff pattern:$0x75316420]
        %v1442 = vld.sshfl [vmem:[#allocation1 + $0x8] sm:$0xff pattern:$0x75316420]
        %1445 = vrot.lane.b32.xlu0 %v1441, 1
        %v1446 = vpop.permute.xlu0 %1445
        %1447 = vrot.lane.b32.xlu0 %v1442, 1
        %v1448 = vpop.permute.xlu0 %1447
        %vm1449 = vcmp.lt.s32.totalorder %v305, 1
        %v1450 = vsel %vm1449, %v1446, %v1448
        %v1451 = vsel %vm1449, %v1448, %v1446
        %v1454 = vrot.slane %v1450, 4
        %v1455 = vsel %vm312, %v1451, %v1454
        %v1457 = vmul.f32 %v282, %v1455
        %1459 = vst [vmem:[#allocation1] ss:$2 sm:$0xff] %v1457
        %v1460 = vld.sshfl [vmem:[#allocation1] sm:$0xff pattern:$0x75316420]
        %v1461 = vld.sshfl [vmem:[#allocation1 + $0x8] sm:$0xff pattern:$0x75316420]
        %v1464 = vsel %vm312, %v1460, 0.0
        %v1465 = vrot.slane %v1464, 4
        %v1466 = vadd.f32 %v1464, %v1465
        %v1467 = vrot.slane %v1466, 2
        %v1468 = vadd.f32 %v1466, %v1467
        %v1469 = vrot.slane %v1468, 1
        %v1470 = vadd.f32 %v1468, %v1469
        %v1471 = vsel %vm312, %v1461, 0.0
        %v1472 = vrot.slane %v1471, 4
        %v1473 = vadd.f32 %v1471, %v1472
        %v1474 = vrot.slane %v1473, 2
        %v1475 = vadd.f32 %v1473, %v1474
        %v1476 = vrot.slane %v1475, 1
        %v1477 = vadd.f32 %v1475, %v1476
        %vm1478 = vmand %vm1343, %vm405
        %v1481 = vrot.slane %v1477, 7
        %v1482 = vsel %vm340, %v1470, %v1481
        %v1484 = vsel %vm1478, %v1482, 0.0
        %s1485 = scalar_lea.vmem %s281, 39
        %1486 = vst.msk [vmem:[%s1485] ss:$8 sm:$0x3] %vm347, %v1484
        %1487 = vst.msk [vmem:[%s1485] ss:$8 sm:$0x0] %vm347, %v1484
        %v1488 = vmul.f32 %v282, %v283
        %1490 = vst [vmem:[#allocation1] ss:$2 sm:$0xff] %v1488
        %v1491 = vld.sshfl [vmem:[#allocation1] sm:$0xff pattern:$0x75316420]
        %v1492 = vld.sshfl [vmem:[#allocation1 + $0x8] sm:$0xff pattern:$0x75316420]
        %v1495 = vsel %vm312, %v1491, 0.0
        %v1496 = vrot.slane %v1495, 4
        %v1497 = vadd.f32 %v1495, %v1496
        %v1498 = vrot.slane %v1497, 2
        %v1499 = vadd.f32 %v1497, %v1498
        %v1500 = vrot.slane %v1499, 1
        %v1501 = vadd.f32 %v1499, %v1500
        %v1502 = vsel %vm312, %v1492, 0.0
        %v1503 = vrot.slane %v1502, 4
        %v1504 = vadd.f32 %v1502, %v1503
        %v1505 = vrot.slane %v1504, 2
        %v1506 = vadd.f32 %v1504, %v1505
        %v1507 = vrot.slane %v1506, 1
        %v1508 = vadd.f32 %v1506, %v1507
        %vm1509 = vmand %vm1343, %vm456
        %v1512 = vrot.slane %v1508, 7
        %v1513 = vsel %vm340, %v1501, %v1512
        %v1515 = vsel %vm1509, %v1513, 0.0
        %s1516 = scalar_lea.vmem %s281, 48
        %1517 = vst.msk [vmem:[%s1516] ss:$8 sm:$0x3] %vm347, %v1515
        %1518 = vst.msk [vmem:[%s1516] ss:$8 sm:$0x0] %vm347, %v1515
        %1519 = vst [vmem:[#allocation1] ss:$2 sm:$0xff] %v283
        %v1520 = vld.sshfl [vmem:[#allocation1] sm:$0xff pattern:$0x75316420]
        %v1521 = vld.sshfl [vmem:[#allocation1 + $0x8] sm:$0xff pattern:$0x75316420]
        %1524 = vrot.lane.b32.xlu0 %v1520, 127
        %v1525 = vpop.permute.xlu0 %1524
        %1526 = vrot.lane.b32.xlu0 %v1521, 127
        %v1527 = vpop.permute.xlu0 %1526
        %vm1528 = vcmp.lt.s32.totalorder %v305, 127
        %v1529 = vsel %vm1528, %v1525, %v1527
        %v1530 = vsel %vm1528, %v1527, %v1525
        %v1533 = vrot.slane %v1530, 4
        %v1534 = vsel %vm312, %v1529, %v1533
        %v1536 = vmul.f32 %v282, %v1534
        %1538 = vst [vmem:[#allocation1] ss:$2 sm:$0xff] %v1536
        %v1539 = vld.sshfl [vmem:[#allocation1] sm:$0xff pattern:$0x75316420]
        %v1540 = vld.sshfl [vmem:[#allocation1 + $0x8] sm:$0xff pattern:$0x75316420]
        %v1543 = vsel %vm312, %v1539, 0.0
        %v1544 = vrot.slane %v1543, 4
        %v1545 = vadd.f32 %v1543, %v1544
        %v1546 = vrot.slane %v1545, 2
        %v1547 = vadd.f32 %v1545, %v1546
        %v1548 = vrot.slane %v1547, 1
        %v1549 = vadd.f32 %v1547, %v1548
        %v1550 = vsel %vm312, %v1540, 0.0
        %v1551 = vrot.slane %v1550, 4
        %v1552 = vadd.f32 %v1550, %v1551
        %v1553 = vrot.slane %v1552, 2
        %v1554 = vadd.f32 %v1552, %v1553
        %v1555 = vrot.slane %v1554, 1
        %v1556 = vadd.f32 %v1554, %v1555
        %vm1557 = vmand %vm1343, %vm508
        %v1560 = vrot.slane %v1556, 7
        %v1561 = vsel %vm340, %v1549, %v1560
        %v1563 = vsel %vm1557, %v1561, 0.0
        %s1564 = scalar_lea.vmem %s281, 49
        %1565 = vst.msk [vmem:[%s1564] ss:$8 sm:$0x3] %vm347, %v1563
        %1566 = vst.msk [vmem:[%s1564] ss:$8 sm:$0x0] %vm347, %v1563
        %1567 = vst [vmem:[#allocation1] ss:$2 sm:$0xff] %v283
        %v1568 = vld.sshfl [vmem:[#allocation1] sm:$0xff pattern:$0x75316420]
        %v1569 = vld.sshfl [vmem:[#allocation1 + $0x8] sm:$0xff pattern:$0x75316420]
        %1572 = vrot.lane.b32.xlu0 %v1568, 126
        %v1573 = vpop.permute.xlu0 %1572
        %1574 = vrot.lane.b32.xlu0 %v1569, 126
        %v1575 = vpop.permute.xlu0 %1574
        %vm1576 = vcmp.lt.s32.totalorder %v305, 126
        %v1577 = vsel %vm1576, %v1573, %v1575
        %v1578 = vsel %vm1576, %v1575, %v1573
        %v1581 = vrot.slane %v1578, 4
        %v1582 = vsel %vm312, %v1577, %v1581
        %v1584 = vmul.f32 %v282, %v1582
        %1586 = vst [vmem:[#allocation1] ss:$2 sm:$0xff] %v1584
        %v1587 = vld.sshfl [vmem:[#allocation1] sm:$0xff pattern:$0x75316420]
        %v1588 = vld.sshfl [vmem:[#allocation1 + $0x8] sm:$0xff pattern:$0x75316420]
        %v1591 = vsel %vm312, %v1587, 0.0
        %v1592 = vrot.slane %v1591, 4
        %v1593 = vadd.f32 %v1591, %v1592
        %v1594 = vrot.slane %v1593, 2
        %v1595 = vadd.f32 %v1593, %v1594
        %v1596 = vrot.slane %v1595, 1
        %v1597 = vadd.f32 %v1595, %v1596
        %v1598 = vsel %vm312, %v1588, 0.0
        %v1599 = vrot.slane %v1598, 4
        %v1600 = vadd.f32 %v1598, %v1599
        %v1601 = vrot.slane %v1600, 2
        %v1602 = vadd.f32 %v1600, %v1601
        %v1603 = vrot.slane %v1602, 1
        %v1604 = vadd.f32 %v1602, %v1603
        %vm1605 = vmand %vm1343, %vm560
        %v1608 = vrot.slane %v1604, 7
        %v1609 = vsel %vm340, %v1597, %v1608
        %v1611 = vsel %vm1605, %v1609, 0.0
        %s1612 = scalar_lea.vmem %s281, 50
        %1613 = vst.msk [vmem:[%s1612] ss:$8 sm:$0x3] %vm347, %v1611
        %1614 = vst.msk [vmem:[%s1612] ss:$8 sm:$0x0] %vm347, %v1611
        %1615 = vst [vmem:[#allocation1] ss:$2 sm:$0xff] %v283
        %v1616 = vld.sshfl [vmem:[#allocation1] sm:$0xff pattern:$0x75316420]
        %v1617 = vld.sshfl [vmem:[#allocation1 + $0x8] sm:$0xff pattern:$0x75316420]
        %1620 = vrot.lane.b32.xlu0 %v1616, 125
        %v1621 = vpop.permute.xlu0 %1620
        %1622 = vrot.lane.b32.xlu0 %v1617, 125
        %v1623 = vpop.permute.xlu0 %1622
        %vm1624 = vcmp.lt.s32.totalorder %v305, 125
        %v1625 = vsel %vm1624, %v1621, %v1623
        %v1626 = vsel %vm1624, %v1623, %v1621
        %v1629 = vrot.slane %v1626, 4
        %v1630 = vsel %vm312, %v1625, %v1629
        %v1632 = vmul.f32 %v282, %v1630
        %1634 = vst [vmem:[#allocation1] ss:$2 sm:$0xff] %v1632
        %v1635 = vld.sshfl [vmem:[#allocation1] sm:$0xff pattern:$0x75316420]
        %v1636 = vld.sshfl [vmem:[#allocation1 + $0x8] sm:$0xff pattern:$0x75316420]
        %v1639 = vsel %vm312, %v1635, 0.0
        %v1640 = vrot.slane %v1639, 4
        %v1641 = vadd.f32 %v1639, %v1640
        %v1642 = vrot.slane %v1641, 2
        %v1643 = vadd.f32 %v1641, %v1642
        %v1644 = vrot.slane %v1643, 1
        %v1645 = vadd.f32 %v1643, %v1644
        %v1646 = vsel %vm312, %v1636, 0.0
        %v1647 = vrot.slane %v1646, 4
        %v1648 = vadd.f32 %v1646, %v1647
        %v1649 = vrot.slane %v1648, 2
        %v1650 = vadd.f32 %v1648, %v1649
        %v1651 = vrot.slane %v1650, 1
        %v1652 = vadd.f32 %v1650, %v1651
        %vm1653 = vmand %vm1343, %vm612
        %v1656 = vrot.slane %v1652, 7
        %v1657 = vsel %vm340, %v1645, %v1656
        %v1659 = vsel %vm1653, %v1657, 0.0
        %s1660 = scalar_lea.vmem %s281, 51
        %1661 = vst.msk [vmem:[%s1660] ss:$8 sm:$0x3] %vm347, %v1659
        %1662 = vst.msk [vmem:[%s1660] ss:$8 sm:$0x0] %vm347, %v1659
        %v1663 = vadd.s32 %v284, 1
        %vm1664 = vcmp.ge.s32.totalorder %v1663, 0
        %vm1665 = vcmp.lt.s32.totalorder %v1663, 16
        %vm1666 = vmand %vm1664, %vm1665
        %1667 = vst [vmem:[#allocation1] ss:$2 sm:$0xff] %v283
        %v1668 = vld.sshfl [vmem:[#allocation1] sm:$0xff pattern:$0x75316420]
        %v1669 = vld.sshfl [vmem:[#allocation1 + $0x8] sm:$0xff pattern:$0x75316420]
        %1672 = vrot.lane.b32.xlu0 %v1668, 115
        %v1673 = vpop.permute.xlu0 %1672
        %1674 = vrot.lane.b32.xlu0 %v1669, 115
        %v1675 = vpop.permute.xlu0 %1674
        %vm1676 = vcmp.lt.s32.totalorder %v305, 115
        %v1677 = vsel %vm1676, %v1673, %v1675
        %v1678 = vsel %vm1676, %v1675, %v1673
        %v1681 = vrot.slane %v1678, 4
        %v1682 = vsel %vm312, %v1677, %v1681
        %v1684 = vmul.f32 %v282, %v1682
        %1686 = vst [vmem:[#allocation1] ss:$2 sm:$0xff] %v1684
        %v1687 = vld.sshfl [vmem:[#allocation1] sm:$0xff pattern:$0x75316420]
        %v1688 = vld.sshfl [vmem:[#allocation1 + $0x8] sm:$0xff pattern:$0x75316420]
        %v1691 = vsel %vm312, %v1687, 0.0
        %v1692 = vrot.slane %v1691, 4
        %v1693 = vadd.f32 %v1691, %v1692
        %v1694 = vrot.slane %v1693, 2
        %v1695 = vadd.f32 %v1693, %v1694
        %v1696 = vrot.slane %v1695, 1
        %v1697 = vadd.f32 %v1695, %v1696
        %v1698 = vsel %vm312, %v1688, 0.0
        %v1699 = vrot.slane %v1698, 4
        %v1700 = vadd.f32 %v1698, %v1699
        %v1701 = vrot.slane %v1700, 2
        %v1702 = vadd.f32 %v1700, %v1701
        %v1703 = vrot.slane %v1702, 1
        %v1704 = vadd.f32 %v1702, %v1703
        %vm1705 = vmand %vm1666, %vm293
        %v1708 = vrot.slane %v1704, 7
        %v1709 = vsel %vm340, %v1697, %v1708
        %v1711 = vsel %vm1705, %v1709, 0.0
        %s1712 = scalar_lea.vmem %s281, 52
        %1713 = vst.msk [vmem:[%s1712] ss:$8 sm:$0x3] %vm347, %v1711
        %1714 = vst.msk [vmem:[%s1712] ss:$8 sm:$0x0] %vm347, %v1711
        %1715 = vst [vmem:[#allocation1] ss:$2 sm:$0xff] %v283
        %v1716 = vld.sshfl [vmem:[#allocation1] sm:$0xff pattern:$0x75316420]
        %v1717 = vld.sshfl [vmem:[#allocation1 + $0x8] sm:$0xff pattern:$0x75316420]
        %1720 = vrot.lane.b32.xlu0 %v1716, 114
        %v1721 = vpop.permute.xlu0 %1720
        %1722 = vrot.lane.b32.xlu0 %v1717, 114
        %v1723 = vpop.permute.xlu0 %1722
        %vm1724 = vcmp.lt.s32.totalorder %v305, 114
        %v1725 = vsel %vm1724, %v1721, %v1723
        %v1726 = vsel %vm1724, %v1723, %v1721
        %v1729 = vrot.slane %v1726, 4
        %v1730 = vsel %vm312, %v1725, %v1729
        %v1732 = vmul.f32 %v282, %v1730
        %1734 = vst [vmem:[#allocation1] ss:$2 sm:$0xff] %v1732
        %v1735 = vld.sshfl [vmem:[#allocation1] sm:$0xff pattern:$0x75316420]
        %v1736 = vld.sshfl [vmem:[#allocation1 + $0x8] sm:$0xff pattern:$0x75316420]
        %v1739 = vsel %vm312, %v1735, 0.0
        %v1740 = vrot.slane %v1739, 4
        %v1741 = vadd.f32 %v1739, %v1740
        %v1742 = vrot.slane %v1741, 2
        %v1743 = vadd.f32 %v1741, %v1742
        %v1744 = vrot.slane %v1743, 1
        %v1745 = vadd.f32 %v1743, %v1744
        %v1746 = vsel %vm312, %v1736, 0.0
        %v1747 = vrot.slane %v1746, 4
        %v1748 = vadd.f32 %v1746, %v1747
        %v1749 = vrot.slane %v1748, 2
        %v1750 = vadd.f32 %v1748, %v1749
        %v1751 = vrot.slane %v1750, 1
        %v1752 = vadd.f32 %v1750, %v1751
        %vm1753 = vmand %vm1666, %vm353
        %v1756 = vrot.slane %v1752, 7
        %v1757 = vsel %vm340, %v1745, %v1756
        %v1759 = vsel %vm1753, %v1757, 0.0
        %s1760 = scalar_lea.vmem %s281, 53
        %1761 = vst.msk [vmem:[%s1760] ss:$8 sm:$0x3] %vm347, %v1759
        %1762 = vst.msk [vmem:[%s1760] ss:$8 sm:$0x0] %vm347, %v1759
        %1763 = vst [vmem:[#allocation1] ss:$2 sm:$0xff] %v283
        %v1764 = vld.sshfl [vmem:[#allocation1] sm:$0xff pattern:$0x75316420]
        %v1765 = vld.sshfl [vmem:[#allocation1 + $0x8] sm:$0xff pattern:$0x75316420]
        %1768 = vrot.lane.b32.xlu0 %v1764, 113
        %v1769 = vpop.permute.xlu0 %1768
        %1770 = vrot.lane.b32.xlu0 %v1765, 113
        %v1771 = vpop.permute.xlu0 %1770
        %vm1772 = vcmp.lt.s32.totalorder %v305, 113
        %v1773 = vsel %vm1772, %v1769, %v1771
        %v1774 = vsel %vm1772, %v1771, %v1769
        %v1777 = vrot.slane %v1774, 4
        %v1778 = vsel %vm312, %v1773, %v1777
        %v1780 = vmul.f32 %v282, %v1778
        %1782 = vst [vmem:[#allocation1] ss:$2 sm:$0xff] %v1780
        %v1783 = vld.sshfl [vmem:[#allocation1] sm:$0xff pattern:$0x75316420]
        %v1784 = vld.sshfl [vmem:[#allocation1 + $0x8] sm:$0xff pattern:$0x75316420]
        %v1787 = vsel %vm312, %v1783, 0.0
        %v1788 = vrot.slane %v1787, 4
        %v1789 = vadd.f32 %v1787, %v1788
        %v1790 = vrot.slane %v1789, 2
        %v1791 = vadd.f32 %v1789, %v1790
        %v1792 = vrot.slane %v1791, 1
        %v1793 = vadd.f32 %v1791, %v1792
        %v1794 = vsel %vm312, %v1784, 0.0
        %v1795 = vrot.slane %v1794, 4
        %v1796 = vadd.f32 %v1794, %v1795
        %v1797 = vrot.slane %v1796, 2
        %v1798 = vadd.f32 %v1796, %v1797
        %v1799 = vrot.slane %v1798, 1
        %v1800 = vadd.f32 %v1798, %v1799
        %vm1801 = vmand %vm1666, %vm405
        %v1804 = vrot.slane %v1800, 7
        %v1805 = vsel %vm340, %v1793, %v1804
        %v1807 = vsel %vm1801, %v1805, 0.0
        %s1808 = scalar_lea.vmem %s281, 54
        %1809 = vst.msk [vmem:[%s1808] ss:$8 sm:$0x3] %vm347, %v1807
        %1810 = vst.msk [vmem:[%s1808] ss:$8 sm:$0x0] %vm347, %v1807
        %1811 = vst [vmem:[#allocation1] ss:$2 sm:$0xff] %v283
        %v1812 = vld.sshfl [vmem:[#allocation1] sm:$0xff pattern:$0x75316420]
        %v1813 = vld.sshfl [vmem:[#allocation1 + $0x8] sm:$0xff pattern:$0x75316420]
        %1816 = vrot.lane.b32.xlu0 %v1812, 112
        %v1817 = vpop.permute.xlu0 %1816
        %1818 = vrot.lane.b32.xlu0 %v1813, 112
        %v1819 = vpop.permute.xlu0 %1818
        %vm1820 = vcmp.lt.s32.totalorder %v305, 112
        %v1821 = vsel %vm1820, %v1817, %v1819
        %v1822 = vsel %vm1820, %v1819, %v1817
        %v1825 = vrot.slane %v1822, 4
        %v1826 = vsel %vm312, %v1821, %v1825
        %v1828 = vmul.f32 %v282, %v1826
        %1830 = vst [vmem:[#allocation1] ss:$2 sm:$0xff] %v1828
        %v1831 = vld.sshfl [vmem:[#allocation1] sm:$0xff pattern:$0x75316420]
        %v1832 = vld.sshfl [vmem:[#allocation1 + $0x8] sm:$0xff pattern:$0x75316420]
        %v1835 = vsel %vm312, %v1831, 0.0
        %v1836 = vrot.slane %v1835, 4
        %v1837 = vadd.f32 %v1835, %v1836
        %v1838 = vrot.slane %v1837, 2
        %v1839 = vadd.f32 %v1837, %v1838
        %v1840 = vrot.slane %v1839, 1
        %v1841 = vadd.f32 %v1839, %v1840
        %v1842 = vsel %vm312, %v1832, 0.0
        %v1843 = vrot.slane %v1842, 4
        %v1844 = vadd.f32 %v1842, %v1843
        %v1845 = vrot.slane %v1844, 2
        %v1846 = vadd.f32 %v1844, %v1845
        %v1847 = vrot.slane %v1846, 1
        %v1848 = vadd.f32 %v1846, %v1847
        %vm1849 = vmand %vm1666, %vm456
        %v1852 = vrot.slane %v1848, 7
        %v1853 = vsel %vm340, %v1841, %v1852
        %v1855 = vsel %vm1849, %v1853, 0.0
        %s1856 = scalar_lea.vmem %s281, 55
        %1857 = vst.msk [vmem:[%s1856] ss:$8 sm:$0x3] %vm347, %v1855
        %1858 = vst.msk [vmem:[%s1856] ss:$8 sm:$0x0] %vm347, %v1855
        %1859 = vst [vmem:[#allocation1] ss:$2 sm:$0xff] %v283
        %v1860 = vld.sshfl [vmem:[#allocation1] sm:$0xff pattern:$0x75316420]
        %v1861 = vld.sshfl [vmem:[#allocation1 + $0x8] sm:$0xff pattern:$0x75316420]
        %1864 = vrot.lane.b32.xlu0 %v1860, 111
        %v1865 = vpop.permute.xlu0 %1864
        %1866 = vrot.lane.b32.xlu0 %v1861, 111
        %v1867 = vpop.permute.xlu0 %1866
        %vm1868 = vcmp.lt.s32.totalorder %v305, 111
        %v1869 = vsel %vm1868, %v1865, %v1867
        %v1870 = vsel %vm1868, %v1867, %v1865
        %v1873 = vrot.slane %v1870, 4
        %v1874 = vsel %vm312, %v1869, %v1873
        %v1876 = vmul.f32 %v282, %v1874
        %1878 = vst [vmem:[#allocation1] ss:$2 sm:$0xff] %v1876
        %v1879 = vld.sshfl [vmem:[#allocation1] sm:$0xff pattern:$0x75316420]
        %v1880 = vld.sshfl [vmem:[#allocation1 + $0x8] sm:$0xff pattern:$0x75316420]
        %v1883 = vsel %vm312, %v1879, 0.0
        %v1884 = vrot.slane %v1883, 4
        %v1885 = vadd.f32 %v1883, %v1884
        %v1886 = vrot.slane %v1885, 2
        %v1887 = vadd.f32 %v1885, %v1886
        %v1888 = vrot.slane %v1887, 1
        %v1889 = vadd.f32 %v1887, %v1888
        %v1890 = vsel %vm312, %v1880, 0.0
        %v1891 = vrot.slane %v1890, 4
        %v1892 = vadd.f32 %v1890, %v1891
        %v1893 = vrot.slane %v1892, 2
        %v1894 = vadd.f32 %v1892, %v1893
        %v1895 = vrot.slane %v1894, 1
        %v1896 = vadd.f32 %v1894, %v1895
        %vm1897 = vmand %vm1666, %vm508
        %v1900 = vrot.slane %v1896, 7
        %v1901 = vsel %vm340, %v1889, %v1900
        %v1903 = vsel %vm1897, %v1901, 0.0
        %s1904 = scalar_lea.vmem %s281, 64
        %1905 = vst.msk [vmem:[%s1904] ss:$8 sm:$0x3] %vm347, %v1903
        %1906 = vst.msk [vmem:[%s1904] ss:$8 sm:$0x0] %vm347, %v1903
        %1907 = vst [vmem:[#allocation1] ss:$2 sm:$0xff] %v283
        %v1908 = vld.sshfl [vmem:[#allocation1] sm:$0xff pattern:$0x75316420]
        %v1909 = vld.sshfl [vmem:[#allocation1 + $0x8] sm:$0xff pattern:$0x75316420]
        %1912 = vrot.lane.b32.xlu0 %v1908, 110
        %v1913 = vpop.permute.xlu0 %1912
        %1914 = vrot.lane.b32.xlu0 %v1909, 110
        %v1915 = vpop.permute.xlu0 %1914
        %vm1916 = vcmp.lt.s32.totalorder %v305, 110
        %v1917 = vsel %vm1916, %v1913, %v1915
        %v1918 = vsel %vm1916, %v1915, %v1913
        %v1921 = vrot.slane %v1918, 4
        %v1922 = vsel %vm312, %v1917, %v1921
        %v1924 = vmul.f32 %v282, %v1922
        %1926 = vst [vmem:[#allocation1] ss:$2 sm:$0xff] %v1924
        %v1927 = vld.sshfl [vmem:[#allocation1] sm:$0xff pattern:$0x75316420]
        %v1928 = vld.sshfl [vmem:[#allocation1 + $0x8] sm:$0xff pattern:$0x75316420]
        %v1931 = vsel %vm312, %v1927, 0.0
        %v1932 = vrot.slane %v1931, 4
        %v1933 = vadd.f32 %v1931, %v1932
        %v1934 = vrot.slane %v1933, 2
        %v1935 = vadd.f32 %v1933, %v1934
        %v1936 = vrot.slane %v1935, 1
        %v1937 = vadd.f32 %v1935, %v1936
        %v1938 = vsel %vm312, %v1928, 0.0
        %v1939 = vrot.slane %v1938, 4
        %v1940 = vadd.f32 %v1938, %v1939
        %v1941 = vrot.slane %v1940, 2
        %v1942 = vadd.f32 %v1940, %v1941
        %v1943 = vrot.slane %v1942, 1
        %v1944 = vadd.f32 %v1942, %v1943
        %vm1945 = vmand %vm1666, %vm560
        %v1948 = vrot.slane %v1944, 7
        %v1949 = vsel %vm340, %v1937, %v1948
        %v1951 = vsel %vm1945, %v1949, 0.0
        %s1952 = scalar_lea.vmem %s281, 65
        %1953 = vst.msk [vmem:[%s1952] ss:$8 sm:$0x3] %vm347, %v1951
        %1954 = vst.msk [vmem:[%s1952] ss:$8 sm:$0x0] %vm347, %v1951
        %1955 = vst [vmem:[#allocation1] ss:$2 sm:$0xff] %v283
        %v1956 = vld.sshfl [vmem:[#allocation1] sm:$0xff pattern:$0x75316420]
        %v1957 = vld.sshfl [vmem:[#allocation1 + $0x8] sm:$0xff pattern:$0x75316420]
        %1960 = vrot.lane.b32.xlu0 %v1956, 109
        %v1961 = vpop.permute.xlu0 %1960
        %1962 = vrot.lane.b32.xlu0 %v1957, 109
        %v1963 = vpop.permute.xlu0 %1962
        %vm1964 = vcmp.lt.s32.totalorder %v305, 109
        %v1965 = vsel %vm1964, %v1961, %v1963
        %v1966 = vsel %vm1964, %v1963, %v1961
        %v1969 = vrot.slane %v1966, 4
        %v1970 = vsel %vm312, %v1965, %v1969
        %v1972 = vmul.f32 %v282, %v1970
        %1974 = vst [vmem:[#allocation1] ss:$2 sm:$0xff] %v1972
        %v1975 = vld.sshfl [vmem:[#allocation1] sm:$0xff pattern:$0x75316420]
        %v1976 = vld.sshfl [vmem:[#allocation1 + $0x8] sm:$0xff pattern:$0x75316420]
        %v1979 = vsel %vm312, %v1975, 0.0
        %v1980 = vrot.slane %v1979, 4
        %v1981 = vadd.f32 %v1979, %v1980
        %v1982 = vrot.slane %v1981, 2
        %v1983 = vadd.f32 %v1981, %v1982
        %v1984 = vrot.slane %v1983, 1
        %v1985 = vadd.f32 %v1983, %v1984
        %v1986 = vsel %vm312, %v1976, 0.0
        %v1987 = vrot.slane %v1986, 4
        %v1988 = vadd.f32 %v1986, %v1987
        %v1989 = vrot.slane %v1988, 2
        %v1990 = vadd.f32 %v1988, %v1989
        %v1991 = vrot.slane %v1990, 1
        %v1992 = vadd.f32 %v1990, %v1991
        %vm1993 = vmand %vm1666, %vm612
        %v1996 = vrot.slane %v1992, 7
        %v1997 = vsel %vm340, %v1985, %v1996
        %v1999 = vsel %vm1993, %v1997, 0.0
        %s2000 = scalar_lea.vmem %s281, 66
        %2001 = vst.msk [vmem:[%s2000] ss:$8 sm:$0x3] %vm347, %v1999
        %2002 = vst.msk [vmem:[%s2000] ss:$8 sm:$0x0] %vm347, %v1999
        %v2003 = vadd.s32 %v284, 2
        %vm2004 = vcmp.ge.s32.totalorder %v2003, 0
        %vm2005 = vcmp.lt.s32.totalorder %v2003, 16
        %vm2006 = vmand %vm2004, %vm2005
        %2007 = vst [vmem:[#allocation1] ss:$2 sm:$0xff] %v283
        %v2008 = vld.sshfl [vmem:[#allocation1] sm:$0xff pattern:$0x75316420]
        %v2009 = vld.sshfl [vmem:[#allocation1 + $0x8] sm:$0xff pattern:$0x75316420]
        %2012 = vrot.lane.b32.xlu0 %v2008, 99
        %v2013 = vpop.permute.xlu0 %2012
        %2014 = vrot.lane.b32.xlu0 %v2009, 99
        %v2015 = vpop.permute.xlu0 %2014
        %vm2016 = vcmp.lt.s32.totalorder %v305, 99
        %v2017 = vsel %vm2016, %v2013, %v2015
        %v2018 = vsel %vm2016, %v2015, %v2013
        %v2021 = vrot.slane %v2018, 4
        %v2022 = vsel %vm312, %v2017, %v2021
        %v2024 = vmul.f32 %v282, %v2022
        %2026 = vst [vmem:[#allocation1] ss:$2 sm:$0xff] %v2024
        %v2027 = vld.sshfl [vmem:[#allocation1] sm:$0xff pattern:$0x75316420]
        %v2028 = vld.sshfl [vmem:[#allocation1 + $0x8] sm:$0xff pattern:$0x75316420]
        %v2031 = vsel %vm312, %v2027, 0.0
        %v2032 = vrot.slane %v2031, 4
        %v2033 = vadd.f32 %v2031, %v2032
        %v2034 = vrot.slane %v2033, 2
        %v2035 = vadd.f32 %v2033, %v2034
        %v2036 = vrot.slane %v2035, 1
        %v2037 = vadd.f32 %v2035, %v2036
        %v2038 = vsel %vm312, %v2028, 0.0
        %v2039 = vrot.slane %v2038, 4
        %v2040 = vadd.f32 %v2038, %v2039
        %v2041 = vrot.slane %v2040, 2
        %v2042 = vadd.f32 %v2040, %v2041
        %v2043 = vrot.slane %v2042, 1
        %v2044 = vadd.f32 %v2042, %v2043
        %vm2045 = vmand %vm2006, %vm293
        %v2048 = vrot.slane %v2044, 7
        %v2049 = vsel %vm340, %v2037, %v2048
        %v2051 = vsel %vm2045, %v2049, 0.0
        %s2052 = scalar_lea.vmem %s281, 67
        %2053 = vst.msk [vmem:[%s2052] ss:$8 sm:$0x3] %vm347, %v2051
        %2054 = vst.msk [vmem:[%s2052] ss:$8 sm:$0x0] %vm347, %v2051
        %2055 = vst [vmem:[#allocation1] ss:$2 sm:$0xff] %v283
        %v2056 = vld.sshfl [vmem:[#allocation1] sm:$0xff pattern:$0x75316420]
        %v2057 = vld.sshfl [vmem:[#allocation1 + $0x8] sm:$0xff pattern:$0x75316420]
        %2060 = vrot.lane.b32.xlu0 %v2056, 98
        %v2061 = vpop.permute.xlu0 %2060
        %2062 = vrot.lane.b32.xlu0 %v2057, 98
        %v2063 = vpop.permute.xlu0 %2062
        %vm2064 = vcmp.lt.s32.totalorder %v305, 98
        %v2065 = vsel %vm2064, %v2061, %v2063
        %v2066 = vsel %vm2064, %v2063, %v2061
        %v2069 = vrot.slane %v2066, 4
        %v2070 = vsel %vm312, %v2065, %v2069
        %v2072 = vmul.f32 %v282, %v2070
        %2074 = vst [vmem:[#allocation1] ss:$2 sm:$0xff] %v2072
        %v2075 = vld.sshfl [vmem:[#allocation1] sm:$0xff pattern:$0x75316420]
        %v2076 = vld.sshfl [vmem:[#allocation1 + $0x8] sm:$0xff pattern:$0x75316420]
        %v2079 = vsel %vm312, %v2075, 0.0
        %v2080 = vrot.slane %v2079, 4
        %v2081 = vadd.f32 %v2079, %v2080
        %v2082 = vrot.slane %v2081, 2
        %v2083 = vadd.f32 %v2081, %v2082
        %v2084 = vrot.slane %v2083, 1
        %v2085 = vadd.f32 %v2083, %v2084
        %v2086 = vsel %vm312, %v2076, 0.0
        %v2087 = vrot.slane %v2086, 4
        %v2088 = vadd.f32 %v2086, %v2087
        %v2089 = vrot.slane %v2088, 2
        %v2090 = vadd.f32 %v2088, %v2089
        %v2091 = vrot.slane %v2090, 1
        %v2092 = vadd.f32 %v2090, %v2091
        %vm2093 = vmand %vm2006, %vm353
        %v2096 = vrot.slane %v2092, 7
        %v2097 = vsel %vm340, %v2085, %v2096
        %v2099 = vsel %vm2093, %v2097, 0.0
        %s2100 = scalar_lea.vmem %s281, 68
        %2101 = vst.msk [vmem:[%s2100] ss:$8 sm:$0x3] %vm347, %v2099
        %2102 = vst.msk [vmem:[%s2100] ss:$8 sm:$0x0] %vm347, %v2099
        %2103 = vst [vmem:[#allocation1] ss:$2 sm:$0xff] %v283
        %v2104 = vld.sshfl [vmem:[#allocation1] sm:$0xff pattern:$0x75316420]
        %v2105 = vld.sshfl [vmem:[#allocation1 + $0x8] sm:$0xff pattern:$0x75316420]
        %2108 = vrot.lane.b32.xlu0 %v2104, 97
        %v2109 = vpop.permute.xlu0 %2108
        %2110 = vrot.lane.b32.xlu0 %v2105, 97
        %v2111 = vpop.permute.xlu0 %2110
        %vm2112 = vcmp.lt.s32.totalorder %v305, 97
        %v2113 = vsel %vm2112, %v2109, %v2111
        %v2114 = vsel %vm2112, %v2111, %v2109
        %v2117 = vrot.slane %v2114, 4
        %v2118 = vsel %vm312, %v2113, %v2117
        %v2120 = vmul.f32 %v282, %v2118
        %2122 = vst [vmem:[#allocation1] ss:$2 sm:$0xff] %v2120
        %v2123 = vld.sshfl [vmem:[#allocation1] sm:$0xff pattern:$0x75316420]
        %v2124 = vld.sshfl [vmem:[#allocation1 + $0x8] sm:$0xff pattern:$0x75316420]
        %v2127 = vsel %vm312, %v2123, 0.0
        %v2128 = vrot.slane %v2127, 4
        %v2129 = vadd.f32 %v2127, %v2128
        %v2130 = vrot.slane %v2129, 2
        %v2131 = vadd.f32 %v2129, %v2130
        %v2132 = vrot.slane %v2131, 1
        %v2133 = vadd.f32 %v2131, %v2132
        %v2134 = vsel %vm312, %v2124, 0.0
        %v2135 = vrot.slane %v2134, 4
        %v2136 = vadd.f32 %v2134, %v2135
        %v2137 = vrot.slane %v2136, 2
        %v2138 = vadd.f32 %v2136, %v2137
        %v2139 = vrot.slane %v2138, 1
        %v2140 = vadd.f32 %v2138, %v2139
        %vm2141 = vmand %vm2006, %vm405
        %v2144 = vrot.slane %v2140, 7
        %v2145 = vsel %vm340, %v2133, %v2144
        %v2147 = vsel %vm2141, %v2145, 0.0
        %s2148 = scalar_lea.vmem %s281, 69
        %2149 = vst.msk [vmem:[%s2148] ss:$8 sm:$0x3] %vm347, %v2147
        %2150 = vst.msk [vmem:[%s2148] ss:$8 sm:$0x0] %vm347, %v2147
        %2151 = vst [vmem:[#allocation1] ss:$2 sm:$0xff] %v283
        %v2152 = vld.sshfl [vmem:[#allocation1] sm:$0xff pattern:$0x75316420]
        %v2153 = vld.sshfl [vmem:[#allocation1 + $0x8] sm:$0xff pattern:$0x75316420]
        %2156 = vrot.lane.b32.xlu0 %v2152, 96
        %v2157 = vpop.permute.xlu0 %2156
        %2158 = vrot.lane.b32.xlu0 %v2153, 96
        %v2159 = vpop.permute.xlu0 %2158
        %vm2160 = vcmp.lt.s32.totalorder %v305, 96
        %v2161 = vsel %vm2160, %v2157, %v2159
        %v2162 = vsel %vm2160, %v2159, %v2157
        %v2165 = vrot.slane %v2162, 4
        %v2166 = vsel %vm312, %v2161, %v2165
        %v2168 = vmul.f32 %v282, %v2166
        %2170 = vst [vmem:[#allocation1] ss:$2 sm:$0xff] %v2168
        %v2171 = vld.sshfl [vmem:[#allocation1] sm:$0xff pattern:$0x75316420]
        %v2172 = vld.sshfl [vmem:[#allocation1 + $0x8] sm:$0xff pattern:$0x75316420]
        %v2175 = vsel %vm312, %v2171, 0.0
        %v2176 = vrot.slane %v2175, 4
        %v2177 = vadd.f32 %v2175, %v2176
        %v2178 = vrot.slane %v2177, 2
        %v2179 = vadd.f32 %v2177, %v2178
        %v2180 = vrot.slane %v2179, 1
        %v2181 = vadd.f32 %v2179, %v2180
        %v2182 = vsel %vm312, %v2172, 0.0
        %v2183 = vrot.slane %v2182, 4
        %v2184 = vadd.f32 %v2182, %v2183
        %v2185 = vrot.slane %v2184, 2
        %v2186 = vadd.f32 %v2184, %v2185
        %v2187 = vrot.slane %v2186, 1
        %v2188 = vadd.f32 %v2186, %v2187
        %vm2189 = vmand %vm2006, %vm456
        %v2192 = vrot.slane %v2188, 7
        %v2193 = vsel %vm340, %v2181, %v2192
        %v2195 = vsel %vm2189, %v2193, 0.0
        %s2196 = scalar_lea.vmem %s281, 70
        %2197 = vst.msk [vmem:[%s2196] ss:$8 sm:$0x3] %vm347, %v2195
        %2198 = vst.msk [vmem:[%s2196] ss:$8 sm:$0x0] %vm347, %v2195
        %2199 = vst [vmem:[#allocation1] ss:$2 sm:$0xff] %v283
        %v2200 = vld.sshfl [vmem:[#allocation1] sm:$0xff pattern:$0x75316420]
        %v2201 = vld.sshfl [vmem:[#allocation1 + $0x8] sm:$0xff pattern:$0x75316420]
        %2204 = vrot.lane.b32.xlu0 %v2200, 95
        %v2205 = vpop.permute.xlu0 %2204
        %2206 = vrot.lane.b32.xlu0 %v2201, 95
        %v2207 = vpop.permute.xlu0 %2206
        %vm2208 = vcmp.lt.s32.totalorder %v305, 95
        %v2209 = vsel %vm2208, %v2205, %v2207
        %v2210 = vsel %vm2208, %v2207, %v2205
        %v2213 = vrot.slane %v2210, 4
        %v2214 = vsel %vm312, %v2209, %v2213
        %v2216 = vmul.f32 %v282, %v2214
        %2218 = vst [vmem:[#allocation1] ss:$2 sm:$0xff] %v2216
        %v2219 = vld.sshfl [vmem:[#allocation1] sm:$0xff pattern:$0x75316420]
        %v2220 = vld.sshfl [vmem:[#allocation1 + $0x8] sm:$0xff pattern:$0x75316420]
        %v2223 = vsel %vm312, %v2219, 0.0
        %v2224 = vrot.slane %v2223, 4
        %v2225 = vadd.f32 %v2223, %v2224
        %v2226 = vrot.slane %v2225, 2
        %v2227 = vadd.f32 %v2225, %v2226
        %v2228 = vrot.slane %v2227, 1
        %v2229 = vadd.f32 %v2227, %v2228
        %v2230 = vsel %vm312, %v2220, 0.0
        %v2231 = vrot.slane %v2230, 4
        %v2232 = vadd.f32 %v2230, %v2231
        %v2233 = vrot.slane %v2232, 2
        %v2234 = vadd.f32 %v2232, %v2233
        %v2235 = vrot.slane %v2234, 1
        %v2236 = vadd.f32 %v2234, %v2235
        %vm2237 = vmand %vm2006, %vm508
        %v2240 = vrot.slane %v2236, 7
        %v2241 = vsel %vm340, %v2229, %v2240
        %v2243 = vsel %vm2237, %v2241, 0.0
        %s2244 = scalar_lea.vmem %s281, 71
        %2245 = vst.msk [vmem:[%s2244] ss:$8 sm:$0x3] %vm347, %v2243
        %2246 = vst.msk [vmem:[%s2244] ss:$8 sm:$0x0] %vm347, %v2243
        %2247 = vst [vmem:[#allocation1] ss:$2 sm:$0xff] %v283
        %v2248 = vld.sshfl [vmem:[#allocation1] sm:$0xff pattern:$0x75316420]
        %v2249 = vld.sshfl [vmem:[#allocation1 + $0x8] sm:$0xff pattern:$0x75316420]
        %2252 = vrot.lane.b32.xlu0 %v2248, 94
        %v2253 = vpop.permute.xlu0 %2252
        %2254 = vrot.lane.b32.xlu0 %v2249, 94
        %v2255 = vpop.permute.xlu0 %2254
        %vm2256 = vcmp.lt.s32.totalorder %v305, 94
        %v2257 = vsel %vm2256, %v2253, %v2255
        %v2258 = vsel %vm2256, %v2255, %v2253
        %v2261 = vrot.slane %v2258, 4
        %v2262 = vsel %vm312, %v2257, %v2261
        %v2264 = vmul.f32 %v282, %v2262
        %2266 = vst [vmem:[#allocation1] ss:$2 sm:$0xff] %v2264
        %v2267 = vld.sshfl [vmem:[#allocation1] sm:$0xff pattern:$0x75316420]
        %v2268 = vld.sshfl [vmem:[#allocation1 + $0x8] sm:$0xff pattern:$0x75316420]
        %v2271 = vsel %vm312, %v2267, 0.0
        %v2272 = vrot.slane %v2271, 4
        %v2273 = vadd.f32 %v2271, %v2272
        %v2274 = vrot.slane %v2273, 2
        %v2275 = vadd.f32 %v2273, %v2274
        %v2276 = vrot.slane %v2275, 1
        %v2277 = vadd.f32 %v2275, %v2276
        %v2278 = vsel %vm312, %v2268, 0.0
        %v2279 = vrot.slane %v2278, 4
        %v2280 = vadd.f32 %v2278, %v2279
        %v2281 = vrot.slane %v2280, 2
        %v2282 = vadd.f32 %v2280, %v2281
        %v2283 = vrot.slane %v2282, 1
        %v2284 = vadd.f32 %v2282, %v2283
        %vm2285 = vmand %vm2006, %vm560
        %v2288 = vrot.slane %v2284, 7
        %v2289 = vsel %vm340, %v2277, %v2288
        %v2291 = vsel %vm2285, %v2289, 0.0
        %s2292 = scalar_lea.vmem %s281, 80
        %2293 = vst.msk [vmem:[%s2292] ss:$8 sm:$0x3] %vm347, %v2291
        %2294 = vst.msk [vmem:[%s2292] ss:$8 sm:$0x0] %vm347, %v2291
        %2295 = vst [vmem:[#allocation1] ss:$2 sm:$0xff] %v283
        %v2296 = vld.sshfl [vmem:[#allocation1] sm:$0xff pattern:$0x75316420]
        %v2297 = vld.sshfl [vmem:[#allocation1 + $0x8] sm:$0xff pattern:$0x75316420]
        %2300 = vrot.lane.b32.xlu0 %v2296, 93
        %v2301 = vpop.permute.xlu0 %2300
        %2302 = vrot.lane.b32.xlu0 %v2297, 93
        %v2303 = vpop.permute.xlu0 %2302
        %vm2304 = vcmp.lt.s32.totalorder %v305, 93
        %v2305 = vsel %vm2304, %v2301, %v2303
        %v2306 = vsel %vm2304, %v2303, %v2301
        %v2309 = vrot.slane %v2306, 4
        %v2310 = vsel %vm312, %v2305, %v2309
        %v2312 = vmul.f32 %v282, %v2310
        %2314 = vst [vmem:[#allocation1] ss:$2 sm:$0xff] %v2312
        %v2315 = vld.sshfl [vmem:[#allocation1] sm:$0xff pattern:$0x75316420]
        %v2316 = vld.sshfl [vmem:[#allocation1 + $0x8] sm:$0xff pattern:$0x75316420]
        %v2319 = vsel %vm312, %v2315, 0.0
        %v2320 = vrot.slane %v2319, 4
        %v2321 = vadd.f32 %v2319, %v2320
        %v2322 = vrot.slane %v2321, 2
        %v2323 = vadd.f32 %v2321, %v2322
        %v2324 = vrot.slane %v2323, 1
        %v2325 = vadd.f32 %v2323, %v2324
        %v2326 = vsel %vm312, %v2316, 0.0
        %v2327 = vrot.slane %v2326, 4
        %v2328 = vadd.f32 %v2326, %v2327
        %v2329 = vrot.slane %v2328, 2
        %v2330 = vadd.f32 %v2328, %v2329
        %v2331 = vrot.slane %v2330, 1
        %v2332 = vadd.f32 %v2330, %v2331
        %vm2333 = vmand %vm2006, %vm612
        %v2336 = vrot.slane %v2332, 7
        %v2337 = vsel %vm340, %v2325, %v2336
        %v2339 = vsel %vm2333, %v2337, 0.0
        %s2340 = scalar_lea.vmem %s281, 81
        %2341 = vst.msk [vmem:[%s2340] ss:$8 sm:$0x3] %vm347, %v2339
        %2342 = vst.msk [vmem:[%s2340] ss:$8 sm:$0x0] %vm347, %v2339
        %v2343 = vadd.s32 %v284, 3
        %vm2344 = vcmp.ge.s32.totalorder %v2343, 0
        %vm2345 = vcmp.lt.s32.totalorder %v2343, 16
        %vm2346 = vmand %vm2344, %vm2345
        %2347 = vst [vmem:[#allocation1] ss:$2 sm:$0xff] %v283
        %v2348 = vld.sshfl [vmem:[#allocation1] sm:$0xff pattern:$0x75316420]
        %v2349 = vld.sshfl [vmem:[#allocation1 + $0x8] sm:$0xff pattern:$0x75316420]
        %2352 = vrot.lane.b32.xlu0 %v2348, 83
        %v2353 = vpop.permute.xlu0 %2352
        %2354 = vrot.lane.b32.xlu0 %v2349, 83
        %v2355 = vpop.permute.xlu0 %2354
        %vm2356 = vcmp.lt.s32.totalorder %v305, 83
        %v2357 = vsel %vm2356, %v2353, %v2355
        %v2358 = vsel %vm2356, %v2355, %v2353
        %v2361 = vrot.slane %v2358, 4
        %v2362 = vsel %vm312, %v2357, %v2361
        %v2364 = vmul.f32 %v282, %v2362
        %2366 = vst [vmem:[#allocation1] ss:$2 sm:$0xff] %v2364
        %v2367 = vld.sshfl [vmem:[#allocation1] sm:$0xff pattern:$0x75316420]
        %v2368 = vld.sshfl [vmem:[#allocation1 + $0x8] sm:$0xff pattern:$0x75316420]
        %v2371 = vsel %vm312, %v2367, 0.0
        %v2372 = vrot.slane %v2371, 4
        %v2373 = vadd.f32 %v2371, %v2372
        %v2374 = vrot.slane %v2373, 2
        %v2375 = vadd.f32 %v2373, %v2374
        %v2376 = vrot.slane %v2375, 1
        %v2377 = vadd.f32 %v2375, %v2376
        %v2378 = vsel %vm312, %v2368, 0.0
        %v2379 = vrot.slane %v2378, 4
        %v2380 = vadd.f32 %v2378, %v2379
        %v2381 = vrot.slane %v2380, 2
        %v2382 = vadd.f32 %v2380, %v2381
        %v2383 = vrot.slane %v2382, 1
        %v2384 = vadd.f32 %v2382, %v2383
        %vm2385 = vmand %vm2346, %vm293
        %v2388 = vrot.slane %v2384, 7
        %v2389 = vsel %vm340, %v2377, %v2388
        %v2391 = vsel %vm2385, %v2389, 0.0
        %s2392 = scalar_lea.vmem %s281, 82
        %2393 = vst.msk [vmem:[%s2392] ss:$8 sm:$0x3] %vm347, %v2391
        %2394 = vst.msk [vmem:[%s2392] ss:$8 sm:$0x0] %vm347, %v2391
        %2395 = vst [vmem:[#allocation1] ss:$2 sm:$0xff] %v283
        %v2396 = vld.sshfl [vmem:[#allocation1] sm:$0xff pattern:$0x75316420]
        %v2397 = vld.sshfl [vmem:[#allocation1 + $0x8] sm:$0xff pattern:$0x75316420]
        %2400 = vrot.lane.b32.xlu0 %v2396, 82
        %v2401 = vpop.permute.xlu0 %2400
        %2402 = vrot.lane.b32.xlu0 %v2397, 82
        %v2403 = vpop.permute.xlu0 %2402
        %vm2404 = vcmp.lt.s32.totalorder %v305, 82
        %v2405 = vsel %vm2404, %v2401, %v2403
        %v2406 = vsel %vm2404, %v2403, %v2401
        %v2409 = vrot.slane %v2406, 4
        %v2410 = vsel %vm312, %v2405, %v2409
        %v2412 = vmul.f32 %v282, %v2410
        %2414 = vst [vmem:[#allocation1] ss:$2 sm:$0xff] %v2412
        %v2415 = vld.sshfl [vmem:[#allocation1] sm:$0xff pattern:$0x75316420]
        %v2416 = vld.sshfl [vmem:[#allocation1 + $0x8] sm:$0xff pattern:$0x75316420]
        %v2419 = vsel %vm312, %v2415, 0.0
        %v2420 = vrot.slane %v2419, 4
        %v2421 = vadd.f32 %v2419, %v2420
        %v2422 = vrot.slane %v2421, 2
        %v2423 = vadd.f32 %v2421, %v2422
        %v2424 = vrot.slane %v2423, 1
        %v2425 = vadd.f32 %v2423, %v2424
        %v2426 = vsel %vm312, %v2416, 0.0
        %v2427 = vrot.slane %v2426, 4
        %v2428 = vadd.f32 %v2426, %v2427
        %v2429 = vrot.slane %v2428, 2
        %v2430 = vadd.f32 %v2428, %v2429
        %v2431 = vrot.slane %v2430, 1
        %v2432 = vadd.f32 %v2430, %v2431
        %vm2433 = vmand %vm2346, %vm353
        %v2436 = vrot.slane %v2432, 7
        %v2437 = vsel %vm340, %v2425, %v2436
        %v2439 = vsel %vm2433, %v2437, 0.0
        %s2440 = scalar_lea.vmem %s281, 83
        %2441 = vst.msk [vmem:[%s2440] ss:$8 sm:$0x3] %vm347, %v2439
        %2442 = vst.msk [vmem:[%s2440] ss:$8 sm:$0x0] %vm347, %v2439
        %2443 = vst [vmem:[#allocation1] ss:$2 sm:$0xff] %v283
        %v2444 = vld.sshfl [vmem:[#allocation1] sm:$0xff pattern:$0x75316420]
        %v2445 = vld.sshfl [vmem:[#allocation1 + $0x8] sm:$0xff pattern:$0x75316420]
        %2448 = vrot.lane.b32.xlu0 %v2444, 81
        %v2449 = vpop.permute.xlu0 %2448
        %2450 = vrot.lane.b32.xlu0 %v2445, 81
        %v2451 = vpop.permute.xlu0 %2450
        %vm2452 = vcmp.lt.s32.totalorder %v305, 81
        %v2453 = vsel %vm2452, %v2449, %v2451
        %v2454 = vsel %vm2452, %v2451, %v2449
        %v2457 = vrot.slane %v2454, 4
        %v2458 = vsel %vm312, %v2453, %v2457
        %v2460 = vmul.f32 %v282, %v2458
        %2462 = vst [vmem:[#allocation1] ss:$2 sm:$0xff] %v2460
        %v2463 = vld.sshfl [vmem:[#allocation1] sm:$0xff pattern:$0x75316420]
        %v2464 = vld.sshfl [vmem:[#allocation1 + $0x8] sm:$0xff pattern:$0x75316420]
        %v2467 = vsel %vm312, %v2463, 0.0
        %v2468 = vrot.slane %v2467, 4
        %v2469 = vadd.f32 %v2467, %v2468
        %v2470 = vrot.slane %v2469, 2
        %v2471 = vadd.f32 %v2469, %v2470
        %v2472 = vrot.slane %v2471, 1
        %v2473 = vadd.f32 %v2471, %v2472
        %v2474 = vsel %vm312, %v2464, 0.0
        %v2475 = vrot.slane %v2474, 4
        %v2476 = vadd.f32 %v2474, %v2475
        %v2477 = vrot.slane %v2476, 2
        %v2478 = vadd.f32 %v2476, %v2477
        %v2479 = vrot.slane %v2478, 1
        %v2480 = vadd.f32 %v2478, %v2479
        %vm2481 = vmand %vm2346, %vm405
        %v2484 = vrot.slane %v2480, 7
        %v2485 = vsel %vm340, %v2473, %v2484
        %v2487 = vsel %vm2481, %v2485, 0.0
        %s2488 = scalar_lea.vmem %s281, 84
        %2489 = vst.msk [vmem:[%s2488] ss:$8 sm:$0x3] %vm347, %v2487
        %2490 = vst.msk [vmem:[%s2488] ss:$8 sm:$0x0] %vm347, %v2487
        %2491 = vst [vmem:[#allocation1] ss:$2 sm:$0xff] %v283
        %v2492 = vld.sshfl [vmem:[#allocation1] sm:$0xff pattern:$0x75316420]
        %v2493 = vld.sshfl [vmem:[#allocation1 + $0x8] sm:$0xff pattern:$0x75316420]
        %2496 = vrot.lane.b32.xlu0 %v2492, 80
        %v2497 = vpop.permute.xlu0 %2496
        %2498 = vrot.lane.b32.xlu0 %v2493, 80
        %v2499 = vpop.permute.xlu0 %2498
        %vm2500 = vcmp.lt.s32.totalorder %v305, 80
        %v2501 = vsel %vm2500, %v2497, %v2499
        %v2502 = vsel %vm2500, %v2499, %v2497
        %v2505 = vrot.slane %v2502, 4
        %v2506 = vsel %vm312, %v2501, %v2505
        %v2508 = vmul.f32 %v282, %v2506
        %2510 = vst [vmem:[#allocation1] ss:$2 sm:$0xff] %v2508
        %v2511 = vld.sshfl [vmem:[#allocation1] sm:$0xff pattern:$0x75316420]
        %v2512 = vld.sshfl [vmem:[#allocation1 + $0x8] sm:$0xff pattern:$0x75316420]
        %v2515 = vsel %vm312, %v2511, 0.0
        %v2516 = vrot.slane %v2515, 4
        %v2517 = vadd.f32 %v2515, %v2516
        %v2518 = vrot.slane %v2517, 2
        %v2519 = vadd.f32 %v2517, %v2518
        %v2520 = vrot.slane %v2519, 1
        %v2521 = vadd.f32 %v2519, %v2520
        %v2522 = vsel %vm312, %v2512, 0.0
        %v2523 = vrot.slane %v2522, 4
        %v2524 = vadd.f32 %v2522, %v2523
        %v2525 = vrot.slane %v2524, 2
        %v2526 = vadd.f32 %v2524, %v2525
        %v2527 = vrot.slane %v2526, 1
        %v2528 = vadd.f32 %v2526, %v2527
        %vm2529 = vmand %vm2346, %vm456
        %v2532 = vrot.slane %v2528, 7
        %v2533 = vsel %vm340, %v2521, %v2532
        %v2535 = vsel %vm2529, %v2533, 0.0
        %s2536 = scalar_lea.vmem %s281, 85
        %2537 = vst.msk [vmem:[%s2536] ss:$8 sm:$0x3] %vm347, %v2535
        %2538 = vst.msk [vmem:[%s2536] ss:$8 sm:$0x0] %vm347, %v2535
        %2539 = vst [vmem:[#allocation1] ss:$2 sm:$0xff] %v283
        %v2540 = vld.sshfl [vmem:[#allocation1] sm:$0xff pattern:$0x75316420]
        %v2541 = vld.sshfl [vmem:[#allocation1 + $0x8] sm:$0xff pattern:$0x75316420]
        %2544 = vrot.lane.b32.xlu0 %v2540, 79
        %v2545 = vpop.permute.xlu0 %2544
        %2546 = vrot.lane.b32.xlu0 %v2541, 79
        %v2547 = vpop.permute.xlu0 %2546
        %vm2548 = vcmp.lt.s32.totalorder %v305, 79
        %v2549 = vsel %vm2548, %v2545, %v2547
        %v2550 = vsel %vm2548, %v2547, %v2545
        %v2553 = vrot.slane %v2550, 4
        %v2554 = vsel %vm312, %v2549, %v2553
        %v2556 = vmul.f32 %v282, %v2554
        %2558 = vst [vmem:[#allocation1] ss:$2 sm:$0xff] %v2556
        %v2559 = vld.sshfl [vmem:[#allocation1] sm:$0xff pattern:$0x75316420]
        %v2560 = vld.sshfl [vmem:[#allocation1 + $0x8] sm:$0xff pattern:$0x75316420]
        %v2563 = vsel %vm312, %v2559, 0.0
        %v2564 = vrot.slane %v2563, 4
        %v2565 = vadd.f32 %v2563, %v2564
        %v2566 = vrot.slane %v2565, 2
        %v2567 = vadd.f32 %v2565, %v2566
        %v2568 = vrot.slane %v2567, 1
        %v2569 = vadd.f32 %v2567, %v2568
        %v2570 = vsel %vm312, %v2560, 0.0
        %v2571 = vrot.slane %v2570, 4
        %v2572 = vadd.f32 %v2570, %v2571
        %v2573 = vrot.slane %v2572, 2
        %v2574 = vadd.f32 %v2572, %v2573
        %v2575 = vrot.slane %v2574, 1
        %v2576 = vadd.f32 %v2574, %v2575
        %vm2577 = vmand %vm2346, %vm508
        %v2580 = vrot.slane %v2576, 7
        %v2581 = vsel %vm340, %v2569, %v2580
        %v2583 = vsel %vm2577, %v2581, 0.0
        %s2584 = scalar_lea.vmem %s281, 86
        %2585 = vst.msk [vmem:[%s2584] ss:$8 sm:$0x3] %vm347, %v2583
        %2586 = vst.msk [vmem:[%s2584] ss:$8 sm:$0x0] %vm347, %v2583
        %2587 = vst [vmem:[#allocation1] ss:$2 sm:$0xff] %v283
        %v2588 = vld.sshfl [vmem:[#allocation1] sm:$0xff pattern:$0x75316420]
        %v2589 = vld.sshfl [vmem:[#allocation1 + $0x8] sm:$0xff pattern:$0x75316420]
        %2592 = vrot.lane.b32.xlu0 %v2588, 78
        %v2593 = vpop.permute.xlu0 %2592
        %2594 = vrot.lane.b32.xlu0 %v2589, 78
        %v2595 = vpop.permute.xlu0 %2594
        %vm2596 = vcmp.lt.s32.totalorder %v305, 78
        %v2597 = vsel %vm2596, %v2593, %v2595
        %v2598 = vsel %vm2596, %v2595, %v2593
        %v2601 = vrot.slane %v2598, 4
        %v2602 = vsel %vm312, %v2597, %v2601
        %v2604 = vmul.f32 %v282, %v2602
        %2606 = vst [vmem:[#allocation1] ss:$2 sm:$0xff] %v2604
        %v2607 = vld.sshfl [vmem:[#allocation1] sm:$0xff pattern:$0x75316420]
        %v2608 = vld.sshfl [vmem:[#allocation1 + $0x8] sm:$0xff pattern:$0x75316420]
        %v2611 = vsel %vm312, %v2607, 0.0
        %v2612 = vrot.slane %v2611, 4
        %v2613 = vadd.f32 %v2611, %v2612
        %v2614 = vrot.slane %v2613, 2
        %v2615 = vadd.f32 %v2613, %v2614
        %v2616 = vrot.slane %v2615, 1
        %v2617 = vadd.f32 %v2615, %v2616
        %v2618 = vsel %vm312, %v2608, 0.0
        %v2619 = vrot.slane %v2618, 4
        %v2620 = vadd.f32 %v2618, %v2619
        %v2621 = vrot.slane %v2620, 2
        %v2622 = vadd.f32 %v2620, %v2621
        %v2623 = vrot.slane %v2622, 1
        %v2624 = vadd.f32 %v2622, %v2623
        %vm2625 = vmand %vm2346, %vm560
        %v2628 = vrot.slane %v2624, 7
        %v2629 = vsel %vm340, %v2617, %v2628
        %v2631 = vsel %vm2625, %v2629, 0.0
        %s2632 = scalar_lea.vmem %s281, 87
        %2633 = vst.msk [vmem:[%s2632] ss:$8 sm:$0x3] %vm347, %v2631
        %2634 = vst.msk [vmem:[%s2632] ss:$8 sm:$0x0] %vm347, %v2631
        %2635 = vst [vmem:[#allocation1] ss:$2 sm:$0xff] %v283
        %v2636 = vld.sshfl [vmem:[#allocation1] sm:$0xff pattern:$0x75316420]
        %v2637 = vld.sshfl [vmem:[#allocation1 + $0x8] sm:$0xff pattern:$0x75316420]
        %2640 = vrot.lane.b32.xlu0 %v2636, 77
        %v2641 = vpop.permute.xlu0 %2640
        %2642 = vrot.lane.b32.xlu0 %v2637, 77
        %v2643 = vpop.permute.xlu0 %2642
        %vm2644 = vcmp.lt.s32.totalorder %v305, 77
        %v2645 = vsel %vm2644, %v2641, %v2643
        %v2646 = vsel %vm2644, %v2643, %v2641
        %v2649 = vrot.slane %v2646, 4
        %v2650 = vsel %vm312, %v2645, %v2649
        %v2652 = vmul.f32 %v282, %v2650
        %2654 = vst [vmem:[#allocation1] ss:$2 sm:$0xff] %v2652
        %v2655 = vld.sshfl [vmem:[#allocation1] sm:$0xff pattern:$0x75316420]
        %v2656 = vld.sshfl [vmem:[#allocation1 + $0x8] sm:$0xff pattern:$0x75316420]
        %v2659 = vsel %vm312, %v2655, 0.0
        %v2660 = vrot.slane %v2659, 4
        %v2661 = vadd.f32 %v2659, %v2660
        %v2662 = vrot.slane %v2661, 2
        %v2663 = vadd.f32 %v2661, %v2662
        %v2664 = vrot.slane %v2663, 1
        %v2665 = vadd.f32 %v2663, %v2664
        %v2666 = vsel %vm312, %v2656, 0.0
        %v2667 = vrot.slane %v2666, 4
        %v2668 = vadd.f32 %v2666, %v2667
        %v2669 = vrot.slane %v2668, 2
        %v2670 = vadd.f32 %v2668, %v2669
        %v2671 = vrot.slane %v2670, 1
        %v2672 = vadd.f32 %v2670, %v2671
        %vm2673 = vmand %vm2346, %vm612
        %v2676 = vrot.slane %v2672, 7
        %v2677 = vsel %vm340, %v2665, %v2676
        %v2679 = vsel %vm2673, %v2677, 0.0
        %s2680 = scalar_lea.vmem %s281, 96
        %2681 = vst.msk [vmem:[%s2680] ss:$8 sm:$0x3] %vm347, %v2679
        %2682 = vst.msk [vmem:[%s2680] ss:$8 sm:$0x0] %vm347, %v2679
        %p2683 = scmp.lt.s32.totalorder %s17, 1
        %s2684 = scalar_select %p2683, %s17, 1
        %s2685 = smul.addr %s2684, 14
        %s2686 = smul.addr %s2685, 8
        %s2687 = scalar_lea.vmem %s4, %s2686
        // Predicated region
        $region53: #{tpu_custom_call.1} parent=35 // pred_check
          %p2688 = pneg %p129
        $region54: #{tpu_custom_call.1} parent=35 // pred_check_branch
          %2690 = sbr.rel (%p2688) target = $region56
        $region55: #{tpu_custom_call.1} parent=35 // pred_region
          _
        $region56: #{tpu_custom_call.1} parent=35 // pred_fallthru
          _
      $region36: #{tpu_custom_call.1} parent=5 // pred_fallthru
        _
      %p2691 = scmp.le.s32.totalorder 2, %s12
      // Predicated region
      $region57: #{tpu_custom_call.1} parent=5 // pred_check
        %p2692 = pneg %p2691
      $region58: #{tpu_custom_call.1} parent=5 // pred_check_branch
        %2694 = sbr.rel (%p2692) target = $region60
      $region59: #{tpu_custom_call.1} parent=5 // pred_region
        %s2695 = ssub.s32 %s12, 2
        // Predicated region
        $region61: #{tpu_custom_call.1} parent=59 // pred_check
          %p2696 = pneg %p135
        $region62: #{tpu_custom_call.1} parent=59 // pred_check_branch
          %2698 = sbr.rel (%p2696) target = $region64
        $region63: #{tpu_custom_call.1} parent=59 // pred_region
          %p2699 = scmp.lt.s32.totalorder %s18, 1
          %s2700 = scalar_select %p2699, %s18, 1
          %s2701 = smul.addr %s2700, 14
          %s2702 = smul.addr %s2701, 8
          %s2703 = scalar_lea.vmem %s4, %s2702
        $region64: #{tpu_custom_call.1} parent=59 // pred_fallthru
          _
      $region60: #{tpu_custom_call.1} parent=5 // pred_fallthru
        _
    $region6: #{tpu_custom_call.1} parent=1 // loop_footer
      %s16 = sadd.s32 1, %s12
    $region7: #{tpu_custom_call.1} parent=1 // loop_footer_branch
      %11 = sbr.rel target = $region3
    $region8: #{tpu_custom_call.1} parent=1 // loop_exit
      _
    %2704 = vsyncpa [#allocation3], 1
    %s2705 = scalar_lea.sflag [#allocation3], 1
    %2706 = vsyncpa %s2705, 1
    %2707 = vsyncpa [#allocation5], 1

</llo_original>
